<compile_context>
chip_gen: v5e
topology: v5e:2x2
jax: 0.10.0
libtpu: 0.0.40
codegen_flags: <defaults>
</compile_context>

<pallas_src>
import functools

import jax
import jax.numpy as jnp
from jax.experimental import pallas as pl
from jax.experimental.pallas import tpu as pltpu


HIDDEN1, HIDDEN2, HIDDEN3 = 1024, 256, 128
N_ACTIONS = 3
PAD_N = 128          # lane-dense padded width of the final scores / output
NEG_INF = -1e30      # bias fill for padded score lanes (exp underflows to 0)


def generator_kernel(mask_ref,                     # (TB, 1)   f32  1/B or 0
                     x1_ref, x2_ref, e1_ref, e2_ref,   # bf16 batch tiles
                     w1a_ref, w1b_ref, w1c_ref, w1d_ref, b1_ref,
                     w2_ref, b2_ref,
                     w3_ref, b3_ref,
                     weff_ref, beff_ref,
                     out_ref,                      # (1, PAD_N) f32
                     acc_ref):                     # (1, PAD_N) f32 scratch
    i = pl.program_id(0)

    @pl.when(i == 0)
    def _():
        acc_ref[...] = jnp.zeros_like(acc_ref)

    # ---- layer 1: 544 -> 1024 as split-K sum over the 4 input pieces ----
    h = (jnp.dot(x1_ref[...], w1a_ref[...], preferred_element_type=jnp.float32)
         + jnp.dot(x2_ref[...], w1b_ref[...], preferred_element_type=jnp.float32)
         + jnp.dot(e1_ref[...], w1c_ref[...], preferred_element_type=jnp.float32)
         + jnp.dot(e2_ref[...], w1d_ref[...], preferred_element_type=jnp.float32)
         + b1_ref[...])
    h = jnp.where(h >= 0, h, 0.2 * h)                 # LeakyReLU(0.2)

    # ---- layer 2: 1024 -> 256 ----
    h = jnp.dot(h.astype(jnp.bfloat16), w2_ref[...],
                preferred_element_type=jnp.float32) + b2_ref[...]
    # Dropout(0.4): identity in eval mode
    h = jnp.where(h >= 0, h, 0.2 * h)

    # ---- layer 3: 256 -> 128 ----
    h = jnp.dot(h.astype(jnp.bfloat16), w3_ref[...],
                preferred_element_type=jnp.float32) + b3_ref[...]
    # Dropout(0.4): identity in eval mode
    h = jnp.where(h >= 0, h, 0.2 * h)

    # ---- folded (128 -> 1) + fc1 : one (TB,128)@(128,128) matmul ----
    scores = jnp.dot(h.astype(jnp.bfloat16), weff_ref[...],
                     preferred_element_type=jnp.float32) + beff_ref[...]

    # ---- softmax over the 3 valid lanes (padded lanes carry -1e30 bias) ----
    m = jnp.max(scores, axis=1, keepdims=True)
    e = jnp.exp(scores - m)
    p = e * pl.reciprocal(jnp.sum(e, axis=1, keepdims=True), approx=True)

    # ---- weighted batch-mean accumulation (mask zeroes padded rows) ----
    acc_ref[...] += jnp.sum(p * mask_ref[...], axis=0, keepdims=True)

    @pl.when(i == pl.num_programs(0) - 1)
    def _():
        out_ref[...] = acc_ref[...]


def make_params(key, n_classes, label_dim, channels, img_size):
    """f32 'master' params mirroring the torch module; Linear weights stored
    transposed as (in_features, out_features) so y = x @ W + b."""
    img_flat = channels * img_size * img_size
    in_channels = label_dim * 2 + img_flat * 2
    dims = [(in_channels, HIDDEN1), (HIDDEN1, HIDDEN2), (HIDDEN2, HIDDEN3), (HIDDEN3, 1)]
    keys = jax.random.split(key, 2 * len(dims) + 3)
    params = {"emb": 0.02 * jax.random.normal(keys[0], (n_classes, label_dim), jnp.float32)}
    for li, (fi, fo) in enumerate(dims):
        scale = 1.0 / jnp.sqrt(jnp.float32(fi))
        params[f"w{li + 1}"] = scale * jax.random.normal(keys[1 + 2 * li], (fi, fo), jnp.float32)
        params[f"b{li + 1}"] = scale * jax.random.normal(keys[2 + 2 * li], (1, fo), jnp.float32)
    # fc1: Linear(4, 3) stored transposed as (4, 3); row 0 multiplies the scalar
    # MLP output, rows 1:4 multiply feat_model.
    params["fc1w"] = 0.5 * jax.random.normal(keys[-2], (1 + N_ACTIONS, N_ACTIONS), jnp.float32)
    params["fc1b"] = 0.5 * jax.random.normal(keys[-1], (1, N_ACTIONS), jnp.float32)
    return params


def prepare_kernel_params(p):
    """Split / cast / fold the f32 params into the kernel-ready layout."""
    label_dim = p["emb"].shape[1]
    in_channels = p["w1"].shape[0]
    img_flat = (in_channels - 2 * label_dim) // 2

    w1 = p["w1"]
    kp = {
        "emb": p["emb"],
        "w1a": w1[:img_flat].astype(jnp.bfloat16),
        "w1b": w1[img_flat:2 * img_flat].astype(jnp.bfloat16),
        "w1c": w1[2 * img_flat:2 * img_flat + label_dim].astype(jnp.bfloat16),
        "w1d": w1[2 * img_flat + label_dim:].astype(jnp.bfloat16),
        "b1": p["b1"],
        "w2": p["w2"].astype(jnp.bfloat16), "b2": p["b2"],
        "w3": p["w3"].astype(jnp.bfloat16), "b3": p["b3"],
    }
    # Exact algebraic fold of the 128->1 layer into fc1 (no nonlinearity between):
    #   scores = cat(h3 @ w4 + b4, feat) @ fc1w + fc1b
    #          = h3 @ (w4 @ fc1w[0:1]) + (b4 @ fc1w[0:1] + feat @ fc1w[1:] + fc1b)
    w_eff = p["w4"] @ p["fc1w"][0:1, :]                                  # (128, 3)
    kp["w_eff"] = jnp.pad(w_eff, ((0, 0), (0, PAD_N - N_ACTIONS))).astype(jnp.bfloat16)
    kp["b_eff_const"] = p["b4"] @ p["fc1w"][0:1, :] + p["fc1b"]          # (1, 3)
    kp["fc1w_feat"] = p["fc1w"][1:, :]                                   # (3, 3)
    return kp


@functools.partial(jax.jit, static_argnames=("tile_b",))
def generator_forward(kp, feat_model, img1, img2, label1, label2, tile_b=128):
    B = img1.shape[0]
    x1 = img1.reshape(B, -1)
    x2 = img2.reshape(B, -1)
    img_flat = x1.shape[1]
    label_dim = kp["emb"].shape[1]
    in_channels = 2 * img_flat + 2 * label_dim

    x1 = x1.astype(jnp.bfloat16)
    x2 = x2.astype(jnp.bfloat16)
    e1 = kp["emb"][label1].astype(jnp.bfloat16)
    e2 = kp["emb"][label2].astype(jnp.bfloat16)

    n_tiles = (B + tile_b - 1) // tile_b
    b_pad = n_tiles * tile_b
    pad = b_pad - B

    def pad_rows(a):
        return jnp.pad(a, ((0, pad), (0, 0))) if pad else a

    x1, x2, e1, e2 = map(pad_rows, (x1, x2, e1, e2))
    # weight 1/B for valid rows, 0 for padded rows -> mean == weighted sum
    mask = pad_rows(jnp.full((B, 1), 1.0 / B, jnp.float32))

    # per-call bias fold (feat_model-dependent part), padded with -1e30 lanes
    b_eff = kp["b_eff_const"] + feat_model.reshape(1, N_ACTIONS) @ kp["fc1w_feat"]
    b_eff = jnp.pad(b_eff, ((0, 0), (0, PAD_N - N_ACTIONS)), constant_values=NEG_INF)

    batch_map = lambda i: (i, 0)
    const_map = lambda i: (0, 0)

    flops = 2 * b_pad * (in_channels * HIDDEN1 + HIDDEN1 * HIDDEN2
                         + HIDDEN2 * HIDDEN3 + HIDDEN3 * PAD_N)
    weight_bytes = 2 * (in_channels * HIDDEN1 + HIDDEN1 * HIDDEN2
                        + HIDDEN2 * HIDDEN3 + HIDDEN3 * PAD_N)
    io_bytes = 2 * b_pad * in_channels + 4 * b_pad + 4 * PAD_N
    cost = pl.CostEstimate(flops=flops,
                           transcendentals=b_pad * PAD_N,
                           bytes_accessed=weight_bytes + io_bytes)

    out = pl.pallas_call(
        generator_kernel,
        out_shape=jax.ShapeDtypeStruct((1, PAD_N), jnp.float32),
        grid_spec=pltpu.PrefetchScalarGridSpec(
            num_scalar_prefetch=0,
            grid=(n_tiles,),
            in_specs=[
                pl.BlockSpec((tile_b, 1), batch_map),           # mask (1/B weights)
                pl.BlockSpec((tile_b, img_flat), batch_map),    # img1 flat
                pl.BlockSpec((tile_b, img_flat), batch_map),    # img2 flat
                pl.BlockSpec((tile_b, label_dim), batch_map),   # emb(label1)
                pl.BlockSpec((tile_b, label_dim), batch_map),   # emb(label2)
                pl.BlockSpec((img_flat, HIDDEN1), const_map),   # w1a (resident)
                pl.BlockSpec((img_flat, HIDDEN1), const_map),   # w1b
                pl.BlockSpec((label_dim, HIDDEN1), const_map),  # w1c
                pl.BlockSpec((label_dim, HIDDEN1), const_map),  # w1d
                pl.BlockSpec((1, HIDDEN1), const_map),          # b1
                pl.BlockSpec((HIDDEN1, HIDDEN2), const_map),    # w2
                pl.BlockSpec((1, HIDDEN2), const_map),          # b2
                pl.BlockSpec((HIDDEN2, HIDDEN3), const_map),    # w3
                pl.BlockSpec((1, HIDDEN3), const_map),          # b3
                pl.BlockSpec((HIDDEN3, PAD_N), const_map),      # folded w4+fc1
                pl.BlockSpec((1, PAD_N), const_map),            # folded bias
            ],
            out_specs=pl.BlockSpec((1, PAD_N), const_map),
            scratch_shapes=[pltpu.VMEM((1, PAD_N), jnp.float32)],
        ),
        compiler_params=pltpu.CompilerParams(
            dimension_semantics=("arbitrary",),   # batch axis reduces into the mean
        ),
        cost_estimate=cost,
    )(mask, x1, x2, e1, e2,
      kp["w1a"], kp["w1b"], kp["w1c"], kp["w1d"], kp["b1"],
      kp["w2"], kp["b2"], kp["w3"], kp["b3"],
      kp["w_eff"], b_eff)

    return out[:, :N_ACTIONS]


def reference_forward(p, feat_model, img1, img2, label1, label2):
    """Pure-JAX f32 reference of the torch module."""
    B = img1.shape[0]
    d_in = jnp.concatenate([img1.reshape(B, -1), img2.reshape(B, -1),
                            p["emb"][label1], p["emb"][label2]], axis=-1)
    h = d_in @ p["w1"] + p["b1"]
    h = jnp.where(h >= 0, h, 0.2 * h)
    h = h @ p["w2"] + p["b2"]
    h = jnp.where(h >= 0, h, 0.2 * h)
    h = h @ p["w3"] + p["b3"]
    h = jnp.where(h >= 0, h, 0.2 * h)
    xo = h @ p["w4"] + p["b4"]                                    # (B, 1)
    x = jnp.concatenate(
        [xo, jnp.broadcast_to(feat_model.reshape(1, N_ACTIONS), (B, N_ACTIONS))], axis=1)
    scores = x @ p["fc1w"] + p["fc1b"]
    probs = jax.nn.softmax(scores, axis=1)
    return probs.mean(axis=0, keepdims=True)


if __name__ == "__main__":
    # Small but consistent opt: n_classes=10, label_dim=16, channels=1, img_size=16
    n_classes, label_dim, channels, img_size = 10, 16, 1, 16
    B = 20           # deliberately NOT a multiple of TILE_B -> exercises row masking
    TILE_B = 8       # small tile so the grid has several steps at this tiny batch

    root = jax.random.PRNGKey(0)
    kkey, k1, k2, k3, k4, k5 = jax.random.split(root, 6)
    params = make_params(kkey, n_classes, label_dim, channels, img_size)
    kparams = prepare_kernel_params(params)

    feat_model = jax.random.normal(k1, (1, N_ACTIONS), jnp.float32)
    img1 = jax.random.normal(k2, (B, channels, img_size, img_size), jnp.float32)
    img2 = jax.random.normal(k3, (B, channels, img_size, img_size), jnp.float32)
    label1 = jax.random.randint(k4, (B,), 0, n_classes, jnp.int32)
    label2 = jax.random.randint(k5, (B,), 0, n_classes, jnp.int32)

    out = generator_forward(kparams, feat_model, img1, img2, label1, label2, tile_b=TILE_B)
    out = jax.block_until_ready(out)

    ref = reference_forward(params, feat_model, img1, img2, label1, label2)

    assert out.shape == (1, N_ACTIONS)
    assert bool(jnp.isfinite(out).all())
    # mean of softmax rows -> sums to ~1 (approx reciprocal + bf16 tolerance)
    assert bool(jnp.abs(out.sum() - 1.0) < 2e-2)
    assert bool(jnp.max(jnp.abs(out - ref)) < 3e-2)
    print("KERNEL_OK")
</pallas_src>

<mosaic_0001>
module attributes {stable_mosaic.version = 11 : i64} {
  func.func @generator_kernel(%arg0: i32, %arg1: memref<8x1xf32, #tpu.memory_space<vmem>>, %arg2: memref<8x256xbf16, #tpu.memory_space<vmem>>, %arg3: memref<8x256xbf16, #tpu.memory_space<vmem>>, %arg4: memref<8x16xbf16, #tpu.memory_space<vmem>>, %arg5: memref<8x16xbf16, #tpu.memory_space<vmem>>, %arg6: memref<256x1024xbf16, #tpu.memory_space<vmem>>, %arg7: memref<256x1024xbf16, #tpu.memory_space<vmem>>, %arg8: memref<16x1024xbf16, #tpu.memory_space<vmem>>, %arg9: memref<16x1024xbf16, #tpu.memory_space<vmem>>, %arg10: memref<1x1024xf32, #tpu.memory_space<vmem>>, %arg11: memref<1024x256xbf16, #tpu.memory_space<vmem>>, %arg12: memref<1x256xf32, #tpu.memory_space<vmem>>, %arg13: memref<256x128xbf16, #tpu.memory_space<vmem>>, %arg14: memref<1x128xf32, #tpu.memory_space<vmem>>, %arg15: memref<128x128xbf16, #tpu.memory_space<vmem>>, %arg16: memref<1x128xf32, #tpu.memory_space<vmem>>, %arg17: memref<1x128xf32, #tpu.memory_space<vmem>>, %arg18: memref<1x128xf32, #tpu.memory_space<vmem>>) attributes {dimension_semantics = [#tpu.dimension_semantics<arbitrary>], iteration_bounds = array<i64: 3>, scalar_prefetch = 0 : i64, scratch_operands = 1 : i64, tpu.core_type = #tpu.core_type<tc>, window_params = [{transform_indices = @transform_0, window_bounds = array<i64: 8, 1>}, {transform_indices = @transform_1, window_bounds = array<i64: 8, 256>}, {transform_indices = @transform_2, window_bounds = array<i64: 8, 256>}, {transform_indices = @transform_3, window_bounds = array<i64: 8, 16>}, {transform_indices = @transform_4, window_bounds = array<i64: 8, 16>}, {pipeline_mode = #tpu.pipeline_mode<synchronous>, transform_indices = @transform_5, window_bounds = array<i64: 256, 1024>}, {pipeline_mode = #tpu.pipeline_mode<synchronous>, transform_indices = @transform_6, window_bounds = array<i64: 256, 1024>}, {pipeline_mode = #tpu.pipeline_mode<synchronous>, transform_indices = @transform_7, window_bounds = array<i64: 16, 1024>}, {pipeline_mode = #tpu.pipeline_mode<synchronous>, transform_indices = @transform_8, window_bounds = array<i64: 16, 1024>}, {pipeline_mode = #tpu.pipeline_mode<synchronous>, transform_indices = @transform_9, window_bounds = array<i64: 1, 1024>}, {pipeline_mode = #tpu.pipeline_mode<synchronous>, transform_indices = @transform_10, window_bounds = array<i64: 1024, 256>}, {pipeline_mode = #tpu.pipeline_mode<synchronous>, transform_indices = @transform_11, window_bounds = array<i64: 1, 256>}, {pipeline_mode = #tpu.pipeline_mode<synchronous>, transform_indices = @transform_12, window_bounds = array<i64: 256, 128>}, {pipeline_mode = #tpu.pipeline_mode<synchronous>, transform_indices = @transform_13, window_bounds = array<i64: 1, 128>}, {pipeline_mode = #tpu.pipeline_mode<synchronous>, transform_indices = @transform_14, window_bounds = array<i64: 128, 128>}, {pipeline_mode = #tpu.pipeline_mode<synchronous>, transform_indices = @transform_15, window_bounds = array<i64: 1, 128>}, {pipeline_mode = #tpu.pipeline_mode<synchronous>, transform_indices = @transform_16, window_bounds = array<i64: 1, 128>}]} {
    %c0_i32 = arith.constant 0 : i32
    %0 = arith.cmpi eq, %arg0, %c0_i32 : i32
    %1 = arith.extui %0 : i1 to i32
    %c0_i32_0 = arith.constant 0 : i32
    %2 = arith.cmpi ne, %1, %c0_i32_0 : i32
    scf.if %2 {
      %cst_52 = arith.constant 0.000000e+00 : f32
      %75 = vector.broadcast %cst_52 : f32 to vector<1x128xf32>
      %c0_53 = arith.constant 0 : index
      %c0_54 = arith.constant 0 : index
      %76 = vector.load %arg18[%c0_53, %c0_54] : memref<1x128xf32, #tpu.memory_space<vmem>>, vector<1x128xf32>
      tpu.vector_store %arg18[%c0_53, %c0_54], %75 {strides = array<i32>} : memref<1x128xf32, #tpu.memory_space<vmem>>, vector<1x128xf32>,
    } else {
    }
    %c0 = arith.constant 0 : index
    %c0_1 = arith.constant 0 : index
    %3 = vector.load %arg2[%c0, %c0_1] : memref<8x256xbf16, #tpu.memory_space<vmem>>, vector<8x256xbf16>
    %c0_2 = arith.constant 0 : index
    %c0_3 = arith.constant 0 : index
    %4 = vector.load %arg6[%c0_2, %c0_3] : memref<256x1024xbf16, #tpu.memory_space<vmem>>, vector<256x1024xbf16>
    %cst = arith.constant dense<0.000000e+00> : vector<8x1024xf32>
    %5 = tpu.matmul %3, %4, %cst {dimension_numbers = #tpu.dot_dimension_numbers<[1], [0], [0], [1], [0, 0, 1, 1], [], []>} : vector<8x256xbf16>, vector<256x1024xbf16>, vector<8x1024xf32> -> vector<8x1024xf32>
    %c0_4 = arith.constant 0 : index
    %c0_5 = arith.constant 0 : index
    %6 = vector.load %arg3[%c0_4, %c0_5] : memref<8x256xbf16, #tpu.memory_space<vmem>>, vector<8x256xbf16>
    %c0_6 = arith.constant 0 : index
    %c0_7 = arith.constant 0 : index
    %7 = vector.load %arg7[%c0_6, %c0_7] : memref<256x1024xbf16, #tpu.memory_space<vmem>>, vector<256x1024xbf16>
    %cst_8 = arith.constant dense<0.000000e+00> : vector<8x1024xf32>
    %8 = tpu.matmul %6, %7, %cst_8 {dimension_numbers = #tpu.dot_dimension_numbers<[1], [0], [0], [1], [0, 0, 1, 1], [], []>} : vector<8x256xbf16>, vector<256x1024xbf16>, vector<8x1024xf32> -> vector<8x1024xf32>
    %9 = arith.addf %5, %8 : vector<8x1024xf32>
    %c0_9 = arith.constant 0 : index
    %c0_10 = arith.constant 0 : index
    %10 = vector.load %arg4[%c0_9, %c0_10] : memref<8x16xbf16, #tpu.memory_space<vmem>>, vector<8x16xbf16>
    %c0_11 = arith.constant 0 : index
    %c0_12 = arith.constant 0 : index
    %11 = vector.load %arg8[%c0_11, %c0_12] : memref<16x1024xbf16, #tpu.memory_space<vmem>>, vector<16x1024xbf16>
    %cst_13 = arith.constant dense<0.000000e+00> : vector<8x1024xf32>
    %12 = tpu.matmul %10, %11, %cst_13 {dimension_numbers = #tpu.dot_dimension_numbers<[1], [0], [0], [1], [0, 0, 1, 1], [], []>} : vector<8x16xbf16>, vector<16x1024xbf16>, vector<8x1024xf32> -> vector<8x1024xf32>
    %13 = arith.addf %9, %12 : vector<8x1024xf32>
    %c0_14 = arith.constant 0 : index
    %c0_15 = arith.constant 0 : index
    %14 = vector.load %arg5[%c0_14, %c0_15] : memref<8x16xbf16, #tpu.memory_space<vmem>>, vector<8x16xbf16>
    %c0_16 = arith.constant 0 : index
    %c0_17 = arith.constant 0 : index
    %15 = vector.load %arg9[%c0_16, %c0_17] : memref<16x1024xbf16, #tpu.memory_space<vmem>>, vector<16x1024xbf16>
    %cst_18 = arith.constant dense<0.000000e+00> : vector<8x1024xf32>
    %16 = tpu.matmul %14, %15, %cst_18 {dimension_numbers = #tpu.dot_dimension_numbers<[1], [0], [0], [1], [0, 0, 1, 1], [], []>} : vector<8x16xbf16>, vector<16x1024xbf16>, vector<8x1024xf32> -> vector<8x1024xf32>
    %17 = arith.addf %13, %16 : vector<8x1024xf32>
    %c0_19 = arith.constant 0 : index
    %c0_20 = arith.constant 0 : index
    %18 = vector.load %arg10[%c0_19, %c0_20] : memref<1x1024xf32, #tpu.memory_space<vmem>>, vector<1x1024xf32>
    %19 = vector.broadcast %18 : vector<1x1024xf32> to vector<8x1024xf32>
    %20 = arith.addf %17, %19 : vector<8x1024xf32>
    %cst_21 = arith.constant 0.000000e+00 : f32
    %21 = vector.broadcast %cst_21 : f32 to vector<8x1024xf32>
    %22 = arith.cmpf oge, %20, %21 : vector<8x1024xf32>
    %cst_22 = arith.constant 2.000000e-01 : f32
    %23 = vector.broadcast %cst_22 : f32 to vector<8x1024xf32>
    %24 = arith.mulf %23, %20 : vector<8x1024xf32>
    %25 = arith.select %22, %20, %24 : vector<8x1024xi1>, vector<8x1024xf32>
    %26 = arith.truncf %25 : vector<8x1024xf32> to vector<8x1024xbf16>
    %c0_23 = arith.constant 0 : index
    %c0_24 = arith.constant 0 : index
    %27 = vector.load %arg11[%c0_23, %c0_24] : memref<1024x256xbf16, #tpu.memory_space<vmem>>, vector<1024x256xbf16>
    %cst_25 = arith.constant dense<0.000000e+00> : vector<8x256xf32>
    %28 = tpu.matmul %26, %27, %cst_25 {dimension_numbers = #tpu.dot_dimension_numbers<[1], [0], [0], [1], [0, 0, 1, 1], [], []>} : vector<8x1024xbf16>, vector<1024x256xbf16>, vector<8x256xf32> -> vector<8x256xf32>
    %c0_26 = arith.constant 0 : index
    %c0_27 = arith.constant 0 : index
    %29 = vector.load %arg12[%c0_26, %c0_27] : memref<1x256xf32, #tpu.memory_space<vmem>>, vector<1x256xf32>
    %30 = vector.broadcast %29 : vector<1x256xf32> to vector<8x256xf32>
    %31 = arith.addf %28, %30 : vector<8x256xf32>
    %cst_28 = arith.constant 0.000000e+00 : f32
    %32 = vector.broadcast %cst_28 : f32 to vector<8x256xf32>
    %33 = arith.cmpf oge, %31, %32 : vector<8x256xf32>
    %cst_29 = arith.constant 2.000000e-01 : f32
    %34 = vector.broadcast %cst_29 : f32 to vector<8x256xf32>
    %35 = arith.mulf %34, %31 : vector<8x256xf32>
    %36 = arith.select %33, %31, %35 : vector<8x256xi1>, vector<8x256xf32>
    %37 = arith.truncf %36 : vector<8x256xf32> to vector<8x256xbf16>
    %c0_30 = arith.constant 0 : index
    %c0_31 = arith.constant 0 : index
    %38 = vector.load %arg13[%c0_30, %c0_31] : memref<256x128xbf16, #tpu.memory_space<vmem>>, vector<256x128xbf16>
    %cst_32 = arith.constant dense<0.000000e+00> : vector<8x128xf32>
    %39 = tpu.matmul %37, %38, %cst_32 {dimension_numbers = #tpu.dot_dimension_numbers<[1], [0], [0], [1], [0, 0, 1, 1], [], []>} : vector<8x256xbf16>, vector<256x128xbf16>, vector<8x128xf32> -> vector<8x128xf32>
    %c0_33 = arith.constant 0 : index
    %c0_34 = arith.constant 0 : index
    %40 = vector.load %arg14[%c0_33, %c0_34] : memref<1x128xf32, #tpu.memory_space<vmem>>, vector<1x128xf32>
    %41 = vector.broadcast %40 : vector<1x128xf32> to vector<8x128xf32>
    %42 = arith.addf %39, %41 : vector<8x128xf32>
    %cst_35 = arith.constant 0.000000e+00 : f32
    %43 = vector.broadcast %cst_35 : f32 to vector<8x128xf32>
    %44 = arith.cmpf oge, %42, %43 : vector<8x128xf32>
    %cst_36 = arith.constant 2.000000e-01 : f32
    %45 = vector.broadcast %cst_36 : f32 to vector<8x128xf32>
    %46 = arith.mulf %45, %42 : vector<8x128xf32>
    %47 = arith.select %44, %42, %46 : vector<8x128xi1>, vector<8x128xf32>
    %48 = arith.truncf %47 : vector<8x128xf32> to vector<8x128xbf16>
    %c0_37 = arith.constant 0 : index
    %c0_38 = arith.constant 0 : index
    %49 = vector.load %arg15[%c0_37, %c0_38] : memref<128x128xbf16, #tpu.memory_space<vmem>>, vector<128x128xbf16>
    %cst_39 = arith.constant dense<0.000000e+00> : vector<8x128xf32>
    %50 = tpu.matmul %48, %49, %cst_39 {dimension_numbers = #tpu.dot_dimension_numbers<[1], [0], [0], [1], [0, 0, 1, 1], [], []>} : vector<8x128xbf16>, vector<128x128xbf16>, vector<8x128xf32> -> vector<8x128xf32>
    %c0_40 = arith.constant 0 : index
    %c0_41 = arith.constant 0 : index
    %51 = vector.load %arg16[%c0_40, %c0_41] : memref<1x128xf32, #tpu.memory_space<vmem>>, vector<1x128xf32>
    %52 = vector.broadcast %51 : vector<1x128xf32> to vector<8x128xf32>
    %53 = arith.addf %50, %52 : vector<8x128xf32>
    %cst_42 = arith.constant dense<0xFF800000> : vector<8xf32>
    %54 = vector.multi_reduction <maximumf>, %53, %cst_42 [1] : vector<8x128xf32> to vector<8xf32>
    %55 = vector.shape_cast %54 : vector<8xf32> to vector<8x1xf32>
    %56 = vector.broadcast %55 : vector<8x1xf32> to vector<8x128xf32>
    %57 = arith.subf %53, %56 : vector<8x128xf32>
    %58 = math.exp %57 : vector<8x128xf32>
    %cst_43 = arith.constant dense<0.000000e+00> : vector<8xf32>
    %59 = vector.multi_reduction <add>, %58, %cst_43 [1] : vector<8x128xf32> to vector<8xf32>
    %60 = vector.shape_cast %59 : vector<8xf32> to vector<8x1xf32>
    %61 = tpu.reciprocal %60 {approx = true} : vector<8x1xf32> -> vector<8x1xf32>
    %62 = vector.broadcast %61 : vector<8x1xf32> to vector<8x128xf32>
    %63 = arith.mulf %58, %62 : vector<8x128xf32>
    %c0_44 = arith.constant 0 : index
    %c0_45 = arith.constant 0 : index
    %64 = vector.load %arg18[%c0_44, %c0_45] : memref<1x128xf32, #tpu.memory_space<vmem>>, vector<1x128xf32>
    %c0_46 = arith.constant 0 : index
    %c0_47 = arith.constant 0 : index
    %65 = vector.load %arg1[%c0_46, %c0_47] : memref<8x1xf32, #tpu.memory_space<vmem>>, vector<8x1xf32>
    %66 = vector.broadcast %65 : vector<8x1xf32> to vector<8x128xf32>
    %67 = arith.mulf %63, %66 : vector<8x128xf32>
    %cst_48 = arith.constant dense<0.000000e+00> : vector<128xf32>
    %68 = vector.multi_reduction <add>, %67, %cst_48 [0] : vector<8x128xf32> to vector<128xf32>
    %69 = vector.shape_cast %68 : vector<128xf32> to vector<1x128xf32>
    %70 = arith.addf %64, %69 : vector<1x128xf32>
    %c0_49 = arith.constant 0 : index
    %c0_50 = arith.constant 0 : index
    %71 = vector.load %arg18[%c0_49, %c0_50] : memref<1x128xf32, #tpu.memory_space<vmem>>, vector<1x128xf32>
    tpu.vector_store %arg18[%c0_49, %c0_50], %70 {strides = array<i32>} : memref<1x128xf32, #tpu.memory_space<vmem>>, vector<1x128xf32>,
    %c2_i32 = arith.constant 2 : i32
    %72 = arith.cmpi eq, %arg0, %c2_i32 : i32
    %73 = arith.extui %72 : i1 to i32
    %c0_i32_51 = arith.constant 0 : i32
    %74 = arith.cmpi ne, %73, %c0_i32_51 : i32
    scf.if %74 {
      %c0_52 = arith.constant 0 : index
      %c0_53 = arith.constant 0 : index
      %75 = vector.load %arg18[%c0_52, %c0_53] : memref<1x128xf32, #tpu.memory_space<vmem>>, vector<1x128xf32>
      %c0_54 = arith.constant 0 : index
      %c0_55 = arith.constant 0 : index
      %76 = vector.load %arg17[%c0_54, %c0_55] : memref<1x128xf32, #tpu.memory_space<vmem>>, vector<1x128xf32>
      tpu.vector_store %arg17[%c0_54, %c0_55], %75 {strides = array<i32>} : memref<1x128xf32, #tpu.memory_space<vmem>>, vector<1x128xf32>,
    } else {
    }
    return
  }
  func.func @transform_0(%arg0: i32) -> (i32, i32) {
    %c0_i32 = arith.constant 0 : i32
    %c0_i32_0 = arith.constant 0 : i32
    return %arg0, %c0_i32 : i32, i32
  }
  func.func @transform_1(%arg0: i32) -> (i32, i32) {
    %c0_i32 = arith.constant 0 : i32
    %c0_i32_0 = arith.constant 0 : i32
    return %arg0, %c0_i32 : i32, i32
  }
  func.func @transform_2(%arg0: i32) -> (i32, i32) {
    %c0_i32 = arith.constant 0 : i32
    %c0_i32_0 = arith.constant 0 : i32
    return %arg0, %c0_i32 : i32, i32
  }
  func.func @transform_3(%arg0: i32) -> (i32, i32) {
    %c0_i32 = arith.constant 0 : i32
    %c0_i32_0 = arith.constant 0 : i32
    return %arg0, %c0_i32 : i32, i32
  }
  func.func @transform_4(%arg0: i32) -> (i32, i32) {
    %c0_i32 = arith.constant 0 : i32
    %c0_i32_0 = arith.constant 0 : i32
    return %arg0, %c0_i32 : i32, i32
  }
  func.func @transform_5(%arg0: i32) -> (i32, i32) {
    %c0_i32 = arith.constant 0 : i32
    %c0_i32_0 = arith.constant 0 : i32
    %c0_i32_1 = arith.constant 0 : i32
    return %c0_i32, %c0_i32_0 : i32, i32
  }
  func.func @transform_6(%arg0: i32) -> (i32, i32) {
    %c0_i32 = arith.constant 0 : i32
    %c0_i32_0 = arith.constant 0 : i32
    %c0_i32_1 = arith.constant 0 : i32
    return %c0_i32, %c0_i32_0 : i32, i32
  }
  func.func @transform_7(%arg0: i32) -> (i32, i32) {
    %c0_i32 = arith.constant 0 : i32
    %c0_i32_0 = arith.constant 0 : i32
    %c0_i32_1 = arith.constant 0 : i32
    return %c0_i32, %c0_i32_0 : i32, i32
  }
  func.func @transform_8(%arg0: i32) -> (i32, i32) {
    %c0_i32 = arith.constant 0 : i32
    %c0_i32_0 = arith.constant 0 : i32
    %c0_i32_1 = arith.constant 0 : i32
    return %c0_i32, %c0_i32_0 : i32, i32
  }
  func.func @transform_9(%arg0: i32) -> (i32, i32) {
    %c0_i32 = arith.constant 0 : i32
    %c0_i32_0 = arith.constant 0 : i32
    %c0_i32_1 = arith.constant 0 : i32
    return %c0_i32, %c0_i32_0 : i32, i32
  }
  func.func @transform_10(%arg0: i32) -> (i32, i32) {
    %c0_i32 = arith.constant 0 : i32
    %c0_i32_0 = arith.constant 0 : i32
    %c0_i32_1 = arith.constant 0 : i32
    return %c0_i32, %c0_i32_0 : i32, i32
  }
  func.func @transform_11(%arg0: i32) -> (i32, i32) {
    %c0_i32 = arith.constant 0 : i32
    %c0_i32_0 = arith.constant 0 : i32
    %c0_i32_1 = arith.constant 0 : i32
    return %c0_i32, %c0_i32_0 : i32, i32
  }
  func.func @transform_12(%arg0: i32) -> (i32, i32) {
    %c0_i32 = arith.constant 0 : i32
    %c0_i32_0 = arith.constant 0 : i32
    %c0_i32_1 = arith.constant 0 : i32
    return %c0_i32, %c0_i32_0 : i32, i32
  }
  func.func @transform_13(%arg0: i32) -> (i32, i32) {
    %c0_i32 = arith.constant 0 : i32
    %c0_i32_0 = arith.constant 0 : i32
    %c0_i32_1 = arith.constant 0 : i32
    return %c0_i32, %c0_i32_0 : i32, i32
  }
  func.func @transform_14(%arg0: i32) -> (i32, i32) {
    %c0_i32 = arith.constant 0 : i32
    %c0_i32_0 = arith.constant 0 : i32
    %c0_i32_1 = arith.constant 0 : i32
    return %c0_i32, %c0_i32_0 : i32, i32
  }
  func.func @transform_15(%arg0: i32) -> (i32, i32) {
    %c0_i32 = arith.constant 0 : i32
    %c0_i32_0 = arith.constant 0 : i32
    %c0_i32_1 = arith.constant 0 : i32
    return %c0_i32, %c0_i32_0 : i32, i32
  }
  func.func @transform_16(%arg0: i32) -> (i32, i32) {
    %c0_i32 = arith.constant 0 : i32
    %c0_i32_0 = arith.constant 0 : i32
    %c0_i32_1 = arith.constant 0 : i32
    return %c0_i32, %c0_i32_0 : i32, i32
  }
}

</mosaic_0001>

<llo_original>
// kernel: generator_forward.1
$region0: #{generator_forward.1}
  #allocation0 [shape = 'u32[]', space=smem, size = 0x4, offset = 0x4, fixed_abs, tag = 'smem constant byte address 0x4 - core index']
  #allocation1 [shape = 'u32[72,128]{1,0:T(1,128)}', space=vmem, size = 0x9000, scoped, tag = 'internal scratch']
  #allocation2 [shape = 'f32[1,128]{1,0:T(1,128)}', space=vmem, size = 0x200, scoped, tag = 'scratch operand']
  %s0 = inlined_call_operand.vmem [shape: f32[24,1], index: 0, kind: input, shape index: {}]
  %s1 = inlined_call_operand.vmem [shape: bf16[24,256], index: 1, kind: input, shape index: {}]
  %s2 = inlined_call_operand.vmem [shape: bf16[24,256], index: 2, kind: input, shape index: {}]
  %s3 = inlined_call_operand.vmem [shape: bf16[24,16], index: 3, kind: input, shape index: {}]
  %s4 = inlined_call_operand.vmem [shape: bf16[24,16], index: 4, kind: input, shape index: {}]
  %s5 = inlined_call_operand.vmem [shape: bf16[256,1024], index: 5, kind: input, shape index: {}]
  %s6 = inlined_call_operand.hbm [shape: bf16[256,1024], index: 6, kind: input, shape index: {}]
  %s7 = inlined_call_operand.vmem [shape: bf16[16,1024], index: 7, kind: input, shape index: {}]
  %s8 = inlined_call_operand.hbm [shape: bf16[16,1024], index: 8, kind: input, shape index: {}]
  %s9 = inlined_call_operand.vmem [shape: f32[1,1024], index: 9, kind: input, shape index: {}]
  %s10 = inlined_call_operand.hbm [shape: bf16[1024,256], index: 10, kind: input, shape index: {}]
  %s11 = inlined_call_operand.vmem [shape: f32[1,256], index: 11, kind: input, shape index: {}]
  %s12 = inlined_call_operand.vmem [shape: bf16[256,128], index: 12, kind: input, shape index: {}]
  %s13 = inlined_call_operand.vmem [shape: f32[1,128], index: 13, kind: input, shape index: {}]
  %s14 = inlined_call_operand.hbm [shape: bf16[128,128], index: 14, kind: input, shape index: {}]
  %s15 = inlined_call_operand.vmem [shape: f32[1,128], index: 15, kind: input, shape index: {}]
  %s16 = inlined_call_operand.hbm [shape: f32[1,128], index: 16, kind: output, shape index: {}]
  %s17 = sld [smem:[#allocation0]]
  $region121: #{generator_forward.1} parent=0
    _
  %s19 = ssub.s32 1, %s17
  %s20 = scalar_select 0, %s19, %s17
  $region1: #{generator_forward.1} parent=0
    #allocation3 [shape = 'u8[524288]{0}', space=vmem, size = 0x80000, scoped, tag = 'input window, operand 6, single buffered']
    #allocation4 [shape = 's32[2]{0}', space=sflag, size = 0x8, scoped, tag = 'scoped memory for generator_forward.1']
    #allocation5 [shape = 's32[2]{0}', space=sflag, size = 0x8, scoped, tag = 'scoped memory for generator_forward.1']
    #allocation6 [shape = 'u8[32768]{0}', space=vmem, size = 0x8000, scoped, tag = 'input window, operand 8, single buffered']
    #allocation7 [shape = 's32[1]{0}', space=sflag, size = 0x4, scoped, tag = 'scoped memory for generator_forward.1']
    #allocation8 [shape = 'u8[524288]{0}', space=vmem, size = 0x80000, scoped, tag = 'input window, operand 10, single buffered']
    #allocation9 [shape = 'u8[32768]{0}', space=vmem, size = 0x8000, scoped, tag = 'input window, operand 14, single buffered']
    #allocation10 [shape = 's32[1]{0}', space=sflag, size = 0x4, scoped, tag = 'scoped memory for generator_forward.1']
    #allocation11 [shape = 'u8[512]{0}', space=vmem, size = 0x400, scoped, tag = 'output window, operand 0, single buffered']
    %21 = vsyncpa [#allocation4], 0
    %22 = vsyncpa [#allocation7], 0
    %23 = vsyncpa [#allocation10], 0
    %24 = vsyncpa [#allocation5], 0
    loop: start=0, step=1, limit=5
    $region2: #{generator_forward.1} parent=1 // loop_pre_header
      _
    $region3: #{generator_forward.1} parent=1 // loop_header
      %s26 = sphi 0, %s30
      %p27 = scmp.ge.s32.totalorder %s26, 5
      %s36 = sphi 0, %s38
      %s39 = sphi 0, %s36
      %s40 = sphi 0, %s39
      %s56 = sphi 0, %s40
      %s62 = sphi 0, %s64
      %s65 = sphi 0, %s62
      %s66 = sphi 0, %s65
      %s82 = sphi 0, %s66
      %s88 = sphi 0, %s90
      %s91 = sphi 0, %s88
      %s92 = sphi 0, %s91
      %s108 = sphi 0, %s92
      %s114 = sphi 0, %s116
      %s117 = sphi 0, %s114
      %s118 = sphi 0, %s117
      %s134 = sphi 0, %s118
      %s140 = sphi 0, %s142
      %s143 = sphi 0, %s140
      %s144 = sphi 0, %s143
      %s160 = sphi 0, %s144
      %s164 = sphi 0, %s164
      %s166 = sphi 0, %s164
      %s167 = sphi 0, %s166
      %s181 = sphi 0, %s167
      %s185 = sphi 0, %s185
      %s187 = sphi 0, %s185
      %s188 = sphi 0, %s187
      %s202 = sphi 0, %s188
      %s206 = sphi 0, %s206
      %s208 = sphi 0, %s206
      %s209 = sphi 0, %s208
      %s223 = sphi 0, %s209
      %s227 = sphi 0, %s227
      %s229 = sphi 0, %s227
      %s230 = sphi 0, %s229
      %s244 = sphi 0, %s230
      %s248 = sphi 0, %s248
      %s250 = sphi 0, %s248
      %s251 = sphi 0, %s250
      %s265 = sphi 0, %s251
      %s269 = sphi 0, %s269
      %s271 = sphi 0, %s269
      %s272 = sphi 0, %s271
      %s286 = sphi 0, %s272
      %s290 = sphi 0, %s290
      %s292 = sphi 0, %s290
      %s293 = sphi 0, %s292
      %s307 = sphi 0, %s293
      %s311 = sphi 0, %s311
      %s313 = sphi 0, %s311
      %s314 = sphi 0, %s313
      %s328 = sphi 0, %s314
      %s332 = sphi 0, %s332
      %s334 = sphi 0, %s332
      %s335 = sphi 0, %s334
      %s349 = sphi 0, %s335
      %s353 = sphi 0, %s353
      %s355 = sphi 0, %s353
      %s356 = sphi 0, %s355
      %s370 = sphi 0, %s356
      %s374 = sphi 0, %s374
      %s376 = sphi 0, %s374
      %s377 = sphi 0, %s376
      %s391 = sphi 0, %s377
      %s395 = sphi 0, %s395
      %s397 = sphi 0, %s395
      %s398 = sphi 0, %s397
      %s412 = sphi 0, %s398
    $region4: #{generator_forward.1} parent=1 // loop_header_branch
      %29 = sbr.rel (%p27) target = $region8
    $region5: #{generator_forward.1} parent=1 // loop_body
      %s31 = ssub.s32 %s26, 1
      %s32 = ssub.s32 %s26, 2
      %s33 = sadd.s32 %s26, 1
      %s34 = ssub.s32 %s26, %s33
      %p35 = scmp.eq.s32.totalorder %s34, 0
      %s37 = sadd.s32 %s36, 1
      %s38 = scalar_select %p35, %s36, %s37
      %p41 = pneg %p35
      %p42 = scmp.eq.s32.totalorder %s26, 2
      %p43 = por %p41, %p42
      %p44 = scmp.ne.s32.totalorder %s36, %s39
      %p45 = scmp.eq.s32.totalorder %s26, 0
      %p46 = por %p44, %p45
      %p47 = scmp.ne.s32.totalorder %s36, %s39
      %p48 = scmp.eq.s32.totalorder %s31, 2
      %p49 = por %p47, %p48
      %p50 = scmp.ne.s32.totalorder %s39, %s40
      %p51 = scmp.eq.s32.totalorder %s31, 0
      %p52 = por %p50, %p51
      %p53 = scmp.ne.s32.totalorder %s39, %s40
      %p54 = scmp.eq.s32.totalorder %s32, 2
      %p55 = por %p53, %p54
      %p57 = scmp.ne.s32.totalorder %s40, %s56
      %p58 = scmp.eq.s32.totalorder %s32, 0
      %p59 = por %p57, %p58
      %s60 = ssub.s32 %s26, %s33
      %p61 = scmp.eq.s32.totalorder %s60, 0
      %s63 = sadd.s32 %s62, 1
      %s64 = scalar_select %p61, %s62, %s63
      %p67 = pneg %p61
      %p68 = scmp.eq.s32.totalorder %s26, 2
      %p69 = por %p67, %p68
      %p70 = scmp.ne.s32.totalorder %s62, %s65
      %p71 = scmp.eq.s32.totalorder %s26, 0
      %p72 = por %p70, %p71
      %p73 = scmp.ne.s32.totalorder %s62, %s65
      %p74 = scmp.eq.s32.totalorder %s31, 2
      %p75 = por %p73, %p74
      %p76 = scmp.ne.s32.totalorder %s65, %s66
      %p77 = scmp.eq.s32.totalorder %s31, 0
      %p78 = por %p76, %p77
      %p79 = scmp.ne.s32.totalorder %s65, %s66
      %p80 = scmp.eq.s32.totalorder %s32, 2
      %p81 = por %p79, %p80
      %p83 = scmp.ne.s32.totalorder %s66, %s82
      %p84 = scmp.eq.s32.totalorder %s32, 0
      %p85 = por %p83, %p84
      %s86 = ssub.s32 %s26, %s33
      %p87 = scmp.eq.s32.totalorder %s86, 0
      %s89 = sadd.s32 %s88, 1
      %s90 = scalar_select %p87, %s88, %s89
      %p93 = pneg %p87
      %p94 = scmp.eq.s32.totalorder %s26, 2
      %p95 = por %p93, %p94
      %p96 = scmp.ne.s32.totalorder %s88, %s91
      %p97 = scmp.eq.s32.totalorder %s26, 0
      %p98 = por %p96, %p97
      %p99 = scmp.ne.s32.totalorder %s88, %s91
      %p100 = scmp.eq.s32.totalorder %s31, 2
      %p101 = por %p99, %p100
      %p102 = scmp.ne.s32.totalorder %s91, %s92
      %p103 = scmp.eq.s32.totalorder %s31, 0
      %p104 = por %p102, %p103
      %p105 = scmp.ne.s32.totalorder %s91, %s92
      %p106 = scmp.eq.s32.totalorder %s32, 2
      %p107 = por %p105, %p106
      %p109 = scmp.ne.s32.totalorder %s92, %s108
      %p110 = scmp.eq.s32.totalorder %s32, 0
      %p111 = por %p109, %p110
      %s112 = ssub.s32 %s26, %s33
      %p113 = scmp.eq.s32.totalorder %s112, 0
      %s115 = sadd.s32 %s114, 1
      %s116 = scalar_select %p113, %s114, %s115
      %p119 = pneg %p113
      %p120 = scmp.eq.s32.totalorder %s26, 2
      %p121 = por %p119, %p120
      %p122 = scmp.ne.s32.totalorder %s114, %s117
      %p123 = scmp.eq.s32.totalorder %s26, 0
      %p124 = por %p122, %p123
      %p125 = scmp.ne.s32.totalorder %s114, %s117
      %p126 = scmp.eq.s32.totalorder %s31, 2
      %p127 = por %p125, %p126
      %p128 = scmp.ne.s32.totalorder %s117, %s118
      %p129 = scmp.eq.s32.totalorder %s31, 0
      %p130 = por %p128, %p129
      %p131 = scmp.ne.s32.totalorder %s117, %s118
      %p132 = scmp.eq.s32.totalorder %s32, 2
      %p133 = por %p131, %p132
      %p135 = scmp.ne.s32.totalorder %s118, %s134
      %p136 = scmp.eq.s32.totalorder %s32, 0
      %p137 = por %p135, %p136
      %s138 = ssub.s32 %s26, %s33
      %p139 = scmp.eq.s32.totalorder %s138, 0
      %s141 = sadd.s32 %s140, 1
      %s142 = scalar_select %p139, %s140, %s141
      %p145 = pneg %p139
      %p146 = scmp.eq.s32.totalorder %s26, 2
      %p147 = por %p145, %p146
      %p148 = scmp.ne.s32.totalorder %s140, %s143
      %p149 = scmp.eq.s32.totalorder %s26, 0
      %p150 = por %p148, %p149
      %p151 = scmp.ne.s32.totalorder %s140, %s143
      %p152 = scmp.eq.s32.totalorder %s31, 2
      %p153 = por %p151, %p152
      %p154 = scmp.ne.s32.totalorder %s143, %s144
      %p155 = scmp.eq.s32.totalorder %s31, 0
      %p156 = por %p154, %p155
      %p157 = scmp.ne.s32.totalorder %s143, %s144
      %p158 = scmp.eq.s32.totalorder %s32, 2
      %p159 = por %p157, %p158
      %p161 = scmp.ne.s32.totalorder %s144, %s160
      %p162 = scmp.eq.s32.totalorder %s32, 0
      %p163 = por %p161, %p162
      %s165 = sadd.s32 %s164, 1
      %p168 = scmp.eq.s32.totalorder %s26, 2
      %p169 = scmp.ne.s32.totalorder %s164, %s166
      %p170 = scmp.eq.s32.totalorder %s26, 0
      %p171 = por %p169, %p170
      %p172 = scmp.ne.s32.totalorder %s164, %s166
      %p173 = scmp.eq.s32.totalorder %s31, 2
      %p174 = por %p172, %p173
      %p175 = scmp.ne.s32.totalorder %s166, %s167
      %p176 = scmp.eq.s32.totalorder %s31, 0
      %p177 = por %p175, %p176
      %p178 = scmp.ne.s32.totalorder %s166, %s167
      %p179 = scmp.eq.s32.totalorder %s32, 2
      %p180 = por %p178, %p179
      %p182 = scmp.ne.s32.totalorder %s167, %s181
      %p183 = scmp.eq.s32.totalorder %s32, 0
      %p184 = por %p182, %p183
      %s186 = sadd.s32 %s185, 1
      %p189 = scmp.eq.s32.totalorder %s26, 2
      %p190 = scmp.ne.s32.totalorder %s185, %s187
      %p191 = scmp.eq.s32.totalorder %s26, 0
      %p192 = por %p190, %p191
      %p193 = scmp.ne.s32.totalorder %s185, %s187
      %p194 = scmp.eq.s32.totalorder %s31, 2
      %p195 = por %p193, %p194
      %p196 = scmp.ne.s32.totalorder %s187, %s188
      %p197 = scmp.eq.s32.totalorder %s31, 0
      %p198 = por %p196, %p197
      %p199 = scmp.ne.s32.totalorder %s187, %s188
      %p200 = scmp.eq.s32.totalorder %s32, 2
      %p201 = por %p199, %p200
      %p203 = scmp.ne.s32.totalorder %s188, %s202
      %p204 = scmp.eq.s32.totalorder %s32, 0
      %p205 = por %p203, %p204
      %s207 = sadd.s32 %s206, 1
      %p210 = scmp.eq.s32.totalorder %s26, 2
      %p211 = scmp.ne.s32.totalorder %s206, %s208
      %p212 = scmp.eq.s32.totalorder %s26, 0
      %p213 = por %p211, %p212
      %p214 = scmp.ne.s32.totalorder %s206, %s208
      %p215 = scmp.eq.s32.totalorder %s31, 2
      %p216 = por %p214, %p215
      %p217 = scmp.ne.s32.totalorder %s208, %s209
      %p218 = scmp.eq.s32.totalorder %s31, 0
      %p219 = por %p217, %p218
      %p220 = scmp.ne.s32.totalorder %s208, %s209
      %p221 = scmp.eq.s32.totalorder %s32, 2
      %p222 = por %p220, %p221
      %p224 = scmp.ne.s32.totalorder %s209, %s223
      %p225 = scmp.eq.s32.totalorder %s32, 0
      %p226 = por %p224, %p225
      %s228 = sadd.s32 %s227, 1
      %p231 = scmp.eq.s32.totalorder %s26, 2
      %p232 = scmp.ne.s32.totalorder %s227, %s229
      %p233 = scmp.eq.s32.totalorder %s26, 0
      %p234 = por %p232, %p233
      %p235 = scmp.ne.s32.totalorder %s227, %s229
      %p236 = scmp.eq.s32.totalorder %s31, 2
      %p237 = por %p235, %p236
      %p238 = scmp.ne.s32.totalorder %s229, %s230
      %p239 = scmp.eq.s32.totalorder %s31, 0
      %p240 = por %p238, %p239
      %p241 = scmp.ne.s32.totalorder %s229, %s230
      %p242 = scmp.eq.s32.totalorder %s32, 2
      %p243 = por %p241, %p242
      %p245 = scmp.ne.s32.totalorder %s230, %s244
      %p246 = scmp.eq.s32.totalorder %s32, 0
      %p247 = por %p245, %p246
      %s249 = sadd.s32 %s248, 1
      %p252 = scmp.eq.s32.totalorder %s26, 2
      %p253 = scmp.ne.s32.totalorder %s248, %s250
      %p254 = scmp.eq.s32.totalorder %s26, 0
      %p255 = por %p253, %p254
      %p256 = scmp.ne.s32.totalorder %s248, %s250
      %p257 = scmp.eq.s32.totalorder %s31, 2
      %p258 = por %p256, %p257
      %p259 = scmp.ne.s32.totalorder %s250, %s251
      %p260 = scmp.eq.s32.totalorder %s31, 0
      %p261 = por %p259, %p260
      %p262 = scmp.ne.s32.totalorder %s250, %s251
      %p263 = scmp.eq.s32.totalorder %s32, 2
      %p264 = por %p262, %p263
      %p266 = scmp.ne.s32.totalorder %s251, %s265
      %p267 = scmp.eq.s32.totalorder %s32, 0
      %p268 = por %p266, %p267
      %s270 = sadd.s32 %s269, 1
      %p273 = scmp.eq.s32.totalorder %s26, 2
      %p274 = scmp.ne.s32.totalorder %s269, %s271
      %p275 = scmp.eq.s32.totalorder %s26, 0
      %p276 = por %p274, %p275
      %p277 = scmp.ne.s32.totalorder %s269, %s271
      %p278 = scmp.eq.s32.totalorder %s31, 2
      %p279 = por %p277, %p278
      %p280 = scmp.ne.s32.totalorder %s271, %s272
      %p281 = scmp.eq.s32.totalorder %s31, 0
      %p282 = por %p280, %p281
      %p283 = scmp.ne.s32.totalorder %s271, %s272
      %p284 = scmp.eq.s32.totalorder %s32, 2
      %p285 = por %p283, %p284
      %p287 = scmp.ne.s32.totalorder %s272, %s286
      %p288 = scmp.eq.s32.totalorder %s32, 0
      %p289 = por %p287, %p288
      %s291 = sadd.s32 %s290, 1
      %p294 = scmp.eq.s32.totalorder %s26, 2
      %p295 = scmp.ne.s32.totalorder %s290, %s292
      %p296 = scmp.eq.s32.totalorder %s26, 0
      %p297 = por %p295, %p296
      %p298 = scmp.ne.s32.totalorder %s290, %s292
      %p299 = scmp.eq.s32.totalorder %s31, 2
      %p300 = por %p298, %p299
      %p301 = scmp.ne.s32.totalorder %s292, %s293
      %p302 = scmp.eq.s32.totalorder %s31, 0
      %p303 = por %p301, %p302
      %p304 = scmp.ne.s32.totalorder %s292, %s293
      %p305 = scmp.eq.s32.totalorder %s32, 2
      %p306 = por %p304, %p305
      %p308 = scmp.ne.s32.totalorder %s293, %s307
      %p309 = scmp.eq.s32.totalorder %s32, 0
      %p310 = por %p308, %p309
      %s312 = sadd.s32 %s311, 1
      %p315 = scmp.eq.s32.totalorder %s26, 2
      %p316 = scmp.ne.s32.totalorder %s311, %s313
      %p317 = scmp.eq.s32.totalorder %s26, 0
      %p318 = por %p316, %p317
      %p319 = scmp.ne.s32.totalorder %s311, %s313
      %p320 = scmp.eq.s32.totalorder %s31, 2
      %p321 = por %p319, %p320
      %p322 = scmp.ne.s32.totalorder %s313, %s314
      %p323 = scmp.eq.s32.totalorder %s31, 0
      %p324 = por %p322, %p323
      %p325 = scmp.ne.s32.totalorder %s313, %s314
      %p326 = scmp.eq.s32.totalorder %s32, 2
      %p327 = por %p325, %p326
      %p329 = scmp.ne.s32.totalorder %s314, %s328
      %p330 = scmp.eq.s32.totalorder %s32, 0
      %p331 = por %p329, %p330
      %s333 = sadd.s32 %s332, 1
      %p336 = scmp.eq.s32.totalorder %s26, 2
      %p337 = scmp.ne.s32.totalorder %s332, %s334
      %p338 = scmp.eq.s32.totalorder %s26, 0
      %p339 = por %p337, %p338
      %p340 = scmp.ne.s32.totalorder %s332, %s334
      %p341 = scmp.eq.s32.totalorder %s31, 2
      %p342 = por %p340, %p341
      %p343 = scmp.ne.s32.totalorder %s334, %s335
      %p344 = scmp.eq.s32.totalorder %s31, 0
      %p345 = por %p343, %p344
      %p346 = scmp.ne.s32.totalorder %s334, %s335
      %p347 = scmp.eq.s32.totalorder %s32, 2
      %p348 = por %p346, %p347
      %p350 = scmp.ne.s32.totalorder %s335, %s349
      %p351 = scmp.eq.s32.totalorder %s32, 0
      %p352 = por %p350, %p351
      %s354 = sadd.s32 %s353, 1
      %p357 = scmp.eq.s32.totalorder %s26, 2
      %p358 = scmp.ne.s32.totalorder %s353, %s355
      %p359 = scmp.eq.s32.totalorder %s26, 0
      %p360 = por %p358, %p359
      %p361 = scmp.ne.s32.totalorder %s353, %s355
      %p362 = scmp.eq.s32.totalorder %s31, 2
      %p363 = por %p361, %p362
      %p364 = scmp.ne.s32.totalorder %s355, %s356
      %p365 = scmp.eq.s32.totalorder %s31, 0
      %p366 = por %p364, %p365
      %p367 = scmp.ne.s32.totalorder %s355, %s356
      %p368 = scmp.eq.s32.totalorder %s32, 2
      %p369 = por %p367, %p368
      %p371 = scmp.ne.s32.totalorder %s356, %s370
      %p372 = scmp.eq.s32.totalorder %s32, 0
      %p373 = por %p371, %p372
      %s375 = sadd.s32 %s374, 1
      %p378 = scmp.eq.s32.totalorder %s26, 2
      %p379 = scmp.ne.s32.totalorder %s374, %s376
      %p380 = scmp.eq.s32.totalorder %s26, 0
      %p381 = por %p379, %p380
      %p382 = scmp.ne.s32.totalorder %s374, %s376
      %p383 = scmp.eq.s32.totalorder %s31, 2
      %p384 = por %p382, %p383
      %p385 = scmp.ne.s32.totalorder %s376, %s377
      %p386 = scmp.eq.s32.totalorder %s31, 0
      %p387 = por %p385, %p386
      %p388 = scmp.ne.s32.totalorder %s376, %s377
      %p389 = scmp.eq.s32.totalorder %s32, 2
      %p390 = por %p388, %p389
      %p392 = scmp.ne.s32.totalorder %s377, %s391
      %p393 = scmp.eq.s32.totalorder %s32, 0
      %p394 = por %p392, %p393
      %s396 = sadd.s32 %s395, 1
      %p399 = scmp.eq.s32.totalorder %s26, 2
      %p400 = scmp.ne.s32.totalorder %s395, %s397
      %p401 = scmp.eq.s32.totalorder %s26, 0
      %p402 = por %p400, %p401
      %p403 = scmp.ne.s32.totalorder %s395, %s397
      %p404 = scmp.eq.s32.totalorder %s31, 2
      %p405 = por %p403, %p404
      %p406 = scmp.ne.s32.totalorder %s397, %s398
      %p407 = scmp.eq.s32.totalorder %s31, 0
      %p408 = por %p406, %p407
      %p409 = scmp.ne.s32.totalorder %s397, %s398
      %p410 = scmp.eq.s32.totalorder %s32, 2
      %p411 = por %p409, %p410
      %p413 = scmp.ne.s32.totalorder %s398, %s412
      %p414 = scmp.eq.s32.totalorder %s32, 0
      %p415 = por %p413, %p414
      %p416 = scmp.le.s32.totalorder 1, %s26
      %p417 = scmp.lt.s32.totalorder %s26, 4
      %p418 = pnand %p416, %p417
      %p419 = pneg %p418
      // Predicated region
      $region9: #{generator_forward.1} parent=5 // pred_check
        _
      $region10: #{generator_forward.1} parent=5 // pred_check_branch
        %421 = sbr.rel (%p418) target = $region12
      $region11: #{generator_forward.1} parent=5 // pred_region
        %s422 = ssub.s32 %s26, 1
        // Predicated region
        $region13: #{generator_forward.1} parent=11 // pred_check
          %p423 = pneg %p177
        $region14: #{generator_forward.1} parent=11 // pred_check_branch
          %425 = sbr.rel (%p423) target = $region16
        $region15: #{generator_forward.1} parent=11 // pred_region
          _
        $region16: #{generator_forward.1} parent=11 // pred_fallthru
          _
        // Predicated region
        $region17: #{generator_forward.1} parent=11 // pred_check
          %p426 = pneg %p198
        $region18: #{generator_forward.1} parent=11 // pred_check_branch
          %428 = sbr.rel (%p426) target = $region20
        $region19: #{generator_forward.1} parent=11 // pred_region
          %430 = vsyncadd [#allocation4], 0
          %s431 = sshll.u32 %s6, 4
          %s432 = int_to_ptr.hbm [resolvable:$true] %s431
          %s433 = sshll.u32 [#allocation3], 4
          %s434 = int_to_ptr.vmem [resolvable:$true] %s433
          %439 = dma.hbm_to_vmem [thread:$0]  %s432, 16384, %s434, [#allocation4], 512, 512, 32
        $region20: #{generator_forward.1} parent=11 // pred_fallthru
          _
        // Predicated region
        $region21: #{generator_forward.1} parent=11 // pred_check
          %p440 = pneg %p219
        $region22: #{generator_forward.1} parent=11 // pred_check_branch
          %442 = sbr.rel (%p440) target = $region24
        $region23: #{generator_forward.1} parent=11 // pred_region
          _
        $region24: #{generator_forward.1} parent=11 // pred_fallthru
          _
        // Predicated region
        $region25: #{generator_forward.1} parent=11 // pred_check
          %p443 = pneg %p240
        $region26: #{generator_forward.1} parent=11 // pred_check_branch
          %445 = sbr.rel (%p443) target = $region28
        $region27: #{generator_forward.1} parent=11 // pred_region
          %447 = vsyncadd [#allocation7], 0
          %s448 = sshll.u32 %s8, 4
          %s449 = int_to_ptr.hbm [resolvable:$true] %s448
          %s450 = sshll.u32 [#allocation6], 4
          %s451 = int_to_ptr.vmem [resolvable:$true] %s450
          %456 = dma.hbm_to_vmem [thread:$0]  %s449, 1024, %s451, [#allocation7], 512, 512, 32
        $region28: #{generator_forward.1} parent=11 // pred_fallthru
          _
        // Predicated region
        $region29: #{generator_forward.1} parent=11 // pred_check
          %p457 = pneg %p261
        $region30: #{generator_forward.1} parent=11 // pred_check_branch
          %459 = sbr.rel (%p457) target = $region32
        $region31: #{generator_forward.1} parent=11 // pred_region
          _
        $region32: #{generator_forward.1} parent=11 // pred_fallthru
          _
        // Predicated region
        $region33: #{generator_forward.1} parent=11 // pred_check
          %p460 = pneg %p282
        $region34: #{generator_forward.1} parent=11 // pred_check_branch
          %462 = sbr.rel (%p460) target = $region36
        $region35: #{generator_forward.1} parent=11 // pred_region
          %464 = vsyncadd [#allocation7], 0
          %s465 = sshll.u32 %s10, 4
          %s466 = int_to_ptr.hbm [resolvable:$true] %s465
          %s467 = sshll.u32 [#allocation8], 4
          %s468 = int_to_ptr.vmem [resolvable:$true] %s467
          %473 = dma.hbm_to_vmem [thread:$0]  %s466, 16384, %s468, [#allocation7], 128, 128, 8
        $region36: #{generator_forward.1} parent=11 // pred_fallthru
          _
        // Predicated region
        $region37: #{generator_forward.1} parent=11 // pred_check
          %p474 = pneg %p303
        $region38: #{generator_forward.1} parent=11 // pred_check_branch
          %476 = sbr.rel (%p474) target = $region40
        $region39: #{generator_forward.1} parent=11 // pred_region
          _
        $region40: #{generator_forward.1} parent=11 // pred_fallthru
          _
        // Predicated region
        $region41: #{generator_forward.1} parent=11 // pred_check
          %p477 = pneg %p324
        $region42: #{generator_forward.1} parent=11 // pred_check_branch
          %479 = sbr.rel (%p477) target = $region44
        $region43: #{generator_forward.1} parent=11 // pred_region
          _
        $region44: #{generator_forward.1} parent=11 // pred_fallthru
          _
        // Predicated region
        $region45: #{generator_forward.1} parent=11 // pred_check
          %p480 = pneg %p345
        $region46: #{generator_forward.1} parent=11 // pred_check_branch
          %482 = sbr.rel (%p480) target = $region48
        $region47: #{generator_forward.1} parent=11 // pred_region
          _
        $region48: #{generator_forward.1} parent=11 // pred_fallthru
          _
        // Predicated region
        $region49: #{generator_forward.1} parent=11 // pred_check
          %p483 = pneg %p366
        $region50: #{generator_forward.1} parent=11 // pred_check_branch
          %485 = sbr.rel (%p483) target = $region52
        $region51: #{generator_forward.1} parent=11 // pred_region
          %487 = vsyncadd [#allocation10], 0
          %s488 = sshll.u32 %s14, 4
          %s489 = int_to_ptr.hbm [resolvable:$true] %s488
          %s490 = sshll.u32 [#allocation9], 4
          %s491 = int_to_ptr.vmem [resolvable:$true] %s490
          %496 = dma.hbm_to_vmem [thread:$0]  %s489, 1024, %s491, [#allocation10], 64, 64, 4
        $region52: #{generator_forward.1} parent=11 // pred_fallthru
          _
        // Predicated region
        $region53: #{generator_forward.1} parent=11 // pred_check
          %p497 = pneg %p387
        $region54: #{generator_forward.1} parent=11 // pred_check_branch
          %499 = sbr.rel (%p497) target = $region56
        $region55: #{generator_forward.1} parent=11 // pred_region
          _
        $region56: #{generator_forward.1} parent=11 // pred_fallthru
          _
      $region12: #{generator_forward.1} parent=5 // pred_fallthru
        _
      %p500 = scmp.lt.s32.totalorder %s26, 3
      // Predicated region
      $region57: #{generator_forward.1} parent=5 // pred_check
        %p501 = pneg %p500
      $region58: #{generator_forward.1} parent=5 // pred_check_branch
        %503 = sbr.rel (%p501) target = $region60
      $region59: #{generator_forward.1} parent=5 // pred_region
        // Predicated region
        $region61: #{generator_forward.1} parent=59 // pred_check
          %p504 = pneg %p46
        $region62: #{generator_forward.1} parent=59 // pred_check_branch
          %506 = sbr.rel (%p504) target = $region64
        $region63: #{generator_forward.1} parent=59 // pred_region
          %p507 = scmp.lt.s32.totalorder %s26, 2
          %s508 = scalar_select %p507, %s26, 2
          %s509 = smul.addr %s508, 8
          %s510 = scalar_lea.vmem %s0, %s509
        $region64: #{generator_forward.1} parent=59 // pred_fallthru
          _
        // Predicated region
        $region65: #{generator_forward.1} parent=59 // pred_check
          %p511 = pneg %p72
        $region66: #{generator_forward.1} parent=59 // pred_check_branch
          %513 = sbr.rel (%p511) target = $region68
        $region67: #{generator_forward.1} parent=59 // pred_region
          %p514 = scmp.lt.s32.totalorder %s26, 2
          %s515 = scalar_select %p514, %s26, 2
          %s516 = smul.addr %s515, 2
          %s517 = smul.addr %s516, 4
          %s518 = scalar_lea.vmem %s1, %s517
        $region68: #{generator_forward.1} parent=59 // pred_fallthru
          _
        // Predicated region
        $region69: #{generator_forward.1} parent=59 // pred_check
          %p519 = pneg %p98
        $region70: #{generator_forward.1} parent=59 // pred_check_branch
          %521 = sbr.rel (%p519) target = $region72
        $region71: #{generator_forward.1} parent=59 // pred_region
          %p522 = scmp.lt.s32.totalorder %s26, 2
          %s523 = scalar_select %p522, %s26, 2
          %s524 = smul.addr %s523, 2
          %s525 = smul.addr %s524, 4
          %s526 = scalar_lea.vmem %s2, %s525
        $region72: #{generator_forward.1} parent=59 // pred_fallthru
          _
        // Predicated region
        $region73: #{generator_forward.1} parent=59 // pred_check
          %p527 = pneg %p124
        $region74: #{generator_forward.1} parent=59 // pred_check_branch
          %529 = sbr.rel (%p527) target = $region76
        $region75: #{generator_forward.1} parent=59 // pred_region
          %p530 = scmp.lt.s32.totalorder %s26, 2
          %s531 = scalar_select %p530, %s26, 2
          %s532 = smul.addr %s531, 4
          %s533 = scalar_lea.vmem %s3, %s532
        $region76: #{generator_forward.1} parent=59 // pred_fallthru
          _
        // Predicated region
        $region77: #{generator_forward.1} parent=59 // pred_check
          %p534 = pneg %p150
        $region78: #{generator_forward.1} parent=59 // pred_check_branch
          %536 = sbr.rel (%p534) target = $region80
        $region79: #{generator_forward.1} parent=59 // pred_region
          %p537 = scmp.lt.s32.totalorder %s26, 2
          %s538 = scalar_select %p537, %s26, 2
          %s539 = smul.addr %s538, 4
          %s540 = scalar_lea.vmem %s4, %s539
        $region80: #{generator_forward.1} parent=59 // pred_fallthru
          _
      $region60: #{generator_forward.1} parent=5 // pred_fallthru
        _
      %p541 = scmp.le.s32.totalorder 1, %s26
      %p542 = scmp.lt.s32.totalorder %s26, 4
      %p543 = pnand %p541, %p542
      %p544 = pneg %p543
      // Predicated region
      $region81: #{generator_forward.1} parent=5 // pred_check
        _
      $region82: #{generator_forward.1} parent=5 // pred_check_branch
        %546 = sbr.rel (%p543) target = $region84
      $region83: #{generator_forward.1} parent=5 // pred_region
        %s547 = ssub.s32 %s26, 1
        // Predicated region
        $region85: #{generator_forward.1} parent=83 // pred_check
          %p548 = pneg %p198
        $region86: #{generator_forward.1} parent=83 // pred_check_branch
          %550 = sbr.rel (%p548) target = $region88
        $region87: #{generator_forward.1} parent=83 // pred_region
          %552 = dma.done [#allocation4], 16384
        $region88: #{generator_forward.1} parent=83 // pred_fallthru
          _
        // Predicated region
        $region89: #{generator_forward.1} parent=83 // pred_check
          %p553 = pneg %p240
        $region90: #{generator_forward.1} parent=83 // pred_check_branch
          %555 = sbr.rel (%p553) target = $region92
        $region91: #{generator_forward.1} parent=83 // pred_region
          %557 = dma.done [#allocation7], 1024
        $region92: #{generator_forward.1} parent=83 // pred_fallthru
          _
        // Predicated region
        $region93: #{generator_forward.1} parent=83 // pred_check
          %p558 = pneg %p282
        $region94: #{generator_forward.1} parent=83 // pred_check_branch
          %560 = sbr.rel (%p558) target = $region96
        $region95: #{generator_forward.1} parent=83 // pred_region
          %562 = dma.done [#allocation7], 16384
        $region96: #{generator_forward.1} parent=83 // pred_fallthru
          _
        // Predicated region
        $region97: #{generator_forward.1} parent=83 // pred_check
          %p563 = pneg %p366
        $region98: #{generator_forward.1} parent=83 // pred_check_branch
          %565 = sbr.rel (%p563) target = $region100
        $region99: #{generator_forward.1} parent=83 // pred_region
          %567 = dma.done [#allocation10], 1024
        $region100: #{generator_forward.1} parent=83 // pred_fallthru
          _
        %p568 = scmp.lt.s32.totalorder %s31, 2
        %s569 = scalar_select %p568, %s31, 2
        %s570 = smul.addr %s569, 8
        %s571 = scalar_lea.vmem %s0, %s570
        %p572 = pneg %p52
        %p573 = pneg %p49
        %p574 = scmp.lt.s32.totalorder %s31, 2
        %s575 = scalar_select %p574, %s31, 2
        %s576 = smul.addr %s575, 2
        %s577 = smul.addr %s576, 4
        %s578 = scalar_lea.vmem %s1, %s577
        %p579 = pneg %p78
        %p580 = pneg %p75
        %p581 = scmp.lt.s32.totalorder %s31, 2
        %s582 = scalar_select %p581, %s31, 2
        %s583 = smul.addr %s582, 2
        %s584 = smul.addr %s583, 4
        %s585 = scalar_lea.vmem %s2, %s584
        %p586 = pneg %p104
        %p587 = pneg %p101
        %p588 = scmp.lt.s32.totalorder %s31, 2
        %s589 = scalar_select %p588, %s31, 2
        %s590 = smul.addr %s589, 4
        %s591 = scalar_lea.vmem %s3, %s590
        %p592 = pneg %p130
        %p593 = pneg %p127
        %p594 = scmp.lt.s32.totalorder %s31, 2
        %s595 = scalar_select %p594, %s31, 2
        %s596 = smul.addr %s595, 4
        %s597 = scalar_lea.vmem %s4, %s596
        %p598 = pneg %p156
        %p599 = pneg %p153
        %p600 = pneg %p177
        %p601 = pneg %p174
        %p602 = pneg %p198
        %p603 = pneg %p195
        %p604 = pneg %p219
        %p605 = pneg %p216
        %p606 = pneg %p240
        %p607 = pneg %p237
        %p608 = pneg %p261
        %p609 = pneg %p258
        %p610 = pneg %p282
        %p611 = pneg %p279
        %p612 = pneg %p303
        %p613 = pneg %p300
        %p614 = pneg %p324
        %p615 = pneg %p321
        %p616 = pneg %p345
        %p617 = pneg %p342
        %p618 = pneg %p366
        %p619 = pneg %p363
        %p620 = pneg %p387
        %p621 = pneg %p384
        %p622 = pneg %p408
        %p623 = pneg %p405
        %p624 = scmp.lt.s32.totalorder %s31, 2
        %s625 = scalar_select %p624, %s31, 2
        %s626 = smul.addr %s625, 8
        %s627 = scalar_lea.vmem %s0, %s626
        %p628 = scmp.lt.s32.totalorder %s31, 2
        %s629 = scalar_select %p628, %s31, 2
        %s630 = smul.addr %s629, 2
        %s631 = smul.addr %s630, 4
        %s632 = scalar_lea.vmem %s1, %s631
        %p633 = scmp.lt.s32.totalorder %s31, 2
        %s634 = scalar_select %p633, %s31, 2
        %s635 = smul.addr %s634, 2
        %s636 = smul.addr %s635, 4
        %s637 = scalar_lea.vmem %s2, %s636
        %p638 = scmp.lt.s32.totalorder %s31, 2
        %s639 = scalar_select %p638, %s31, 2
        %s640 = smul.addr %s639, 4
        %s641 = scalar_lea.vmem %s3, %s640
        %p642 = scmp.lt.s32.totalorder %s31, 2
        %s643 = scalar_select %p642, %s31, 2
        %s644 = smul.addr %s643, 4
        %s645 = scalar_lea.vmem %s4, %s644
        %p647 = scmp.eq.s32.totalorder %s31, 0
        // Predicated region
        $region101: #{generator_forward.1} parent=83 // pred_check
          %p648 = pneg %p647
        $region102: #{generator_forward.1} parent=83 // pred_check_branch
          %650 = sbr.rel (%p648) target = $region104
        $region103: #{generator_forward.1} parent=83 // pred_region
          %651 = vst [vmem:[#allocation2] sm:$0x1] 0.0
        $region104: #{generator_forward.1} parent=83 // pred_fallthru
          _
        %v652 = vld [vmem:[%s632] sm:$0xff]
        %v653 = vld [vmem:[%s5] sm:$0xff]
        %v654 = vld [vmem:[%s5 + $0x8] sm:$0xff]
        %v655 = vld [vmem:[%s5 + $0x10] sm:$0xff]
        %v656 = vld [vmem:[%s5 + $0x18] sm:$0xff]
        %v657 = vld [vmem:[%s5 + $0x20] sm:$0xff]
        %v658 = vld [vmem:[%s5 + $0x28] sm:$0xff]
        %v659 = vld [vmem:[%s5 + $0x30] sm:$0xff]
        %v660 = vld [vmem:[%s5 + $0x38] sm:$0xff]
        %v661 = vld [vmem:[%s5 + $0x40] sm:$0xff]
        %v662 = vld [vmem:[%s5 + $0x48] sm:$0xff]
        %v663 = vld [vmem:[%s5 + $0x50] sm:$0xff]
        %v664 = vld [vmem:[%s5 + $0x58] sm:$0xff]
        %v665 = vld [vmem:[%s5 + $0x60] sm:$0xff]
        %v666 = vld [vmem:[%s5 + $0x68] sm:$0xff]
        %v667 = vld [vmem:[%s5 + $0x70] sm:$0xff]
        %v668 = vld [vmem:[%s5 + $0x78] sm:$0xff]
        %v669 = vld [vmem:[%s5 + $0x80] sm:$0xff]
        %v670 = vld [vmem:[%s5 + $0x88] sm:$0xff]
        %v671 = vld [vmem:[%s5 + $0x90] sm:$0xff]
        %v672 = vld [vmem:[%s5 + $0x98] sm:$0xff]
        %v673 = vld [vmem:[%s5 + $0xa0] sm:$0xff]
        %v674 = vld [vmem:[%s5 + $0xa8] sm:$0xff]
        %v675 = vld [vmem:[%s5 + $0xb0] sm:$0xff]
        %v676 = vld [vmem:[%s5 + $0xb8] sm:$0xff]
        %v677 = vld [vmem:[%s5 + $0xc0] sm:$0xff]
        %v678 = vld [vmem:[%s5 + $0xc8] sm:$0xff]
        %v679 = vld [vmem:[%s5 + $0xd0] sm:$0xff]
        %v680 = vld [vmem:[%s5 + $0xd8] sm:$0xff]
        %v681 = vld [vmem:[%s5 + $0xe0] sm:$0xff]
        %v682 = vld [vmem:[%s5 + $0xe8] sm:$0xff]
        %v683 = vld [vmem:[%s5 + $0xf0] sm:$0xff]
        %v684 = vld [vmem:[%s5 + $0xf8] sm:$0xff]
        %v685 = vld [vmem:[%s5 + $0x100] sm:$0xff]
        %v686 = vld [vmem:[%s5 + $0x108] sm:$0xff]
        %v687 = vld [vmem:[%s5 + $0x110] sm:$0xff]
        %v688 = vld [vmem:[%s5 + $0x118] sm:$0xff]
        %v689 = vld [vmem:[%s5 + $0x120] sm:$0xff]
        %v690 = vld [vmem:[%s5 + $0x128] sm:$0xff]
        %v691 = vld [vmem:[%s5 + $0x130] sm:$0xff]
        %v692 = vld [vmem:[%s5 + $0x138] sm:$0xff]
        %v693 = vld [vmem:[%s5 + $0x140] sm:$0xff]
        %v694 = vld [vmem:[%s5 + $0x148] sm:$0xff]
        %v695 = vld [vmem:[%s5 + $0x150] sm:$0xff]
        %v696 = vld [vmem:[%s5 + $0x158] sm:$0xff]
        %v697 = vld [vmem:[%s5 + $0x160] sm:$0xff]
        %v698 = vld [vmem:[%s5 + $0x168] sm:$0xff]
        %v699 = vld [vmem:[%s5 + $0x170] sm:$0xff]
        %v700 = vld [vmem:[%s5 + $0x178] sm:$0xff]
        %v701 = vld [vmem:[%s5 + $0x180] sm:$0xff]
        %v702 = vld [vmem:[%s5 + $0x188] sm:$0xff]
        %v703 = vld [vmem:[%s5 + $0x190] sm:$0xff]
        %v704 = vld [vmem:[%s5 + $0x198] sm:$0xff]
        %v705 = vld [vmem:[%s5 + $0x1a0] sm:$0xff]
        %v706 = vld [vmem:[%s5 + $0x1a8] sm:$0xff]
        %v707 = vld [vmem:[%s5 + $0x1b0] sm:$0xff]
        %v708 = vld [vmem:[%s5 + $0x1b8] sm:$0xff]
        %v709 = vld [vmem:[%s5 + $0x1c0] sm:$0xff]
        %v710 = vld [vmem:[%s5 + $0x1c8] sm:$0xff]
        %v711 = vld [vmem:[%s5 + $0x1d0] sm:$0xff]
        %v712 = vld [vmem:[%s5 + $0x1d8] sm:$0xff]
        %v713 = vld [vmem:[%s5 + $0x1e0] sm:$0xff]
        %v714 = vld [vmem:[%s5 + $0x1e8] sm:$0xff]
        %v715 = vld [vmem:[%s5 + $0x1f0] sm:$0xff]
        %v716 = vld [vmem:[%s5 + $0x1f8] sm:$0xff]
        %v717 = vld [vmem:[%s5 + $0x200] sm:$0xff]
        %v718 = vld [vmem:[%s5 + $0x208] sm:$0xff]
        %v719 = vld [vmem:[%s5 + $0x210] sm:$0xff]
        %v720 = vld [vmem:[%s5 + $0x218] sm:$0xff]
        %v721 = vld [vmem:[%s5 + $0x220] sm:$0xff]
        %v722 = vld [vmem:[%s5 + $0x228] sm:$0xff]
        %v723 = vld [vmem:[%s5 + $0x230] sm:$0xff]
        %v724 = vld [vmem:[%s5 + $0x238] sm:$0xff]
        %v725 = vld [vmem:[%s5 + $0x240] sm:$0xff]
        %v726 = vld [vmem:[%s5 + $0x248] sm:$0xff]
        %v727 = vld [vmem:[%s5 + $0x250] sm:$0xff]
        %v728 = vld [vmem:[%s5 + $0x258] sm:$0xff]
        %v729 = vld [vmem:[%s5 + $0x260] sm:$0xff]
        %v730 = vld [vmem:[%s5 + $0x268] sm:$0xff]
        %v731 = vld [vmem:[%s5 + $0x270] sm:$0xff]
        %v732 = vld [vmem:[%s5 + $0x278] sm:$0xff]
        %v733 = vld [vmem:[%s5 + $0x280] sm:$0xff]
        %v734 = vld [vmem:[%s5 + $0x288] sm:$0xff]
        %v735 = vld [vmem:[%s5 + $0x290] sm:$0xff]
        %v736 = vld [vmem:[%s5 + $0x298] sm:$0xff]
        %v737 = vld [vmem:[%s5 + $0x2a0] sm:$0xff]
        %v738 = vld [vmem:[%s5 + $0x2a8] sm:$0xff]
        %v739 = vld [vmem:[%s5 + $0x2b0] sm:$0xff]
        %v740 = vld [vmem:[%s5 + $0x2b8] sm:$0xff]
        %v741 = vld [vmem:[%s5 + $0x2c0] sm:$0xff]
        %v742 = vld [vmem:[%s5 + $0x2c8] sm:$0xff]
        %v743 = vld [vmem:[%s5 + $0x2d0] sm:$0xff]
        %v744 = vld [vmem:[%s5 + $0x2d8] sm:$0xff]
        %v745 = vld [vmem:[%s5 + $0x2e0] sm:$0xff]
        %v746 = vld [vmem:[%s5 + $0x2e8] sm:$0xff]
        %v747 = vld [vmem:[%s5 + $0x2f0] sm:$0xff]
        %v748 = vld [vmem:[%s5 + $0x2f8] sm:$0xff]
        %v749 = vld [vmem:[%s5 + $0x300] sm:$0xff]
        %v750 = vld [vmem:[%s5 + $0x308] sm:$0xff]
        %v751 = vld [vmem:[%s5 + $0x310] sm:$0xff]
        %v752 = vld [vmem:[%s5 + $0x318] sm:$0xff]
        %v753 = vld [vmem:[%s5 + $0x320] sm:$0xff]
        %v754 = vld [vmem:[%s5 + $0x328] sm:$0xff]
        %v755 = vld [vmem:[%s5 + $0x330] sm:$0xff]
        %v756 = vld [vmem:[%s5 + $0x338] sm:$0xff]
        %v757 = vld [vmem:[%s5 + $0x340] sm:$0xff]
        %v758 = vld [vmem:[%s5 + $0x348] sm:$0xff]
        %v759 = vld [vmem:[%s5 + $0x350] sm:$0xff]
        %v760 = vld [vmem:[%s5 + $0x358] sm:$0xff]
        %v761 = vld [vmem:[%s5 + $0x360] sm:$0xff]
        %v762 = vld [vmem:[%s5 + $0x368] sm:$0xff]
        %v763 = vld [vmem:[%s5 + $0x370] sm:$0xff]
        %v764 = vld [vmem:[%s5 + $0x378] sm:$0xff]
        %v765 = vld [vmem:[%s5 + $0x380] sm:$0xff]
        %v766 = vld [vmem:[%s5 + $0x388] sm:$0xff]
        %v767 = vld [vmem:[%s5 + $0x390] sm:$0xff]
        %v768 = vld [vmem:[%s5 + $0x398] sm:$0xff]
        %v769 = vld [vmem:[%s5 + $0x3a0] sm:$0xff]
        %v770 = vld [vmem:[%s5 + $0x3a8] sm:$0xff]
        %v771 = vld [vmem:[%s5 + $0x3b0] sm:$0xff]
        %v772 = vld [vmem:[%s5 + $0x3b8] sm:$0xff]
        %v773 = vld [vmem:[%s5 + $0x3c0] sm:$0xff]
        %v774 = vld [vmem:[%s5 + $0x3c8] sm:$0xff]
        %v775 = vld [vmem:[%s5 + $0x3d0] sm:$0xff]
        %v776 = vld [vmem:[%s5 + $0x3d8] sm:$0xff]
        %v777 = vld [vmem:[%s5 + $0x3e0] sm:$0xff]
        %v778 = vld [vmem:[%s5 + $0x3e8] sm:$0xff]
        %v779 = vld [vmem:[%s5 + $0x3f0] sm:$0xff]
        %v780 = vld [vmem:[%s5 + $0x3f8] sm:$0xff]
        %v781 = vld [vmem:[%s637] sm:$0xff]
        %v782 = vld [vmem:[#allocation3] sm:$0xff]
        %v783 = vld [vmem:[#allocation3 + $0x8] sm:$0xff]
        %v784 = vld [vmem:[#allocation3 + $0x10] sm:$0xff]
        %v785 = vld [vmem:[#allocation3 + $0x18] sm:$0xff]
        %v786 = vld [vmem:[#allocation3 + $0x20] sm:$0xff]
        %v787 = vld [vmem:[#allocation3 + $0x28] sm:$0xff]
        %v788 = vld [vmem:[#allocation3 + $0x30] sm:$0xff]
        %v789 = vld [vmem:[#allocation3 + $0x38] sm:$0xff]
        %v790 = vld [vmem:[#allocation3 + $0x40] sm:$0xff]
        %v791 = vld [vmem:[#allocation3 + $0x48] sm:$0xff]
        %v792 = vld [vmem:[#allocation3 + $0x50] sm:$0xff]
        %v793 = vld [vmem:[#allocation3 + $0x58] sm:$0xff]
        %v794 = vld [vmem:[#allocation3 + $0x60] sm:$0xff]
        %v795 = vld [vmem:[#allocation3 + $0x68] sm:$0xff]
        %v796 = vld [vmem:[#allocation3 + $0x70] sm:$0xff]
        %v797 = vld [vmem:[#allocation3 + $0x78] sm:$0xff]
        %v798 = vld [vmem:[#allocation3 + $0x80] sm:$0xff]
        %v799 = vld [vmem:[#allocation3 + $0x88] sm:$0xff]
        %v800 = vld [vmem:[#allocation3 + $0x90] sm:$0xff]
        %v801 = vld [vmem:[#allocation3 + $0x98] sm:$0xff]
        %v802 = vld [vmem:[#allocation3 + $0xa0] sm:$0xff]
        %v803 = vld [vmem:[#allocation3 + $0xa8] sm:$0xff]
        %v804 = vld [vmem:[#allocation3 + $0xb0] sm:$0xff]
        %v805 = vld [vmem:[#allocation3 + $0xb8] sm:$0xff]
        %v806 = vld [vmem:[#allocation3 + $0xc0] sm:$0xff]
        %v807 = vld [vmem:[#allocation3 + $0xc8] sm:$0xff]
        %v808 = vld [vmem:[#allocation3 + $0xd0] sm:$0xff]
        %v809 = vld [vmem:[#allocation3 + $0xd8] sm:$0xff]
        %v810 = vld [vmem:[#allocation3 + $0xe0] sm:$0xff]
        %v811 = vld [vmem:[#allocation3 + $0xe8] sm:$0xff]
        %v812 = vld [vmem:[#allocation3 + $0xf0] sm:$0xff]
        %v813 = vld [vmem:[#allocation3 + $0xf8] sm:$0xff]
        %v814 = vld [vmem:[#allocation3 + $0x100] sm:$0xff]
        %v815 = vld [vmem:[#allocation3 + $0x108] sm:$0xff]
        %v816 = vld [vmem:[#allocation3 + $0x110] sm:$0xff]
        %v817 = vld [vmem:[#allocation3 + $0x118] sm:$0xff]
        %v818 = vld [vmem:[#allocation3 + $0x120] sm:$0xff]
        %v819 = vld [vmem:[#allocation3 + $0x128] sm:$0xff]
        %v820 = vld [vmem:[#allocation3 + $0x130] sm:$0xff]
        %v821 = vld [vmem:[#allocation3 + $0x138] sm:$0xff]
        %v822 = vld [vmem:[#allocation3 + $0x140] sm:$0xff]
        %v823 = vld [vmem:[#allocation3 + $0x148] sm:$0xff]
        %v824 = vld [vmem:[#allocation3 + $0x150] sm:$0xff]
        %v825 = vld [vmem:[#allocation3 + $0x158] sm:$0xff]
        %v826 = vld [vmem:[#allocation3 + $0x160] sm:$0xff]
        %v827 = vld [vmem:[#allocation3 + $0x168] sm:$0xff]
        %v828 = vld [vmem:[#allocation3 + $0x170] sm:$0xff]
        %v829 = vld [vmem:[#allocation3 + $0x178] sm:$0xff]
        %v830 = vld [vmem:[#allocation3 + $0x180] sm:$0xff]
        %v831 = vld [vmem:[#allocation3 + $0x188] sm:$0xff]
        %v832 = vld [vmem:[#allocation3 + $0x190] sm:$0xff]
        %v833 = vld [vmem:[#allocation3 + $0x198] sm:$0xff]
        %v834 = vld [vmem:[#allocation3 + $0x1a0] sm:$0xff]
        %v835 = vld [vmem:[#allocation3 + $0x1a8] sm:$0xff]
        %v836 = vld [vmem:[#allocation3 + $0x1b0] sm:$0xff]
        %v837 = vld [vmem:[#allocation3 + $0x1b8] sm:$0xff]
        %v838 = vld [vmem:[#allocation3 + $0x1c0] sm:$0xff]
        %v839 = vld [vmem:[#allocation3 + $0x1c8] sm:$0xff]
        %v840 = vld [vmem:[#allocation3 + $0x1d0] sm:$0xff]
        %v841 = vld [vmem:[#allocation3 + $0x1d8] sm:$0xff]
        %v842 = vld [vmem:[#allocation3 + $0x1e0] sm:$0xff]
        %v843 = vld [vmem:[#allocation3 + $0x1e8] sm:$0xff]
        %v844 = vld [vmem:[#allocation3 + $0x1f0] sm:$0xff]
        %v845 = vld [vmem:[#allocation3 + $0x1f8] sm:$0xff]
        %v846 = vld [vmem:[#allocation3 + $0x200] sm:$0xff]
        %v847 = vld [vmem:[#allocation3 + $0x208] sm:$0xff]
        %v848 = vld [vmem:[#allocation3 + $0x210] sm:$0xff]
        %v849 = vld [vmem:[#allocation3 + $0x218] sm:$0xff]
        %v850 = vld [vmem:[#allocation3 + $0x220] sm:$0xff]
        %v851 = vld [vmem:[#allocation3 + $0x228] sm:$0xff]
        %v852 = vld [vmem:[#allocation3 + $0x230] sm:$0xff]
        %v853 = vld [vmem:[#allocation3 + $0x238] sm:$0xff]
        %v854 = vld [vmem:[#allocation3 + $0x240] sm:$0xff]
        %v855 = vld [vmem:[#allocation3 + $0x248] sm:$0xff]
        %v856 = vld [vmem:[#allocation3 + $0x250] sm:$0xff]
        %v857 = vld [vmem:[#allocation3 + $0x258] sm:$0xff]
        %v858 = vld [vmem:[#allocation3 + $0x260] sm:$0xff]
        %v859 = vld [vmem:[#allocation3 + $0x268] sm:$0xff]
        %v860 = vld [vmem:[#allocation3 + $0x270] sm:$0xff]
        %v861 = vld [vmem:[#allocation3 + $0x278] sm:$0xff]
        %v862 = vld [vmem:[#allocation3 + $0x280] sm:$0xff]
        %v863 = vld [vmem:[#allocation3 + $0x288] sm:$0xff]
        %v864 = vld [vmem:[#allocation3 + $0x290] sm:$0xff]
        %v865 = vld [vmem:[#allocation3 + $0x298] sm:$0xff]
        %v866 = vld [vmem:[#allocation3 + $0x2a0] sm:$0xff]
        %v867 = vld [vmem:[#allocation3 + $0x2a8] sm:$0xff]
        %v868 = vld [vmem:[#allocation3 + $0x2b0] sm:$0xff]
        %v869 = vld [vmem:[#allocation3 + $0x2b8] sm:$0xff]
        %v870 = vld [vmem:[#allocation3 + $0x2c0] sm:$0xff]
        %v871 = vld [vmem:[#allocation3 + $0x2c8] sm:$0xff]
        %v872 = vld [vmem:[#allocation3 + $0x2d0] sm:$0xff]
        %v873 = vld [vmem:[#allocation3 + $0x2d8] sm:$0xff]
        %v874 = vld [vmem:[#allocation3 + $0x2e0] sm:$0xff]
        %v875 = vld [vmem:[#allocation3 + $0x2e8] sm:$0xff]
        %v876 = vld [vmem:[#allocation3 + $0x2f0] sm:$0xff]
        %v877 = vld [vmem:[#allocation3 + $0x2f8] sm:$0xff]
        %v878 = vld [vmem:[#allocation3 + $0x300] sm:$0xff]
        %v879 = vld [vmem:[#allocation3 + $0x308] sm:$0xff]
        %v880 = vld [vmem:[#allocation3 + $0x310] sm:$0xff]
        %v881 = vld [vmem:[#allocation3 + $0x318] sm:$0xff]
        %v882 = vld [vmem:[#allocation3 + $0x320] sm:$0xff]
        %v883 = vld [vmem:[#allocation3 + $0x328] sm:$0xff]
        %v884 = vld [vmem:[#allocation3 + $0x330] sm:$0xff]
        %v885 = vld [vmem:[#allocation3 + $0x338] sm:$0xff]
        %v886 = vld [vmem:[#allocation3 + $0x340] sm:$0xff]
        %v887 = vld [vmem:[#allocation3 + $0x348] sm:$0xff]
        %v888 = vld [vmem:[#allocation3 + $0x350] sm:$0xff]
        %v889 = vld [vmem:[#allocation3 + $0x358] sm:$0xff]
        %v890 = vld [vmem:[#allocation3 + $0x360] sm:$0xff]
        %v891 = vld [vmem:[#allocation3 + $0x368] sm:$0xff]
        %v892 = vld [vmem:[#allocation3 + $0x370] sm:$0xff]
        %v893 = vld [vmem:[#allocation3 + $0x378] sm:$0xff]
        %v894 = vld [vmem:[#allocation3 + $0x380] sm:$0xff]
        %v895 = vld [vmem:[#allocation3 + $0x388] sm:$0xff]
        %v896 = vld [vmem:[#allocation3 + $0x390] sm:$0xff]
        %v897 = vld [vmem:[#allocation3 + $0x398] sm:$0xff]
        %v898 = vld [vmem:[#allocation3 + $0x3a0] sm:$0xff]
        %v899 = vld [vmem:[#allocation3 + $0x3a8] sm:$0xff]
        %v900 = vld [vmem:[#allocation3 + $0x3b0] sm:$0xff]
        %v901 = vld [vmem:[#allocation3 + $0x3b8] sm:$0xff]
        %v902 = vld [vmem:[#allocation3 + $0x3c0] sm:$0xff]
        %v903 = vld [vmem:[#allocation3 + $0x3c8] sm:$0xff]
        %v904 = vld [vmem:[#allocation3 + $0x3d0] sm:$0xff]
        %v905 = vld [vmem:[#allocation3 + $0x3d8] sm:$0xff]
        %v906 = vld [vmem:[#allocation3 + $0x3e0] sm:$0xff]
        %v907 = vld [vmem:[#allocation3 + $0x3e8] sm:$0xff]
        %v908 = vld [vmem:[#allocation3 + $0x3f0] sm:$0xff]
        %v909 = vld [vmem:[#allocation3 + $0x3f8] sm:$0xff]
        %v911 = vunpack.c.l.b16 %v781
        %v912 = vunpack.c.h.b16 %v781
        %v913 = vpack.c.b16 %v911, %v911
        %v914 = vpack.c.b16 %v912, %v912
        %v1045 = vunpack.c.l.b16 %v782
        %v1046 = vunpack.c.h.b16 %v782
        %v1047 = vunpack.c.l.b16 %v783
        %v1048 = vunpack.c.h.b16 %v783
        %v1049 = vunpack.c.l.b16 %v784
        %v1050 = vunpack.c.h.b16 %v784
        %v1051 = vunpack.c.l.b16 %v785
        %v1052 = vunpack.c.h.b16 %v785
        %v1053 = vunpack.c.l.b16 %v786
        %v1054 = vunpack.c.h.b16 %v786
        %v1055 = vunpack.c.l.b16 %v787
        %v1056 = vunpack.c.h.b16 %v787
        %v1057 = vunpack.c.l.b16 %v788
        %v1058 = vunpack.c.h.b16 %v788
        %v1059 = vunpack.c.l.b16 %v789
        %v1060 = vunpack.c.h.b16 %v789
        %v1061 = vunpack.c.l.b16 %v790
        %v1062 = vunpack.c.h.b16 %v790
        %v1063 = vunpack.c.l.b16 %v791
        %v1064 = vunpack.c.h.b16 %v791
        %v1065 = vunpack.c.l.b16 %v792
        %v1066 = vunpack.c.h.b16 %v792
        %v1067 = vunpack.c.l.b16 %v793
        %v1068 = vunpack.c.h.b16 %v793
        %v1069 = vunpack.c.l.b16 %v794
        %v1070 = vunpack.c.h.b16 %v794
        %v1071 = vunpack.c.l.b16 %v795
        %v1072 = vunpack.c.h.b16 %v795
        %v1073 = vunpack.c.l.b16 %v796
        %v1074 = vunpack.c.h.b16 %v796
        %v1075 = vunpack.c.l.b16 %v797
        %v1076 = vunpack.c.h.b16 %v797
        %v1077 = vunpack.c.l.b16 %v798
        %v1078 = vunpack.c.h.b16 %v798
        %v1079 = vunpack.c.l.b16 %v799
        %v1080 = vunpack.c.h.b16 %v799
        %v1081 = vunpack.c.l.b16 %v800
        %v1082 = vunpack.c.h.b16 %v800
        %v1083 = vunpack.c.l.b16 %v801
        %v1084 = vunpack.c.h.b16 %v801
        %v1085 = vunpack.c.l.b16 %v802
        %v1086 = vunpack.c.h.b16 %v802
        %v1087 = vunpack.c.l.b16 %v803
        %v1088 = vunpack.c.h.b16 %v803
        %v1089 = vunpack.c.l.b16 %v804
        %v1090 = vunpack.c.h.b16 %v804
        %v1091 = vunpack.c.l.b16 %v805
        %v1092 = vunpack.c.h.b16 %v805
        %v1093 = vunpack.c.l.b16 %v806
        %v1094 = vunpack.c.h.b16 %v806
        %v1095 = vunpack.c.l.b16 %v807
        %v1096 = vunpack.c.h.b16 %v807
        %v1097 = vunpack.c.l.b16 %v808
        %v1098 = vunpack.c.h.b16 %v808
        %v1099 = vunpack.c.l.b16 %v809
        %v1100 = vunpack.c.h.b16 %v809
        %v1101 = vunpack.c.l.b16 %v810
        %v1102 = vunpack.c.h.b16 %v810
        %v1103 = vunpack.c.l.b16 %v811
        %v1104 = vunpack.c.h.b16 %v811
        %v1105 = vunpack.c.l.b16 %v812
        %v1106 = vunpack.c.h.b16 %v812
        %v1107 = vunpack.c.l.b16 %v813
        %v1108 = vunpack.c.h.b16 %v813
        %v1109 = vunpack.c.l.b16 %v814
        %v1110 = vunpack.c.h.b16 %v814
        %v1111 = vunpack.c.l.b16 %v815
        %v1112 = vunpack.c.h.b16 %v815
        %v1113 = vunpack.c.l.b16 %v816
        %v1114 = vunpack.c.h.b16 %v816
        %v1115 = vunpack.c.l.b16 %v817
        %v1116 = vunpack.c.h.b16 %v817
        %v1117 = vunpack.c.l.b16 %v818
        %v1118 = vunpack.c.h.b16 %v818
        %v1119 = vunpack.c.l.b16 %v819
        %v1120 = vunpack.c.h.b16 %v819
        %v1121 = vunpack.c.l.b16 %v820
        %v1122 = vunpack.c.h.b16 %v820
        %v1123 = vunpack.c.l.b16 %v821
        %v1124 = vunpack.c.h.b16 %v821
        %v1125 = vunpack.c.l.b16 %v822
        %v1126 = vunpack.c.h.b16 %v822
        %v1127 = vunpack.c.l.b16 %v823
        %v1128 = vunpack.c.h.b16 %v823
        %v1129 = vunpack.c.l.b16 %v824
        %v1130 = vunpack.c.h.b16 %v824
        %v1131 = vunpack.c.l.b16 %v825
        %v1132 = vunpack.c.h.b16 %v825
        %v1133 = vunpack.c.l.b16 %v826
        %v1134 = vunpack.c.h.b16 %v826
        %v1135 = vunpack.c.l.b16 %v827
        %v1136 = vunpack.c.h.b16 %v827
        %v1137 = vunpack.c.l.b16 %v828
        %v1138 = vunpack.c.h.b16 %v828
        %v1139 = vunpack.c.l.b16 %v829
        %v1140 = vunpack.c.h.b16 %v829
        %v1141 = vunpack.c.l.b16 %v830
        %v1142 = vunpack.c.h.b16 %v830
        %v1143 = vunpack.c.l.b16 %v831
        %v1144 = vunpack.c.h.b16 %v831
        %v1145 = vunpack.c.l.b16 %v832
        %v1146 = vunpack.c.h.b16 %v832
        %v1147 = vunpack.c.l.b16 %v833
        %v1148 = vunpack.c.h.b16 %v833
        %v1149 = vunpack.c.l.b16 %v834
        %v1150 = vunpack.c.h.b16 %v834
        %v1151 = vunpack.c.l.b16 %v835
        %v1152 = vunpack.c.h.b16 %v835
        %v1153 = vunpack.c.l.b16 %v836
        %v1154 = vunpack.c.h.b16 %v836
        %v1155 = vunpack.c.l.b16 %v837
        %v1156 = vunpack.c.h.b16 %v837
        %v1157 = vunpack.c.l.b16 %v838
        %v1158 = vunpack.c.h.b16 %v838
        %v1159 = vunpack.c.l.b16 %v839
        %v1160 = vunpack.c.h.b16 %v839
        %v1161 = vunpack.c.l.b16 %v840
        %v1162 = vunpack.c.h.b16 %v840
        %v1163 = vunpack.c.l.b16 %v841
        %v1164 = vunpack.c.h.b16 %v841
        %v1165 = vunpack.c.l.b16 %v842
        %v1166 = vunpack.c.h.b16 %v842
        %v1167 = vunpack.c.l.b16 %v843
        %v1168 = vunpack.c.h.b16 %v843
        %v1169 = vunpack.c.l.b16 %v844
        %v1170 = vunpack.c.h.b16 %v844
        %v1171 = vunpack.c.l.b16 %v845
        %v1172 = vunpack.c.h.b16 %v845
        %v1173 = vunpack.c.l.b16 %v846
        %v1174 = vunpack.c.h.b16 %v846
        %v1175 = vunpack.c.l.b16 %v847
        %v1176 = vunpack.c.h.b16 %v847
        %v1177 = vunpack.c.l.b16 %v848
        %v1178 = vunpack.c.h.b16 %v848
        %v1179 = vunpack.c.l.b16 %v849
        %v1180 = vunpack.c.h.b16 %v849
        %v1181 = vunpack.c.l.b16 %v850
        %v1182 = vunpack.c.h.b16 %v850
        %v1183 = vunpack.c.l.b16 %v851
        %v1184 = vunpack.c.h.b16 %v851
        %v1185 = vunpack.c.l.b16 %v852
        %v1186 = vunpack.c.h.b16 %v852
        %v1187 = vunpack.c.l.b16 %v853
        %v1188 = vunpack.c.h.b16 %v853
        %v1189 = vunpack.c.l.b16 %v854
        %v1190 = vunpack.c.h.b16 %v854
        %v1191 = vunpack.c.l.b16 %v855
        %v1192 = vunpack.c.h.b16 %v855
        %v1193 = vunpack.c.l.b16 %v856
        %v1194 = vunpack.c.h.b16 %v856
        %v1195 = vunpack.c.l.b16 %v857
        %v1196 = vunpack.c.h.b16 %v857
        %v1197 = vunpack.c.l.b16 %v858
        %v1198 = vunpack.c.h.b16 %v858
        %v1199 = vunpack.c.l.b16 %v859
        %v1200 = vunpack.c.h.b16 %v859
        %v1201 = vunpack.c.l.b16 %v860
        %v1202 = vunpack.c.h.b16 %v860
        %v1203 = vunpack.c.l.b16 %v861
        %v1204 = vunpack.c.h.b16 %v861
        %v1205 = vunpack.c.l.b16 %v862
        %v1206 = vunpack.c.h.b16 %v862
        %v1207 = vunpack.c.l.b16 %v863
        %v1208 = vunpack.c.h.b16 %v863
        %v1209 = vunpack.c.l.b16 %v864
        %v1210 = vunpack.c.h.b16 %v864
        %v1211 = vunpack.c.l.b16 %v865
        %v1212 = vunpack.c.h.b16 %v865
        %v1213 = vunpack.c.l.b16 %v866
        %v1214 = vunpack.c.h.b16 %v866
        %v1215 = vunpack.c.l.b16 %v867
        %v1216 = vunpack.c.h.b16 %v867
        %v1217 = vunpack.c.l.b16 %v868
        %v1218 = vunpack.c.h.b16 %v868
        %v1219 = vunpack.c.l.b16 %v869
        %v1220 = vunpack.c.h.b16 %v869
        %v1221 = vunpack.c.l.b16 %v870
        %v1222 = vunpack.c.h.b16 %v870
        %v1223 = vunpack.c.l.b16 %v871
        %v1224 = vunpack.c.h.b16 %v871
        %v1225 = vunpack.c.l.b16 %v872
        %v1226 = vunpack.c.h.b16 %v872
        %v1227 = vunpack.c.l.b16 %v873
        %v1228 = vunpack.c.h.b16 %v873
        %v1229 = vunpack.c.l.b16 %v874
        %v1230 = vunpack.c.h.b16 %v874
        %v1231 = vunpack.c.l.b16 %v875
        %v1232 = vunpack.c.h.b16 %v875
        %v1233 = vunpack.c.l.b16 %v876
        %v1234 = vunpack.c.h.b16 %v876
        %v1235 = vunpack.c.l.b16 %v877
        %v1236 = vunpack.c.h.b16 %v877
        %v1237 = vunpack.c.l.b16 %v878
        %v1238 = vunpack.c.h.b16 %v878
        %v1239 = vunpack.c.l.b16 %v879
        %v1240 = vunpack.c.h.b16 %v879
        %v1241 = vunpack.c.l.b16 %v880
        %v1242 = vunpack.c.h.b16 %v880
        %v1243 = vunpack.c.l.b16 %v881
        %v1244 = vunpack.c.h.b16 %v881
        %v1245 = vunpack.c.l.b16 %v882
        %v1246 = vunpack.c.h.b16 %v882
        %v1247 = vunpack.c.l.b16 %v883
        %v1248 = vunpack.c.h.b16 %v883
        %v1249 = vunpack.c.l.b16 %v884
        %v1250 = vunpack.c.h.b16 %v884
        %v1251 = vunpack.c.l.b16 %v885
        %v1252 = vunpack.c.h.b16 %v885
        %v1253 = vunpack.c.l.b16 %v886
        %v1254 = vunpack.c.h.b16 %v886
        %v1255 = vunpack.c.l.b16 %v887
        %v1256 = vunpack.c.h.b16 %v887
        %v1257 = vunpack.c.l.b16 %v888
        %v1258 = vunpack.c.h.b16 %v888
        %v1259 = vunpack.c.l.b16 %v889
        %v1260 = vunpack.c.h.b16 %v889
        %v1261 = vunpack.c.l.b16 %v890
        %v1262 = vunpack.c.h.b16 %v890
        %v1263 = vunpack.c.l.b16 %v891
        %v1264 = vunpack.c.h.b16 %v891
        %v1265 = vunpack.c.l.b16 %v892
        %v1266 = vunpack.c.h.b16 %v892
        %v1267 = vunpack.c.l.b16 %v893
        %v1268 = vunpack.c.h.b16 %v893
        %v1269 = vunpack.c.l.b16 %v894
        %v1270 = vunpack.c.h.b16 %v894
        %v1271 = vunpack.c.l.b16 %v895
        %v1272 = vunpack.c.h.b16 %v895
        %v1273 = vunpack.c.l.b16 %v896
        %v1274 = vunpack.c.h.b16 %v896
        %v1275 = vunpack.c.l.b16 %v897
        %v1276 = vunpack.c.h.b16 %v897
        %v1277 = vunpack.c.l.b16 %v898
        %v1278 = vunpack.c.h.b16 %v898
        %v1279 = vunpack.c.l.b16 %v899
        %v1280 = vunpack.c.h.b16 %v899
        %v1281 = vunpack.c.l.b16 %v900
        %v1282 = vunpack.c.h.b16 %v900
        %v1283 = vunpack.c.l.b16 %v901
        %v1284 = vunpack.c.h.b16 %v901
        %v1285 = vunpack.c.l.b16 %v902
        %v1286 = vunpack.c.h.b16 %v902
        %v1287 = vunpack.c.l.b16 %v903
        %v1288 = vunpack.c.h.b16 %v903
        %v1289 = vunpack.c.l.b16 %v904
        %v1290 = vunpack.c.h.b16 %v904
        %v1291 = vunpack.c.l.b16 %v905
        %v1292 = vunpack.c.h.b16 %v905
        %v1293 = vunpack.c.l.b16 %v906
        %v1294 = vunpack.c.h.b16 %v906
        %v1295 = vunpack.c.l.b16 %v907
        %v1296 = vunpack.c.h.b16 %v907
        %v1297 = vunpack.c.l.b16 %v908
        %v1298 = vunpack.c.h.b16 %v908
        %v1299 = vunpack.c.l.b16 %v909
        %v1300 = vunpack.c.h.b16 %v909
        %v1301 = vpack.c.b16 %v1053, %v1045
        %v1302 = vpack.c.b16 %v1054, %v1046
        %v1303 = vpack.c.b16 %v1055, %v1047
        %v1304 = vpack.c.b16 %v1056, %v1048
        %v1305 = vpack.c.b16 %v1057, %v1049
        %v1306 = vpack.c.b16 %v1058, %v1050
        %v1307 = vpack.c.b16 %v1059, %v1051
        %v1308 = vpack.c.b16 %v1060, %v1052
        %v1309 = vpack.c.b16 %v1069, %v1061
        %v1310 = vpack.c.b16 %v1070, %v1062
        %v1311 = vpack.c.b16 %v1071, %v1063
        %v1312 = vpack.c.b16 %v1072, %v1064
        %v1313 = vpack.c.b16 %v1073, %v1065
        %v1314 = vpack.c.b16 %v1074, %v1066
        %v1315 = vpack.c.b16 %v1075, %v1067
        %v1316 = vpack.c.b16 %v1076, %v1068
        %v1317 = vpack.c.b16 %v1085, %v1077
        %v1318 = vpack.c.b16 %v1086, %v1078
        %v1319 = vpack.c.b16 %v1087, %v1079
        %v1320 = vpack.c.b16 %v1088, %v1080
        %v1321 = vpack.c.b16 %v1089, %v1081
        %v1322 = vpack.c.b16 %v1090, %v1082
        %v1323 = vpack.c.b16 %v1091, %v1083
        %v1324 = vpack.c.b16 %v1092, %v1084
        %v1325 = vpack.c.b16 %v1101, %v1093
        %v1326 = vpack.c.b16 %v1102, %v1094
        %v1327 = vpack.c.b16 %v1103, %v1095
        %v1328 = vpack.c.b16 %v1104, %v1096
        %v1329 = vpack.c.b16 %v1105, %v1097
        %v1330 = vpack.c.b16 %v1106, %v1098
        %v1331 = vpack.c.b16 %v1107, %v1099
        %v1332 = vpack.c.b16 %v1108, %v1100
        %v1333 = vpack.c.b16 %v1117, %v1109
        %v1334 = vpack.c.b16 %v1118, %v1110
        %v1335 = vpack.c.b16 %v1119, %v1111
        %v1336 = vpack.c.b16 %v1120, %v1112
        %v1337 = vpack.c.b16 %v1121, %v1113
        %v1338 = vpack.c.b16 %v1122, %v1114
        %v1339 = vpack.c.b16 %v1123, %v1115
        %v1340 = vpack.c.b16 %v1124, %v1116
        %v1341 = vpack.c.b16 %v1133, %v1125
        %v1342 = vpack.c.b16 %v1134, %v1126
        %v1343 = vpack.c.b16 %v1135, %v1127
        %v1344 = vpack.c.b16 %v1136, %v1128
        %v1345 = vpack.c.b16 %v1137, %v1129
        %v1346 = vpack.c.b16 %v1138, %v1130
        %v1347 = vpack.c.b16 %v1139, %v1131
        %v1348 = vpack.c.b16 %v1140, %v1132
        %v1349 = vpack.c.b16 %v1149, %v1141
        %v1350 = vpack.c.b16 %v1150, %v1142
        %v1351 = vpack.c.b16 %v1151, %v1143
        %v1352 = vpack.c.b16 %v1152, %v1144
        %v1353 = vpack.c.b16 %v1153, %v1145
        %v1354 = vpack.c.b16 %v1154, %v1146
        %v1355 = vpack.c.b16 %v1155, %v1147
        %v1356 = vpack.c.b16 %v1156, %v1148
        %v1357 = vpack.c.b16 %v1165, %v1157
        %v1358 = vpack.c.b16 %v1166, %v1158
        %v1359 = vpack.c.b16 %v1167, %v1159
        %v1360 = vpack.c.b16 %v1168, %v1160
        %v1361 = vpack.c.b16 %v1169, %v1161
        %v1362 = vpack.c.b16 %v1170, %v1162
        %v1363 = vpack.c.b16 %v1171, %v1163
        %v1364 = vpack.c.b16 %v1172, %v1164
        %v1365 = vpack.c.b16 %v1181, %v1173
        %v1366 = vpack.c.b16 %v1182, %v1174
        %v1367 = vpack.c.b16 %v1183, %v1175
        %v1368 = vpack.c.b16 %v1184, %v1176
        %v1369 = vpack.c.b16 %v1185, %v1177
        %v1370 = vpack.c.b16 %v1186, %v1178
        %v1371 = vpack.c.b16 %v1187, %v1179
        %v1372 = vpack.c.b16 %v1188, %v1180
        %v1373 = vpack.c.b16 %v1197, %v1189
        %v1374 = vpack.c.b16 %v1198, %v1190
        %v1375 = vpack.c.b16 %v1199, %v1191
        %v1376 = vpack.c.b16 %v1200, %v1192
        %v1377 = vpack.c.b16 %v1201, %v1193
        %v1378 = vpack.c.b16 %v1202, %v1194
        %v1379 = vpack.c.b16 %v1203, %v1195
        %v1380 = vpack.c.b16 %v1204, %v1196
        %v1381 = vpack.c.b16 %v1213, %v1205
        %v1382 = vpack.c.b16 %v1214, %v1206
        %v1383 = vpack.c.b16 %v1215, %v1207
        %v1384 = vpack.c.b16 %v1216, %v1208
        %v1385 = vpack.c.b16 %v1217, %v1209
        %v1386 = vpack.c.b16 %v1218, %v1210
        %v1387 = vpack.c.b16 %v1219, %v1211
        %v1388 = vpack.c.b16 %v1220, %v1212
        %v1389 = vpack.c.b16 %v1229, %v1221
        %v1390 = vpack.c.b16 %v1230, %v1222
        %v1391 = vpack.c.b16 %v1231, %v1223
        %v1392 = vpack.c.b16 %v1232, %v1224
        %v1393 = vpack.c.b16 %v1233, %v1225
        %v1394 = vpack.c.b16 %v1234, %v1226
        %v1395 = vpack.c.b16 %v1235, %v1227
        %v1396 = vpack.c.b16 %v1236, %v1228
        %v1397 = vpack.c.b16 %v1245, %v1237
        %v1398 = vpack.c.b16 %v1246, %v1238
        %v1399 = vpack.c.b16 %v1247, %v1239
        %v1400 = vpack.c.b16 %v1248, %v1240
        %v1401 = vpack.c.b16 %v1249, %v1241
        %v1402 = vpack.c.b16 %v1250, %v1242
        %v1403 = vpack.c.b16 %v1251, %v1243
        %v1404 = vpack.c.b16 %v1252, %v1244
        %v1405 = vpack.c.b16 %v1261, %v1253
        %v1406 = vpack.c.b16 %v1262, %v1254
        %v1407 = vpack.c.b16 %v1263, %v1255
        %v1408 = vpack.c.b16 %v1264, %v1256
        %v1409 = vpack.c.b16 %v1265, %v1257
        %v1410 = vpack.c.b16 %v1266, %v1258
        %v1411 = vpack.c.b16 %v1267, %v1259
        %v1412 = vpack.c.b16 %v1268, %v1260
        %v1413 = vpack.c.b16 %v1277, %v1269
        %v1414 = vpack.c.b16 %v1278, %v1270
        %v1415 = vpack.c.b16 %v1279, %v1271
        %v1416 = vpack.c.b16 %v1280, %v1272
        %v1417 = vpack.c.b16 %v1281, %v1273
        %v1418 = vpack.c.b16 %v1282, %v1274
        %v1419 = vpack.c.b16 %v1283, %v1275
        %v1420 = vpack.c.b16 %v1284, %v1276
        %v1421 = vpack.c.b16 %v1293, %v1285
        %v1422 = vpack.c.b16 %v1294, %v1286
        %v1423 = vpack.c.b16 %v1295, %v1287
        %v1424 = vpack.c.b16 %v1296, %v1288
        %v1425 = vpack.c.b16 %v1297, %v1289
        %v1426 = vpack.c.b16 %v1298, %v1290
        %v1427 = vpack.c.b16 %v1299, %v1291
        %v1428 = vpack.c.b16 %v1300, %v1292
        %1557 = vmatpush.bf16.msra.mxu0 %v1357
        %1558 = vmatpush.bf16.msra.mxu0 %v1349
        %1559 = vmatpush.bf16.msra.mxu0 %v1341
        %1560 = vmatpush.bf16.msra.mxu0 %v1333
        %1561 = vmatpush.bf16.msra.mxu0 %v1325
        %1562 = vmatpush.bf16.msra.mxu0 %v1317
        %1563 = vmatpush.bf16.msra.mxu0 %v1309
        %1564 = vmatpush.bf16.msra.mxu0 %v1301
        %1565 = vmatmul.bf16.gmra.mxu0 %v913
        %v1566 = vpop.f32.mrf.mxu0
        %v1567 = vadd.f32 0.0, %v1566
        %v1568 = vpop.f32.mrf.mxu0
        %1569 = vdwg.mxu0
        %1570 = vmatpush.bf16.msra.mxu0 %v1421
        %1571 = vmatpush.bf16.msra.mxu0 %v1413
        %1572 = vmatpush.bf16.msra.mxu0 %v1405
        %1573 = vmatpush.bf16.msra.mxu0 %v1397
        %1574 = vmatpush.bf16.msra.mxu0 %v1389
        %1575 = vmatpush.bf16.msra.mxu0 %v1381
        %1576 = vmatpush.bf16.msra.mxu0 %v1373
        %1577 = vmatpush.bf16.msra.mxu0 %v1365
        %1578 = vmatmul.bf16.gmra.mxu0 %v914
        %v1579 = vpop.f32.mrf.mxu0
        %v1580 = vadd.f32 %v1567, %v1579
        %v1581 = vpop.f32.mrf.mxu0
        %1582 = vdwg.mxu0
        %1583 = vmatpush.bf16.msra.mxu0 %v1358
        %1584 = vmatpush.bf16.msra.mxu0 %v1350
        %1585 = vmatpush.bf16.msra.mxu0 %v1342
        %1586 = vmatpush.bf16.msra.mxu0 %v1334
        %1587 = vmatpush.bf16.msra.mxu0 %v1326
        %1588 = vmatpush.bf16.msra.mxu0 %v1318
        %1589 = vmatpush.bf16.msra.mxu0 %v1310
        %1590 = vmatpush.bf16.msra.mxu0 %v1302
        %1591 = vmatmul.bf16.gmra.mxu0 %v913
        %v1592 = vpop.f32.mrf.mxu0
        %v1593 = vadd.f32 0.0, %v1592
        %v1594 = vpop.f32.mrf.mxu0
        %1595 = vdwg.mxu0
        %1596 = vmatpush.bf16.msra.mxu0 %v1422
        %1597 = vmatpush.bf16.msra.mxu0 %v1414
        %1598 = vmatpush.bf16.msra.mxu0 %v1406
        %1599 = vmatpush.bf16.msra.mxu0 %v1398
        %1600 = vmatpush.bf16.msra.mxu0 %v1390
        %1601 = vmatpush.bf16.msra.mxu0 %v1382
        %1602 = vmatpush.bf16.msra.mxu0 %v1374
        %1603 = vmatpush.bf16.msra.mxu0 %v1366
        %1604 = vmatmul.bf16.gmra.mxu0 %v914
        %v1605 = vpop.f32.mrf.mxu0
        %v1606 = vadd.f32 %v1593, %v1605
        %v1607 = vpop.f32.mrf.mxu0
        %1608 = vdwg.mxu0
        %1609 = vmatpush.bf16.msra.mxu0 %v1359
        %1610 = vmatpush.bf16.msra.mxu0 %v1351
        %1611 = vmatpush.bf16.msra.mxu0 %v1343
        %1612 = vmatpush.bf16.msra.mxu0 %v1335
        %1613 = vmatpush.bf16.msra.mxu0 %v1327
        %1614 = vmatpush.bf16.msra.mxu0 %v1319
        %1615 = vmatpush.bf16.msra.mxu0 %v1311
        %1616 = vmatpush.bf16.msra.mxu0 %v1303
        %1617 = vmatmul.bf16.gmra.mxu0 %v913
        %v1618 = vpop.f32.mrf.mxu0
        %v1619 = vadd.f32 0.0, %v1618
        %v1620 = vpop.f32.mrf.mxu0
        %1621 = vdwg.mxu0
        %1622 = vmatpush.bf16.msra.mxu0 %v1423
        %1623 = vmatpush.bf16.msra.mxu0 %v1415
        %1624 = vmatpush.bf16.msra.mxu0 %v1407
        %1625 = vmatpush.bf16.msra.mxu0 %v1399
        %1626 = vmatpush.bf16.msra.mxu0 %v1391
        %1627 = vmatpush.bf16.msra.mxu0 %v1383
        %1628 = vmatpush.bf16.msra.mxu0 %v1375
        %1629 = vmatpush.bf16.msra.mxu0 %v1367
        %1630 = vmatmul.bf16.gmra.mxu0 %v914
        %v1631 = vpop.f32.mrf.mxu0
        %v1632 = vadd.f32 %v1619, %v1631
        %v1633 = vpop.f32.mrf.mxu0
        %1634 = vdwg.mxu0
        %1635 = vmatpush.bf16.msra.mxu0 %v1360
        %1636 = vmatpush.bf16.msra.mxu0 %v1352
        %1637 = vmatpush.bf16.msra.mxu0 %v1344
        %1638 = vmatpush.bf16.msra.mxu0 %v1336
        %1639 = vmatpush.bf16.msra.mxu0 %v1328
        %1640 = vmatpush.bf16.msra.mxu0 %v1320
        %1641 = vmatpush.bf16.msra.mxu0 %v1312
        %1642 = vmatpush.bf16.msra.mxu0 %v1304
        %1643 = vmatmul.bf16.gmra.mxu0 %v913
        %v1644 = vpop.f32.mrf.mxu0
        %v1645 = vadd.f32 0.0, %v1644
        %v1646 = vpop.f32.mrf.mxu0
        %1647 = vdwg.mxu0
        %1648 = vmatpush.bf16.msra.mxu0 %v1424
        %1649 = vmatpush.bf16.msra.mxu0 %v1416
        %1650 = vmatpush.bf16.msra.mxu0 %v1408
        %1651 = vmatpush.bf16.msra.mxu0 %v1400
        %1652 = vmatpush.bf16.msra.mxu0 %v1392
        %1653 = vmatpush.bf16.msra.mxu0 %v1384
        %1654 = vmatpush.bf16.msra.mxu0 %v1376
        %1655 = vmatpush.bf16.msra.mxu0 %v1368
        %1656 = vmatmul.bf16.gmra.mxu0 %v914
        %v1657 = vpop.f32.mrf.mxu0
        %v1658 = vadd.f32 %v1645, %v1657
        %v1659 = vpop.f32.mrf.mxu0
        %1660 = vdwg.mxu0
        %1661 = vmatpush.bf16.msra.mxu0 %v1361
        %1662 = vmatpush.bf16.msra.mxu0 %v1353
        %1663 = vmatpush.bf16.msra.mxu0 %v1345
        %1664 = vmatpush.bf16.msra.mxu0 %v1337
        %1665 = vmatpush.bf16.msra.mxu0 %v1329
        %1666 = vmatpush.bf16.msra.mxu0 %v1321
        %1667 = vmatpush.bf16.msra.mxu0 %v1313
        %1668 = vmatpush.bf16.msra.mxu0 %v1305
        %1669 = vmatmul.bf16.gmra.mxu0 %v913
        %v1670 = vpop.f32.mrf.mxu0
        %v1671 = vadd.f32 0.0, %v1670
        %v1672 = vpop.f32.mrf.mxu0
        %1673 = vdwg.mxu0
        %1674 = vmatpush.bf16.msra.mxu0 %v1425
        %1675 = vmatpush.bf16.msra.mxu0 %v1417
        %1676 = vmatpush.bf16.msra.mxu0 %v1409
        %1677 = vmatpush.bf16.msra.mxu0 %v1401
        %1678 = vmatpush.bf16.msra.mxu0 %v1393
        %1679 = vmatpush.bf16.msra.mxu0 %v1385
        %1680 = vmatpush.bf16.msra.mxu0 %v1377
        %1681 = vmatpush.bf16.msra.mxu0 %v1369
        %1682 = vmatmul.bf16.gmra.mxu0 %v914
        %v1683 = vpop.f32.mrf.mxu0
        %v1684 = vadd.f32 %v1671, %v1683
        %v1685 = vpop.f32.mrf.mxu0
        %1686 = vdwg.mxu0
        %1687 = vmatpush.bf16.msra.mxu0 %v1362
        %1688 = vmatpush.bf16.msra.mxu0 %v1354
        %1689 = vmatpush.bf16.msra.mxu0 %v1346
        %1690 = vmatpush.bf16.msra.mxu0 %v1338
        %1691 = vmatpush.bf16.msra.mxu0 %v1330
        %1692 = vmatpush.bf16.msra.mxu0 %v1322
        %1693 = vmatpush.bf16.msra.mxu0 %v1314
        %1694 = vmatpush.bf16.msra.mxu0 %v1306
        %1695 = vmatmul.bf16.gmra.mxu0 %v913
        %v1696 = vpop.f32.mrf.mxu0
        %v1697 = vadd.f32 0.0, %v1696
        %v1698 = vpop.f32.mrf.mxu0
        %1699 = vdwg.mxu0
        %1700 = vmatpush.bf16.msra.mxu0 %v1426
        %1701 = vmatpush.bf16.msra.mxu0 %v1418
        %1702 = vmatpush.bf16.msra.mxu0 %v1410
        %1703 = vmatpush.bf16.msra.mxu0 %v1402
        %1704 = vmatpush.bf16.msra.mxu0 %v1394
        %1705 = vmatpush.bf16.msra.mxu0 %v1386
        %1706 = vmatpush.bf16.msra.mxu0 %v1378
        %1707 = vmatpush.bf16.msra.mxu0 %v1370
        %1708 = vmatmul.bf16.gmra.mxu0 %v914
        %v1709 = vpop.f32.mrf.mxu0
        %v1710 = vadd.f32 %v1697, %v1709
        %v1711 = vpop.f32.mrf.mxu0
        %1712 = vdwg.mxu0
        %1713 = vmatpush.bf16.msra.mxu0 %v1363
        %1714 = vmatpush.bf16.msra.mxu0 %v1355
        %1715 = vmatpush.bf16.msra.mxu0 %v1347
        %1716 = vmatpush.bf16.msra.mxu0 %v1339
        %1717 = vmatpush.bf16.msra.mxu0 %v1331
        %1718 = vmatpush.bf16.msra.mxu0 %v1323
        %1719 = vmatpush.bf16.msra.mxu0 %v1315
        %1720 = vmatpush.bf16.msra.mxu0 %v1307
        %1721 = vmatmul.bf16.gmra.mxu0 %v913
        %v1722 = vpop.f32.mrf.mxu0
        %v1723 = vadd.f32 0.0, %v1722
        %v1724 = vpop.f32.mrf.mxu0
        %1725 = vdwg.mxu0
        %1726 = vmatpush.bf16.msra.mxu0 %v1427
        %1727 = vmatpush.bf16.msra.mxu0 %v1419
        %1728 = vmatpush.bf16.msra.mxu0 %v1411
        %1729 = vmatpush.bf16.msra.mxu0 %v1403
        %1730 = vmatpush.bf16.msra.mxu0 %v1395
        %1731 = vmatpush.bf16.msra.mxu0 %v1387
        %1732 = vmatpush.bf16.msra.mxu0 %v1379
        %1733 = vmatpush.bf16.msra.mxu0 %v1371
        %1734 = vmatmul.bf16.gmra.mxu0 %v914
        %v1735 = vpop.f32.mrf.mxu0
        %v1736 = vadd.f32 %v1723, %v1735
        %v1737 = vpop.f32.mrf.mxu0
        %1738 = vdwg.mxu0
        %1739 = vmatpush.bf16.msra.mxu0 %v1364
        %1740 = vmatpush.bf16.msra.mxu0 %v1356
        %1741 = vmatpush.bf16.msra.mxu0 %v1348
        %1742 = vmatpush.bf16.msra.mxu0 %v1340
        %1743 = vmatpush.bf16.msra.mxu0 %v1332
        %1744 = vmatpush.bf16.msra.mxu0 %v1324
        %1745 = vmatpush.bf16.msra.mxu0 %v1316
        %1746 = vmatpush.bf16.msra.mxu0 %v1308
        %1747 = vmatmul.bf16.gmra.mxu0 %v913
        %v1748 = vpop.f32.mrf.mxu0
        %v1749 = vadd.f32 0.0, %v1748
        %v1750 = vpop.f32.mrf.mxu0
        %1751 = vdwg.mxu0
        %1752 = vmatpush.bf16.msra.mxu0 %v1428
        %1753 = vmatpush.bf16.msra.mxu0 %v1420
        %1754 = vmatpush.bf16.msra.mxu0 %v1412
        %1755 = vmatpush.bf16.msra.mxu0 %v1404
        %1756 = vmatpush.bf16.msra.mxu0 %v1396
        %1757 = vmatpush.bf16.msra.mxu0 %v1388
        %1758 = vmatpush.bf16.msra.mxu0 %v1380
        %1759 = vmatpush.bf16.msra.mxu0 %v1372
        %1760 = vmatmul.bf16.gmra.mxu0 %v914
        %v1761 = vpop.f32.mrf.mxu0
        %v1762 = vadd.f32 %v1749, %v1761
        %v1763 = vpop.f32.mrf.mxu0
        %1764 = vdwg.mxu0
        %v1766 = vunpack.c.l.b16 %v652
        %v1767 = vunpack.c.h.b16 %v652
        %v1768 = vpack.c.b16 %v1766, %v1766
        %v1769 = vpack.c.b16 %v1767, %v1767
        %v1900 = vunpack.c.l.b16 %v653
        %v1901 = vunpack.c.h.b16 %v653
        %v1902 = vunpack.c.l.b16 %v654
        %v1903 = vunpack.c.h.b16 %v654
        %v1904 = vunpack.c.l.b16 %v655
        %v1905 = vunpack.c.h.b16 %v655
        %v1906 = vunpack.c.l.b16 %v656
        %v1907 = vunpack.c.h.b16 %v656
        %v1908 = vunpack.c.l.b16 %v657
        %v1909 = vunpack.c.h.b16 %v657
        %v1910 = vunpack.c.l.b16 %v658
        %v1911 = vunpack.c.h.b16 %v658
        %v1912 = vunpack.c.l.b16 %v659
        %v1913 = vunpack.c.h.b16 %v659
        %v1914 = vunpack.c.l.b16 %v660
        %v1915 = vunpack.c.h.b16 %v660
        %v1916 = vunpack.c.l.b16 %v661
        %v1917 = vunpack.c.h.b16 %v661
        %v1918 = vunpack.c.l.b16 %v662
        %v1919 = vunpack.c.h.b16 %v662
        %v1920 = vunpack.c.l.b16 %v663
        %v1921 = vunpack.c.h.b16 %v663
        %v1922 = vunpack.c.l.b16 %v664
        %v1923 = vunpack.c.h.b16 %v664
        %v1924 = vunpack.c.l.b16 %v665
        %v1925 = vunpack.c.h.b16 %v665
        %v1926 = vunpack.c.l.b16 %v666
        %v1927 = vunpack.c.h.b16 %v666
        %v1928 = vunpack.c.l.b16 %v667
        %v1929 = vunpack.c.h.b16 %v667
        %v1930 = vunpack.c.l.b16 %v668
        %v1931 = vunpack.c.h.b16 %v668
        %v1932 = vunpack.c.l.b16 %v669
        %v1933 = vunpack.c.h.b16 %v669
        %v1934 = vunpack.c.l.b16 %v670
        %v1935 = vunpack.c.h.b16 %v670
        %v1936 = vunpack.c.l.b16 %v671
        %v1937 = vunpack.c.h.b16 %v671
        %v1938 = vunpack.c.l.b16 %v672
        %v1939 = vunpack.c.h.b16 %v672
        %v1940 = vunpack.c.l.b16 %v673
        %v1941 = vunpack.c.h.b16 %v673
        %v1942 = vunpack.c.l.b16 %v674
        %v1943 = vunpack.c.h.b16 %v674
        %v1944 = vunpack.c.l.b16 %v675
        %v1945 = vunpack.c.h.b16 %v675
        %v1946 = vunpack.c.l.b16 %v676
        %v1947 = vunpack.c.h.b16 %v676
        %v1948 = vunpack.c.l.b16 %v677
        %v1949 = vunpack.c.h.b16 %v677
        %v1950 = vunpack.c.l.b16 %v678
        %v1951 = vunpack.c.h.b16 %v678
        %v1952 = vunpack.c.l.b16 %v679
        %v1953 = vunpack.c.h.b16 %v679
        %v1954 = vunpack.c.l.b16 %v680
        %v1955 = vunpack.c.h.b16 %v680
        %v1956 = vunpack.c.l.b16 %v681
        %v1957 = vunpack.c.h.b16 %v681
        %v1958 = vunpack.c.l.b16 %v682
        %v1959 = vunpack.c.h.b16 %v682
        %v1960 = vunpack.c.l.b16 %v683
        %v1961 = vunpack.c.h.b16 %v683
        %v1962 = vunpack.c.l.b16 %v684
        %v1963 = vunpack.c.h.b16 %v684
        %v1964 = vunpack.c.l.b16 %v685
        %v1965 = vunpack.c.h.b16 %v685
        %v1966 = vunpack.c.l.b16 %v686
        %v1967 = vunpack.c.h.b16 %v686
        %v1968 = vunpack.c.l.b16 %v687
        %v1969 = vunpack.c.h.b16 %v687
        %v1970 = vunpack.c.l.b16 %v688
        %v1971 = vunpack.c.h.b16 %v688
        %v1972 = vunpack.c.l.b16 %v689
        %v1973 = vunpack.c.h.b16 %v689
        %v1974 = vunpack.c.l.b16 %v690
        %v1975 = vunpack.c.h.b16 %v690
        %v1976 = vunpack.c.l.b16 %v691
        %v1977 = vunpack.c.h.b16 %v691
        %v1978 = vunpack.c.l.b16 %v692
        %v1979 = vunpack.c.h.b16 %v692
        %v1980 = vunpack.c.l.b16 %v693
        %v1981 = vunpack.c.h.b16 %v693
        %v1982 = vunpack.c.l.b16 %v694
        %v1983 = vunpack.c.h.b16 %v694
        %v1984 = vunpack.c.l.b16 %v695
        %v1985 = vunpack.c.h.b16 %v695
        %v1986 = vunpack.c.l.b16 %v696
        %v1987 = vunpack.c.h.b16 %v696
        %v1988 = vunpack.c.l.b16 %v697
        %v1989 = vunpack.c.h.b16 %v697
        %v1990 = vunpack.c.l.b16 %v698
        %v1991 = vunpack.c.h.b16 %v698
        %v1992 = vunpack.c.l.b16 %v699
        %v1993 = vunpack.c.h.b16 %v699
        %v1994 = vunpack.c.l.b16 %v700
        %v1995 = vunpack.c.h.b16 %v700
        %v1996 = vunpack.c.l.b16 %v701
        %v1997 = vunpack.c.h.b16 %v701
        %v1998 = vunpack.c.l.b16 %v702
        %v1999 = vunpack.c.h.b16 %v702
        %v2000 = vunpack.c.l.b16 %v703
        %v2001 = vunpack.c.h.b16 %v703
        %v2002 = vunpack.c.l.b16 %v704
        %v2003 = vunpack.c.h.b16 %v704
        %v2004 = vunpack.c.l.b16 %v705
        %v2005 = vunpack.c.h.b16 %v705
        %v2006 = vunpack.c.l.b16 %v706
        %v2007 = vunpack.c.h.b16 %v706
        %v2008 = vunpack.c.l.b16 %v707
        %v2009 = vunpack.c.h.b16 %v707
        %v2010 = vunpack.c.l.b16 %v708
        %v2011 = vunpack.c.h.b16 %v708
        %v2012 = vunpack.c.l.b16 %v709
        %v2013 = vunpack.c.h.b16 %v709
        %v2014 = vunpack.c.l.b16 %v710
        %v2015 = vunpack.c.h.b16 %v710
        %v2016 = vunpack.c.l.b16 %v711
        %v2017 = vunpack.c.h.b16 %v711
        %v2018 = vunpack.c.l.b16 %v712
        %v2019 = vunpack.c.h.b16 %v712
        %v2020 = vunpack.c.l.b16 %v713
        %v2021 = vunpack.c.h.b16 %v713
        %v2022 = vunpack.c.l.b16 %v714
        %v2023 = vunpack.c.h.b16 %v714
        %v2024 = vunpack.c.l.b16 %v715
        %v2025 = vunpack.c.h.b16 %v715
        %v2026 = vunpack.c.l.b16 %v716
        %v2027 = vunpack.c.h.b16 %v716
        %v2028 = vunpack.c.l.b16 %v717
        %v2029 = vunpack.c.h.b16 %v717
        %v2030 = vunpack.c.l.b16 %v718
        %v2031 = vunpack.c.h.b16 %v718
        %v2032 = vunpack.c.l.b16 %v719
        %v2033 = vunpack.c.h.b16 %v719
        %v2034 = vunpack.c.l.b16 %v720
        %v2035 = vunpack.c.h.b16 %v720
        %v2036 = vunpack.c.l.b16 %v721
        %v2037 = vunpack.c.h.b16 %v721
        %v2038 = vunpack.c.l.b16 %v722
        %v2039 = vunpack.c.h.b16 %v722
        %v2040 = vunpack.c.l.b16 %v723
        %v2041 = vunpack.c.h.b16 %v723
        %v2042 = vunpack.c.l.b16 %v724
        %v2043 = vunpack.c.h.b16 %v724
        %v2044 = vunpack.c.l.b16 %v725
        %v2045 = vunpack.c.h.b16 %v725
        %v2046 = vunpack.c.l.b16 %v726
        %v2047 = vunpack.c.h.b16 %v726
        %v2048 = vunpack.c.l.b16 %v727
        %v2049 = vunpack.c.h.b16 %v727
        %v2050 = vunpack.c.l.b16 %v728
        %v2051 = vunpack.c.h.b16 %v728
        %v2052 = vunpack.c.l.b16 %v729
        %v2053 = vunpack.c.h.b16 %v729
        %v2054 = vunpack.c.l.b16 %v730
        %v2055 = vunpack.c.h.b16 %v730
        %v2056 = vunpack.c.l.b16 %v731
        %v2057 = vunpack.c.h.b16 %v731
        %v2058 = vunpack.c.l.b16 %v732
        %v2059 = vunpack.c.h.b16 %v732
        %v2060 = vunpack.c.l.b16 %v733
        %v2061 = vunpack.c.h.b16 %v733
        %v2062 = vunpack.c.l.b16 %v734
        %v2063 = vunpack.c.h.b16 %v734
        %v2064 = vunpack.c.l.b16 %v735
        %v2065 = vunpack.c.h.b16 %v735
        %v2066 = vunpack.c.l.b16 %v736
        %v2067 = vunpack.c.h.b16 %v736
        %v2068 = vunpack.c.l.b16 %v737
        %v2069 = vunpack.c.h.b16 %v737
        %v2070 = vunpack.c.l.b16 %v738
        %v2071 = vunpack.c.h.b16 %v738
        %v2072 = vunpack.c.l.b16 %v739
        %v2073 = vunpack.c.h.b16 %v739
        %v2074 = vunpack.c.l.b16 %v740
        %v2075 = vunpack.c.h.b16 %v740
        %v2076 = vunpack.c.l.b16 %v741
        %v2077 = vunpack.c.h.b16 %v741
        %v2078 = vunpack.c.l.b16 %v742
        %v2079 = vunpack.c.h.b16 %v742
        %v2080 = vunpack.c.l.b16 %v743
        %v2081 = vunpack.c.h.b16 %v743
        %v2082 = vunpack.c.l.b16 %v744
        %v2083 = vunpack.c.h.b16 %v744
        %v2084 = vunpack.c.l.b16 %v745
        %v2085 = vunpack.c.h.b16 %v745
        %v2086 = vunpack.c.l.b16 %v746
        %v2087 = vunpack.c.h.b16 %v746
        %v2088 = vunpack.c.l.b16 %v747
        %v2089 = vunpack.c.h.b16 %v747
        %v2090 = vunpack.c.l.b16 %v748
        %v2091 = vunpack.c.h.b16 %v748
        %v2092 = vunpack.c.l.b16 %v749
        %v2093 = vunpack.c.h.b16 %v749
        %v2094 = vunpack.c.l.b16 %v750
        %v2095 = vunpack.c.h.b16 %v750
        %v2096 = vunpack.c.l.b16 %v751
        %v2097 = vunpack.c.h.b16 %v751
        %v2098 = vunpack.c.l.b16 %v752
        %v2099 = vunpack.c.h.b16 %v752
        %v2100 = vunpack.c.l.b16 %v753
        %v2101 = vunpack.c.h.b16 %v753
        %v2102 = vunpack.c.l.b16 %v754
        %v2103 = vunpack.c.h.b16 %v754
        %v2104 = vunpack.c.l.b16 %v755
        %v2105 = vunpack.c.h.b16 %v755
        %v2106 = vunpack.c.l.b16 %v756
        %v2107 = vunpack.c.h.b16 %v756
        %v2108 = vunpack.c.l.b16 %v757
        %v2109 = vunpack.c.h.b16 %v757
        %v2110 = vunpack.c.l.b16 %v758
        %v2111 = vunpack.c.h.b16 %v758
        %v2112 = vunpack.c.l.b16 %v759
        %v2113 = vunpack.c.h.b16 %v759
        %v2114 = vunpack.c.l.b16 %v760
        %v2115 = vunpack.c.h.b16 %v760
        %v2116 = vunpack.c.l.b16 %v761
        %v2117 = vunpack.c.h.b16 %v761
        %v2118 = vunpack.c.l.b16 %v762
        %v2119 = vunpack.c.h.b16 %v762
        %v2120 = vunpack.c.l.b16 %v763
        %v2121 = vunpack.c.h.b16 %v763
        %v2122 = vunpack.c.l.b16 %v764
        %v2123 = vunpack.c.h.b16 %v764
        %v2124 = vunpack.c.l.b16 %v765
        %v2125 = vunpack.c.h.b16 %v765
        %v2126 = vunpack.c.l.b16 %v766
        %v2127 = vunpack.c.h.b16 %v766
        %v2128 = vunpack.c.l.b16 %v767
        %v2129 = vunpack.c.h.b16 %v767
        %v2130 = vunpack.c.l.b16 %v768
        %v2131 = vunpack.c.h.b16 %v768
        %v2132 = vunpack.c.l.b16 %v769
        %v2133 = vunpack.c.h.b16 %v769
        %v2134 = vunpack.c.l.b16 %v770
        %v2135 = vunpack.c.h.b16 %v770
        %v2136 = vunpack.c.l.b16 %v771
        %v2137 = vunpack.c.h.b16 %v771
        %v2138 = vunpack.c.l.b16 %v772
        %v2139 = vunpack.c.h.b16 %v772
        %v2140 = vunpack.c.l.b16 %v773
        %v2141 = vunpack.c.h.b16 %v773
        %v2142 = vunpack.c.l.b16 %v774
        %v2143 = vunpack.c.h.b16 %v774
        %v2144 = vunpack.c.l.b16 %v775
        %v2145 = vunpack.c.h.b16 %v775
        %v2146 = vunpack.c.l.b16 %v776
        %v2147 = vunpack.c.h.b16 %v776
        %v2148 = vunpack.c.l.b16 %v777
        %v2149 = vunpack.c.h.b16 %v777
        %v2150 = vunpack.c.l.b16 %v778
        %v2151 = vunpack.c.h.b16 %v778
        %v2152 = vunpack.c.l.b16 %v779
        %v2153 = vunpack.c.h.b16 %v779
        %v2154 = vunpack.c.l.b16 %v780
        %v2155 = vunpack.c.h.b16 %v780
        %v2156 = vpack.c.b16 %v1908, %v1900
        %v2157 = vpack.c.b16 %v1909, %v1901
        %v2158 = vpack.c.b16 %v1910, %v1902
        %v2159 = vpack.c.b16 %v1911, %v1903
        %v2160 = vpack.c.b16 %v1912, %v1904
        %v2161 = vpack.c.b16 %v1913, %v1905
        %v2162 = vpack.c.b16 %v1914, %v1906
        %v2163 = vpack.c.b16 %v1915, %v1907
        %v2164 = vpack.c.b16 %v1924, %v1916
        %v2165 = vpack.c.b16 %v1925, %v1917
        %v2166 = vpack.c.b16 %v1926, %v1918
        %v2167 = vpack.c.b16 %v1927, %v1919
        %v2168 = vpack.c.b16 %v1928, %v1920
        %v2169 = vpack.c.b16 %v1929, %v1921
        %v2170 = vpack.c.b16 %v1930, %v1922
        %v2171 = vpack.c.b16 %v1931, %v1923
        %v2172 = vpack.c.b16 %v1940, %v1932
        %v2173 = vpack.c.b16 %v1941, %v1933
        %v2174 = vpack.c.b16 %v1942, %v1934
        %v2175 = vpack.c.b16 %v1943, %v1935
        %v2176 = vpack.c.b16 %v1944, %v1936
        %v2177 = vpack.c.b16 %v1945, %v1937
        %v2178 = vpack.c.b16 %v1946, %v1938
        %v2179 = vpack.c.b16 %v1947, %v1939
        %v2180 = vpack.c.b16 %v1956, %v1948
        %v2181 = vpack.c.b16 %v1957, %v1949
        %v2182 = vpack.c.b16 %v1958, %v1950
        %v2183 = vpack.c.b16 %v1959, %v1951
        %v2184 = vpack.c.b16 %v1960, %v1952
        %v2185 = vpack.c.b16 %v1961, %v1953
        %v2186 = vpack.c.b16 %v1962, %v1954
        %v2187 = vpack.c.b16 %v1963, %v1955
        %v2188 = vpack.c.b16 %v1972, %v1964
        %v2189 = vpack.c.b16 %v1973, %v1965
        %v2190 = vpack.c.b16 %v1974, %v1966
        %v2191 = vpack.c.b16 %v1975, %v1967
        %v2192 = vpack.c.b16 %v1976, %v1968
        %v2193 = vpack.c.b16 %v1977, %v1969
        %v2194 = vpack.c.b16 %v1978, %v1970
        %v2195 = vpack.c.b16 %v1979, %v1971
        %v2196 = vpack.c.b16 %v1988, %v1980
        %v2197 = vpack.c.b16 %v1989, %v1981
        %v2198 = vpack.c.b16 %v1990, %v1982
        %v2199 = vpack.c.b16 %v1991, %v1983
        %v2200 = vpack.c.b16 %v1992, %v1984
        %v2201 = vpack.c.b16 %v1993, %v1985
        %v2202 = vpack.c.b16 %v1994, %v1986
        %v2203 = vpack.c.b16 %v1995, %v1987
        %v2204 = vpack.c.b16 %v2004, %v1996
        %v2205 = vpack.c.b16 %v2005, %v1997
        %v2206 = vpack.c.b16 %v2006, %v1998
        %v2207 = vpack.c.b16 %v2007, %v1999
        %v2208 = vpack.c.b16 %v2008, %v2000
        %v2209 = vpack.c.b16 %v2009, %v2001
        %v2210 = vpack.c.b16 %v2010, %v2002
        %v2211 = vpack.c.b16 %v2011, %v2003
        %v2212 = vpack.c.b16 %v2020, %v2012
        %v2213 = vpack.c.b16 %v2021, %v2013
        %v2214 = vpack.c.b16 %v2022, %v2014
        %v2215 = vpack.c.b16 %v2023, %v2015
        %v2216 = vpack.c.b16 %v2024, %v2016
        %v2217 = vpack.c.b16 %v2025, %v2017
        %v2218 = vpack.c.b16 %v2026, %v2018
        %v2219 = vpack.c.b16 %v2027, %v2019
        %v2220 = vpack.c.b16 %v2036, %v2028
        %v2221 = vpack.c.b16 %v2037, %v2029
        %v2222 = vpack.c.b16 %v2038, %v2030
        %v2223 = vpack.c.b16 %v2039, %v2031
        %v2224 = vpack.c.b16 %v2040, %v2032
        %v2225 = vpack.c.b16 %v2041, %v2033
        %v2226 = vpack.c.b16 %v2042, %v2034
        %v2227 = vpack.c.b16 %v2043, %v2035
        %v2228 = vpack.c.b16 %v2052, %v2044
        %v2229 = vpack.c.b16 %v2053, %v2045
        %v2230 = vpack.c.b16 %v2054, %v2046
        %v2231 = vpack.c.b16 %v2055, %v2047
        %v2232 = vpack.c.b16 %v2056, %v2048
        %v2233 = vpack.c.b16 %v2057, %v2049
        %v2234 = vpack.c.b16 %v2058, %v2050
        %v2235 = vpack.c.b16 %v2059, %v2051
        %v2236 = vpack.c.b16 %v2068, %v2060
        %v2237 = vpack.c.b16 %v2069, %v2061
        %v2238 = vpack.c.b16 %v2070, %v2062
        %v2239 = vpack.c.b16 %v2071, %v2063
        %v2240 = vpack.c.b16 %v2072, %v2064
        %v2241 = vpack.c.b16 %v2073, %v2065
        %v2242 = vpack.c.b16 %v2074, %v2066
        %v2243 = vpack.c.b16 %v2075, %v2067
        %v2244 = vpack.c.b16 %v2084, %v2076
        %v2245 = vpack.c.b16 %v2085, %v2077
        %v2246 = vpack.c.b16 %v2086, %v2078
        %v2247 = vpack.c.b16 %v2087, %v2079
        %v2248 = vpack.c.b16 %v2088, %v2080
        %v2249 = vpack.c.b16 %v2089, %v2081
        %v2250 = vpack.c.b16 %v2090, %v2082
        %v2251 = vpack.c.b16 %v2091, %v2083
        %v2252 = vpack.c.b16 %v2100, %v2092
        %v2253 = vpack.c.b16 %v2101, %v2093
        %v2254 = vpack.c.b16 %v2102, %v2094
        %v2255 = vpack.c.b16 %v2103, %v2095
        %v2256 = vpack.c.b16 %v2104, %v2096
        %v2257 = vpack.c.b16 %v2105, %v2097
        %v2258 = vpack.c.b16 %v2106, %v2098
        %v2259 = vpack.c.b16 %v2107, %v2099
        %v2260 = vpack.c.b16 %v2116, %v2108
        %v2261 = vpack.c.b16 %v2117, %v2109
        %v2262 = vpack.c.b16 %v2118, %v2110
        %v2263 = vpack.c.b16 %v2119, %v2111
        %v2264 = vpack.c.b16 %v2120, %v2112
        %v2265 = vpack.c.b16 %v2121, %v2113
        %v2266 = vpack.c.b16 %v2122, %v2114
        %v2267 = vpack.c.b16 %v2123, %v2115
        %v2268 = vpack.c.b16 %v2132, %v2124
        %v2269 = vpack.c.b16 %v2133, %v2125
        %v2270 = vpack.c.b16 %v2134, %v2126
        %v2271 = vpack.c.b16 %v2135, %v2127
        %v2272 = vpack.c.b16 %v2136, %v2128
        %v2273 = vpack.c.b16 %v2137, %v2129
        %v2274 = vpack.c.b16 %v2138, %v2130
        %v2275 = vpack.c.b16 %v2139, %v2131
        %v2276 = vpack.c.b16 %v2148, %v2140
        %v2277 = vpack.c.b16 %v2149, %v2141
        %v2278 = vpack.c.b16 %v2150, %v2142
        %v2279 = vpack.c.b16 %v2151, %v2143
        %v2280 = vpack.c.b16 %v2152, %v2144
        %v2281 = vpack.c.b16 %v2153, %v2145
        %v2282 = vpack.c.b16 %v2154, %v2146
        %v2283 = vpack.c.b16 %v2155, %v2147
        %2412 = vmatpush.bf16.msra.mxu0 %v2212
        %2413 = vmatpush.bf16.msra.mxu0 %v2204
        %2414 = vmatpush.bf16.msra.mxu0 %v2196
        %2415 = vmatpush.bf16.msra.mxu0 %v2188
        %2416 = vmatpush.bf16.msra.mxu0 %v2180
        %2417 = vmatpush.bf16.msra.mxu0 %v2172
        %2418 = vmatpush.bf16.msra.mxu0 %v2164
        %2419 = vmatpush.bf16.msra.mxu0 %v2156
        %2420 = vmatmul.bf16.gmra.mxu0 %v1768
        %v2421 = vpop.f32.mrf.mxu0
        %v2422 = vadd.f32 %v1580, %v2421
        %v2423 = vpop.f32.mrf.mxu0
        %2424 = vdwg.mxu0
        %2425 = vmatpush.bf16.msra.mxu0 %v2276
        %2426 = vmatpush.bf16.msra.mxu0 %v2268
        %2427 = vmatpush.bf16.msra.mxu0 %v2260
        %2428 = vmatpush.bf16.msra.mxu0 %v2252
        %2429 = vmatpush.bf16.msra.mxu0 %v2244
        %2430 = vmatpush.bf16.msra.mxu0 %v2236
        %2431 = vmatpush.bf16.msra.mxu0 %v2228
        %2432 = vmatpush.bf16.msra.mxu0 %v2220
        %2433 = vmatmul.bf16.gmra.mxu0 %v1769
        %v2434 = vpop.f32.mrf.mxu0
        %v2435 = vadd.f32 %v2422, %v2434
        %v2436 = vpop.f32.mrf.mxu0
        %2437 = vdwg.mxu0
        %2438 = vmatpush.bf16.msra.mxu0 %v2213
        %2439 = vmatpush.bf16.msra.mxu0 %v2205
        %2440 = vmatpush.bf16.msra.mxu0 %v2197
        %2441 = vmatpush.bf16.msra.mxu0 %v2189
        %2442 = vmatpush.bf16.msra.mxu0 %v2181
        %2443 = vmatpush.bf16.msra.mxu0 %v2173
        %2444 = vmatpush.bf16.msra.mxu0 %v2165
        %2445 = vmatpush.bf16.msra.mxu0 %v2157
        %2446 = vmatmul.bf16.gmra.mxu0 %v1768
        %v2447 = vpop.f32.mrf.mxu0
        %v2448 = vadd.f32 %v1606, %v2447
        %v2449 = vpop.f32.mrf.mxu0
        %2450 = vdwg.mxu0
        %2451 = vmatpush.bf16.msra.mxu0 %v2277
        %2452 = vmatpush.bf16.msra.mxu0 %v2269
        %2453 = vmatpush.bf16.msra.mxu0 %v2261
        %2454 = vmatpush.bf16.msra.mxu0 %v2253
        %2455 = vmatpush.bf16.msra.mxu0 %v2245
        %2456 = vmatpush.bf16.msra.mxu0 %v2237
        %2457 = vmatpush.bf16.msra.mxu0 %v2229
        %2458 = vmatpush.bf16.msra.mxu0 %v2221
        %2459 = vmatmul.bf16.gmra.mxu0 %v1769
        %v2460 = vpop.f32.mrf.mxu0
        %v2461 = vadd.f32 %v2448, %v2460
        %v2462 = vpop.f32.mrf.mxu0
        %2463 = vdwg.mxu0
        %2464 = vmatpush.bf16.msra.mxu0 %v2214
        %2465 = vmatpush.bf16.msra.mxu0 %v2206
        %2466 = vmatpush.bf16.msra.mxu0 %v2198
        %2467 = vmatpush.bf16.msra.mxu0 %v2190
        %2468 = vmatpush.bf16.msra.mxu0 %v2182
        %2469 = vmatpush.bf16.msra.mxu0 %v2174
        %2470 = vmatpush.bf16.msra.mxu0 %v2166
        %2471 = vmatpush.bf16.msra.mxu0 %v2158
        %2472 = vmatmul.bf16.gmra.mxu0 %v1768
        %v2473 = vpop.f32.mrf.mxu0
        %v2474 = vadd.f32 %v1632, %v2473
        %v2475 = vpop.f32.mrf.mxu0
        %2476 = vdwg.mxu0
        %2477 = vmatpush.bf16.msra.mxu0 %v2278
        %2478 = vmatpush.bf16.msra.mxu0 %v2270
        %2479 = vmatpush.bf16.msra.mxu0 %v2262
        %2480 = vmatpush.bf16.msra.mxu0 %v2254
        %2481 = vmatpush.bf16.msra.mxu0 %v2246
        %2482 = vmatpush.bf16.msra.mxu0 %v2238
        %2483 = vmatpush.bf16.msra.mxu0 %v2230
        %2484 = vmatpush.bf16.msra.mxu0 %v2222
        %2485 = vmatmul.bf16.gmra.mxu0 %v1769
        %v2486 = vpop.f32.mrf.mxu0
        %v2487 = vadd.f32 %v2474, %v2486
        %v2488 = vpop.f32.mrf.mxu0
        %2489 = vdwg.mxu0
        %2490 = vmatpush.bf16.msra.mxu0 %v2215
        %2491 = vmatpush.bf16.msra.mxu0 %v2207
        %2492 = vmatpush.bf16.msra.mxu0 %v2199
        %2493 = vmatpush.bf16.msra.mxu0 %v2191
        %2494 = vmatpush.bf16.msra.mxu0 %v2183
        %2495 = vmatpush.bf16.msra.mxu0 %v2175
        %2496 = vmatpush.bf16.msra.mxu0 %v2167
        %2497 = vmatpush.bf16.msra.mxu0 %v2159
        %2498 = vmatmul.bf16.gmra.mxu0 %v1768
        %v2499 = vpop.f32.mrf.mxu0
        %v2500 = vadd.f32 %v1658, %v2499
        %v2501 = vpop.f32.mrf.mxu0
        %2502 = vdwg.mxu0
        %2503 = vmatpush.bf16.msra.mxu0 %v2279
        %2504 = vmatpush.bf16.msra.mxu0 %v2271
        %2505 = vmatpush.bf16.msra.mxu0 %v2263
        %2506 = vmatpush.bf16.msra.mxu0 %v2255
        %2507 = vmatpush.bf16.msra.mxu0 %v2247
        %2508 = vmatpush.bf16.msra.mxu0 %v2239
        %2509 = vmatpush.bf16.msra.mxu0 %v2231
        %2510 = vmatpush.bf16.msra.mxu0 %v2223
        %2511 = vmatmul.bf16.gmra.mxu0 %v1769
        %v2512 = vpop.f32.mrf.mxu0
        %v2513 = vadd.f32 %v2500, %v2512
        %v2514 = vpop.f32.mrf.mxu0
        %2515 = vdwg.mxu0
        %2516 = vmatpush.bf16.msra.mxu0 %v2216
        %2517 = vmatpush.bf16.msra.mxu0 %v2208
        %2518 = vmatpush.bf16.msra.mxu0 %v2200
        %2519 = vmatpush.bf16.msra.mxu0 %v2192
        %2520 = vmatpush.bf16.msra.mxu0 %v2184
        %2521 = vmatpush.bf16.msra.mxu0 %v2176
        %2522 = vmatpush.bf16.msra.mxu0 %v2168
        %2523 = vmatpush.bf16.msra.mxu0 %v2160
        %2524 = vmatmul.bf16.gmra.mxu0 %v1768
        %v2525 = vpop.f32.mrf.mxu0
        %v2526 = vadd.f32 %v1684, %v2525
        %v2527 = vpop.f32.mrf.mxu0
        %2528 = vdwg.mxu0
        %2529 = vmatpush.bf16.msra.mxu0 %v2280
        %2530 = vmatpush.bf16.msra.mxu0 %v2272
        %2531 = vmatpush.bf16.msra.mxu0 %v2264
        %2532 = vmatpush.bf16.msra.mxu0 %v2256
        %2533 = vmatpush.bf16.msra.mxu0 %v2248
        %2534 = vmatpush.bf16.msra.mxu0 %v2240
        %2535 = vmatpush.bf16.msra.mxu0 %v2232
        %2536 = vmatpush.bf16.msra.mxu0 %v2224
        %2537 = vmatmul.bf16.gmra.mxu0 %v1769
        %v2538 = vpop.f32.mrf.mxu0
        %v2539 = vadd.f32 %v2526, %v2538
        %v2540 = vpop.f32.mrf.mxu0
        %2541 = vdwg.mxu0
        %2542 = vmatpush.bf16.msra.mxu0 %v2217
        %2543 = vmatpush.bf16.msra.mxu0 %v2209
        %2544 = vmatpush.bf16.msra.mxu0 %v2201
        %2545 = vmatpush.bf16.msra.mxu0 %v2193
        %2546 = vmatpush.bf16.msra.mxu0 %v2185
        %2547 = vmatpush.bf16.msra.mxu0 %v2177
        %2548 = vmatpush.bf16.msra.mxu0 %v2169
        %2549 = vmatpush.bf16.msra.mxu0 %v2161
        %2550 = vmatmul.bf16.gmra.mxu0 %v1768
        %v2551 = vpop.f32.mrf.mxu0
        %v2552 = vadd.f32 %v1710, %v2551
        %v2553 = vpop.f32.mrf.mxu0
        %2554 = vdwg.mxu0
        %2555 = vmatpush.bf16.msra.mxu0 %v2281
        %2556 = vmatpush.bf16.msra.mxu0 %v2273
        %2557 = vmatpush.bf16.msra.mxu0 %v2265
        %2558 = vmatpush.bf16.msra.mxu0 %v2257
        %2559 = vmatpush.bf16.msra.mxu0 %v2249
        %2560 = vmatpush.bf16.msra.mxu0 %v2241
        %2561 = vmatpush.bf16.msra.mxu0 %v2233
        %2562 = vmatpush.bf16.msra.mxu0 %v2225
        %2563 = vmatmul.bf16.gmra.mxu0 %v1769
        %v2564 = vpop.f32.mrf.mxu0
        %v2565 = vadd.f32 %v2552, %v2564
        %v2566 = vpop.f32.mrf.mxu0
        %2567 = vdwg.mxu0
        %2568 = vmatpush.bf16.msra.mxu0 %v2218
        %2569 = vmatpush.bf16.msra.mxu0 %v2210
        %2570 = vmatpush.bf16.msra.mxu0 %v2202
        %2571 = vmatpush.bf16.msra.mxu0 %v2194
        %2572 = vmatpush.bf16.msra.mxu0 %v2186
        %2573 = vmatpush.bf16.msra.mxu0 %v2178
        %2574 = vmatpush.bf16.msra.mxu0 %v2170
        %2575 = vmatpush.bf16.msra.mxu0 %v2162
        %2576 = vmatmul.bf16.gmra.mxu0 %v1768
        %v2577 = vpop.f32.mrf.mxu0
        %v2578 = vadd.f32 %v1736, %v2577
        %v2579 = vpop.f32.mrf.mxu0
        %2580 = vdwg.mxu0
        %2581 = vmatpush.bf16.msra.mxu0 %v2282
        %2582 = vmatpush.bf16.msra.mxu0 %v2274
        %2583 = vmatpush.bf16.msra.mxu0 %v2266
        %2584 = vmatpush.bf16.msra.mxu0 %v2258
        %2585 = vmatpush.bf16.msra.mxu0 %v2250
        %2586 = vmatpush.bf16.msra.mxu0 %v2242
        %2587 = vmatpush.bf16.msra.mxu0 %v2234
        %2588 = vmatpush.bf16.msra.mxu0 %v2226
        %2589 = vmatmul.bf16.gmra.mxu0 %v1769
        %v2590 = vpop.f32.mrf.mxu0
        %v2591 = vadd.f32 %v2578, %v2590
        %v2592 = vpop.f32.mrf.mxu0
        %2593 = vdwg.mxu0
        %2594 = vmatpush.bf16.msra.mxu0 %v2219
        %2595 = vmatpush.bf16.msra.mxu0 %v2211
        %2596 = vmatpush.bf16.msra.mxu0 %v2203
        %2597 = vmatpush.bf16.msra.mxu0 %v2195
        %2598 = vmatpush.bf16.msra.mxu0 %v2187
        %2599 = vmatpush.bf16.msra.mxu0 %v2179
        %2600 = vmatpush.bf16.msra.mxu0 %v2171
        %2601 = vmatpush.bf16.msra.mxu0 %v2163
        %2602 = vmatmul.bf16.gmra.mxu0 %v1768
        %v2603 = vpop.f32.mrf.mxu0
        %v2604 = vadd.f32 %v1762, %v2603
        %v2605 = vpop.f32.mrf.mxu0
        %2606 = vdwg.mxu0
        %2607 = vmatpush.bf16.msra.mxu0 %v2283
        %2608 = vmatpush.bf16.msra.mxu0 %v2275
        %2609 = vmatpush.bf16.msra.mxu0 %v2267
        %2610 = vmatpush.bf16.msra.mxu0 %v2259
        %2611 = vmatpush.bf16.msra.mxu0 %v2251
        %2612 = vmatpush.bf16.msra.mxu0 %v2243
        %2613 = vmatpush.bf16.msra.mxu0 %v2235
        %2614 = vmatpush.bf16.msra.mxu0 %v2227
        %2615 = vmatmul.bf16.gmra.mxu0 %v1769
        %v2616 = vpop.f32.mrf.mxu0
        %v2617 = vadd.f32 %v2604, %v2616
        %v2618 = vpop.f32.mrf.mxu0
        %2619 = vdwg.mxu0
        %v2620 = vld [vmem:[%s641] sm:$0xf]
        %v2621 = vld [vmem:[%s7] sm:$0xff]
        %v2622 = vld [vmem:[%s7 + $0x8] sm:$0xff]
        %v2623 = vld [vmem:[%s7 + $0x10] sm:$0xff]
        %v2624 = vld [vmem:[%s7 + $0x18] sm:$0xff]
        %v2625 = vld [vmem:[%s7 + $0x20] sm:$0xff]
        %v2626 = vld [vmem:[%s7 + $0x28] sm:$0xff]
        %v2627 = vld [vmem:[%s7 + $0x30] sm:$0xff]
        %v2628 = vld [vmem:[%s7 + $0x38] sm:$0xff]
        %v2637 = vunpack.c.l.b16 %v2621
        %v2638 = vunpack.c.h.b16 %v2621
        %v2639 = vunpack.c.l.b16 %v2622
        %v2640 = vunpack.c.h.b16 %v2622
        %v2641 = vunpack.c.l.b16 %v2623
        %v2642 = vunpack.c.h.b16 %v2623
        %v2643 = vunpack.c.l.b16 %v2624
        %v2644 = vunpack.c.h.b16 %v2624
        %v2645 = vunpack.c.l.b16 %v2625
        %v2646 = vunpack.c.h.b16 %v2625
        %v2647 = vunpack.c.l.b16 %v2626
        %v2648 = vunpack.c.h.b16 %v2626
        %v2649 = vunpack.c.l.b16 %v2627
        %v2650 = vunpack.c.h.b16 %v2627
        %v2651 = vunpack.c.l.b16 %v2628
        %v2652 = vunpack.c.h.b16 %v2628
        %v2653 = vpack.c.b16 %v2645, %v2637
        %v2654 = vpack.c.b16 %v2646, %v2638
        %v2655 = vpack.c.b16 %v2647, %v2639
        %v2656 = vpack.c.b16 %v2648, %v2640
        %v2657 = vpack.c.b16 %v2649, %v2641
        %v2658 = vpack.c.b16 %v2650, %v2642
        %v2659 = vpack.c.b16 %v2651, %v2643
        %v2660 = vpack.c.b16 %v2652, %v2644
        %vm2669 = vcmask 130048
        %v2671 = vsel %vm2669, %v2620, 0
        %2673 = vmatpush.bf16.msra.mxu0 0
        %2674 = vmatpush.bf16.msra.mxu0 0
        %2675 = vmatpush.bf16.msra.mxu0 0
        %2676 = vmatpush.bf16.msra.mxu0 0
        %2677 = vmatpush.bf16.msra.mxu0 0
        %2678 = vmatpush.bf16.msra.mxu0 0
        %2679 = vmatpush.bf16.msra.mxu0 0
        %2680 = vmatpush.bf16.msra.mxu0 %v2653
        %2681 = vmatmul.bf16.gmra.mxu0 %v2671
        %v2682 = vpop.f32.mrf.mxu0
        %v2683 = vadd.f32 0.0, %v2682
        %v2684 = vpop.f32.mrf.mxu0
        %2685 = vdwg.mxu0
        %2686 = vmatpush.bf16.msra.mxu0 0
        %2687 = vmatpush.bf16.msra.mxu0 0
        %2688 = vmatpush.bf16.msra.mxu0 0
        %2689 = vmatpush.bf16.msra.mxu0 0
        %2690 = vmatpush.bf16.msra.mxu0 0
        %2691 = vmatpush.bf16.msra.mxu0 0
        %2692 = vmatpush.bf16.msra.mxu0 0
        %2693 = vmatpush.bf16.msra.mxu0 %v2654
        %2694 = vmatmul.bf16.gmra.mxu0 %v2671
        %v2695 = vpop.f32.mrf.mxu0
        %v2696 = vadd.f32 0.0, %v2695
        %v2697 = vpop.f32.mrf.mxu0
        %2698 = vdwg.mxu0
        %2699 = vmatpush.bf16.msra.mxu0 0
        %2700 = vmatpush.bf16.msra.mxu0 0
        %2701 = vmatpush.bf16.msra.mxu0 0
        %2702 = vmatpush.bf16.msra.mxu0 0
        %2703 = vmatpush.bf16.msra.mxu0 0
        %2704 = vmatpush.bf16.msra.mxu0 0
        %2705 = vmatpush.bf16.msra.mxu0 0
        %2706 = vmatpush.bf16.msra.mxu0 %v2655
        %2707 = vmatmul.bf16.gmra.mxu0 %v2671
        %v2708 = vpop.f32.mrf.mxu0
        %v2709 = vadd.f32 0.0, %v2708
        %v2710 = vpop.f32.mrf.mxu0
        %2711 = vdwg.mxu0
        %2712 = vmatpush.bf16.msra.mxu0 0
        %2713 = vmatpush.bf16.msra.mxu0 0
        %2714 = vmatpush.bf16.msra.mxu0 0
        %2715 = vmatpush.bf16.msra.mxu0 0
        %2716 = vmatpush.bf16.msra.mxu0 0
        %2717 = vmatpush.bf16.msra.mxu0 0
        %2718 = vmatpush.bf16.msra.mxu0 0
        %2719 = vmatpush.bf16.msra.mxu0 %v2656
        %2720 = vmatmul.bf16.gmra.mxu0 %v2671
        %v2721 = vpop.f32.mrf.mxu0
        %v2722 = vadd.f32 0.0, %v2721
        %v2723 = vpop.f32.mrf.mxu0
        %2724 = vdwg.mxu0
        %2725 = vmatpush.bf16.msra.mxu0 0
        %2726 = vmatpush.bf16.msra.mxu0 0
        %2727 = vmatpush.bf16.msra.mxu0 0
        %2728 = vmatpush.bf16.msra.mxu0 0
        %2729 = vmatpush.bf16.msra.mxu0 0
        %2730 = vmatpush.bf16.msra.mxu0 0
        %2731 = vmatpush.bf16.msra.mxu0 0
        %2732 = vmatpush.bf16.msra.mxu0 %v2657
        %2733 = vmatmul.bf16.gmra.mxu0 %v2671
        %v2734 = vpop.f32.mrf.mxu0
        %v2735 = vadd.f32 0.0, %v2734
        %v2736 = vpop.f32.mrf.mxu0
        %2737 = vdwg.mxu0
        %2738 = vmatpush.bf16.msra.mxu0 0
        %2739 = vmatpush.bf16.msra.mxu0 0
        %2740 = vmatpush.bf16.msra.mxu0 0
        %2741 = vmatpush.bf16.msra.mxu0 0
        %2742 = vmatpush.bf16.msra.mxu0 0
        %2743 = vmatpush.bf16.msra.mxu0 0
        %2744 = vmatpush.bf16.msra.mxu0 0
        %2745 = vmatpush.bf16.msra.mxu0 %v2658
        %2746 = vmatmul.bf16.gmra.mxu0 %v2671
        %v2747 = vpop.f32.mrf.mxu0
        %v2748 = vadd.f32 0.0, %v2747
        %v2749 = vpop.f32.mrf.mxu0
        %2750 = vdwg.mxu0
        %2751 = vmatpush.bf16.msra.mxu0 0
        %2752 = vmatpush.bf16.msra.mxu0 0
        %2753 = vmatpush.bf16.msra.mxu0 0
        %2754 = vmatpush.bf16.msra.mxu0 0
        %2755 = vmatpush.bf16.msra.mxu0 0
        %2756 = vmatpush.bf16.msra.mxu0 0
        %2757 = vmatpush.bf16.msra.mxu0 0
        %2758 = vmatpush.bf16.msra.mxu0 %v2659
        %2759 = vmatmul.bf16.gmra.mxu0 %v2671
        %v2760 = vpop.f32.mrf.mxu0
        %v2761 = vadd.f32 0.0, %v2760
        %v2762 = vpop.f32.mrf.mxu0
        %2763 = vdwg.mxu0
        %2764 = vmatpush.bf16.msra.mxu0 0
        %2765 = vmatpush.bf16.msra.mxu0 0
        %2766 = vmatpush.bf16.msra.mxu0 0
        %2767 = vmatpush.bf16.msra.mxu0 0
        %2768 = vmatpush.bf16.msra.mxu0 0
        %2769 = vmatpush.bf16.msra.mxu0 0
        %2770 = vmatpush.bf16.msra.mxu0 0
        %2771 = vmatpush.bf16.msra.mxu0 %v2660
        %2772 = vmatmul.bf16.gmra.mxu0 %v2671
        %v2773 = vpop.f32.mrf.mxu0
        %v2774 = vadd.f32 0.0, %v2773
        %v2775 = vpop.f32.mrf.mxu0
        %2776 = vdwg.mxu0
        %v2777 = vadd.f32 %v2435, %v2683
        %v2778 = vadd.f32 %v2461, %v2696
        %v2779 = vadd.f32 %v2487, %v2709
        %v2780 = vadd.f32 %v2513, %v2722
        %v2781 = vadd.f32 %v2539, %v2735
        %v2782 = vadd.f32 %v2565, %v2748
        %v2783 = vadd.f32 %v2591, %v2761
        %v2784 = vadd.f32 %v2617, %v2774
        %v2785 = vld [vmem:[%s645] sm:$0xf]
        %v2786 = vld [vmem:[#allocation6] sm:$0xff]
        %v2787 = vld [vmem:[#allocation6 + $0x8] sm:$0xff]
        %v2788 = vld [vmem:[#allocation6 + $0x10] sm:$0xff]
        %v2789 = vld [vmem:[#allocation6 + $0x18] sm:$0xff]
        %v2790 = vld [vmem:[#allocation6 + $0x20] sm:$0xff]
        %v2791 = vld [vmem:[#allocation6 + $0x28] sm:$0xff]
        %v2792 = vld [vmem:[#allocation6 + $0x30] sm:$0xff]
        %v2793 = vld [vmem:[#allocation6 + $0x38] sm:$0xff]
        %v2802 = vunpack.c.l.b16 %v2786
        %v2803 = vunpack.c.h.b16 %v2786
        %v2804 = vunpack.c.l.b16 %v2787
        %v2805 = vunpack.c.h.b16 %v2787
        %v2806 = vunpack.c.l.b16 %v2788
        %v2807 = vunpack.c.h.b16 %v2788
        %v2808 = vunpack.c.l.b16 %v2789
        %v2809 = vunpack.c.h.b16 %v2789
        %v2810 = vunpack.c.l.b16 %v2790
        %v2811 = vunpack.c.h.b16 %v2790
        %v2812 = vunpack.c.l.b16 %v2791
        %v2813 = vunpack.c.h.b16 %v2791
        %v2814 = vunpack.c.l.b16 %v2792
        %v2815 = vunpack.c.h.b16 %v2792
        %v2816 = vunpack.c.l.b16 %v2793
        %v2817 = vunpack.c.h.b16 %v2793
        %v2818 = vpack.c.b16 %v2810, %v2802
        %v2819 = vpack.c.b16 %v2811, %v2803
        %v2820 = vpack.c.b16 %v2812, %v2804
        %v2821 = vpack.c.b16 %v2813, %v2805
        %v2822 = vpack.c.b16 %v2814, %v2806
        %v2823 = vpack.c.b16 %v2815, %v2807
        %v2824 = vpack.c.b16 %v2816, %v2808
        %v2825 = vpack.c.b16 %v2817, %v2809
        %v2835 = vsel %vm2669, %v2785, 0
        %2837 = vmatpush.bf16.msra.mxu0 0
        %2838 = vmatpush.bf16.msra.mxu0 0
        %2839 = vmatpush.bf16.msra.mxu0 0
        %2840 = vmatpush.bf16.msra.mxu0 0
        %2841 = vmatpush.bf16.msra.mxu0 0
        %2842 = vmatpush.bf16.msra.mxu0 0
        %2843 = vmatpush.bf16.msra.mxu0 0
        %2844 = vmatpush.bf16.msra.mxu0 %v2818
        %2845 = vmatmul.bf16.gmra.mxu0 %v2835
        %v2846 = vpop.f32.mrf.mxu0
        %v2847 = vadd.f32 0.0, %v2846
        %v2848 = vpop.f32.mrf.mxu0
        %2849 = vdwg.mxu0
        %2850 = vmatpush.bf16.msra.mxu0 0
        %2851 = vmatpush.bf16.msra.mxu0 0
        %2852 = vmatpush.bf16.msra.mxu0 0
        %2853 = vmatpush.bf16.msra.mxu0 0
        %2854 = vmatpush.bf16.msra.mxu0 0
        %2855 = vmatpush.bf16.msra.mxu0 0
        %2856 = vmatpush.bf16.msra.mxu0 0
        %2857 = vmatpush.bf16.msra.mxu0 %v2819
        %2858 = vmatmul.bf16.gmra.mxu0 %v2835
        %v2859 = vpop.f32.mrf.mxu0
        %v2860 = vadd.f32 0.0, %v2859
        %v2861 = vpop.f32.mrf.mxu0
        %2862 = vdwg.mxu0
        %2863 = vmatpush.bf16.msra.mxu0 0
        %2864 = vmatpush.bf16.msra.mxu0 0
        %2865 = vmatpush.bf16.msra.mxu0 0
        %2866 = vmatpush.bf16.msra.mxu0 0
        %2867 = vmatpush.bf16.msra.mxu0 0
        %2868 = vmatpush.bf16.msra.mxu0 0
        %2869 = vmatpush.bf16.msra.mxu0 0
        %2870 = vmatpush.bf16.msra.mxu0 %v2820
        %2871 = vmatmul.bf16.gmra.mxu0 %v2835
        %v2872 = vpop.f32.mrf.mxu0
        %v2873 = vadd.f32 0.0, %v2872
        %v2874 = vpop.f32.mrf.mxu0
        %2875 = vdwg.mxu0
        %2876 = vmatpush.bf16.msra.mxu0 0
        %2877 = vmatpush.bf16.msra.mxu0 0
        %2878 = vmatpush.bf16.msra.mxu0 0
        %2879 = vmatpush.bf16.msra.mxu0 0
        %2880 = vmatpush.bf16.msra.mxu0 0
        %2881 = vmatpush.bf16.msra.mxu0 0
        %2882 = vmatpush.bf16.msra.mxu0 0
        %2883 = vmatpush.bf16.msra.mxu0 %v2821
        %2884 = vmatmul.bf16.gmra.mxu0 %v2835
        %v2885 = vpop.f32.mrf.mxu0
        %v2886 = vadd.f32 0.0, %v2885
        %v2887 = vpop.f32.mrf.mxu0
        %2888 = vdwg.mxu0
        %2889 = vmatpush.bf16.msra.mxu0 0
        %2890 = vmatpush.bf16.msra.mxu0 0
        %2891 = vmatpush.bf16.msra.mxu0 0
        %2892 = vmatpush.bf16.msra.mxu0 0
        %2893 = vmatpush.bf16.msra.mxu0 0
        %2894 = vmatpush.bf16.msra.mxu0 0
        %2895 = vmatpush.bf16.msra.mxu0 0
        %2896 = vmatpush.bf16.msra.mxu0 %v2822
        %2897 = vmatmul.bf16.gmra.mxu0 %v2835
        %v2898 = vpop.f32.mrf.mxu0
        %v2899 = vadd.f32 0.0, %v2898
        %v2900 = vpop.f32.mrf.mxu0
        %2901 = vdwg.mxu0
        %2902 = vmatpush.bf16.msra.mxu0 0
        %2903 = vmatpush.bf16.msra.mxu0 0
        %2904 = vmatpush.bf16.msra.mxu0 0
        %2905 = vmatpush.bf16.msra.mxu0 0
        %2906 = vmatpush.bf16.msra.mxu0 0
        %2907 = vmatpush.bf16.msra.mxu0 0
        %2908 = vmatpush.bf16.msra.mxu0 0
        %2909 = vmatpush.bf16.msra.mxu0 %v2823
        %2910 = vmatmul.bf16.gmra.mxu0 %v2835
        %v2911 = vpop.f32.mrf.mxu0
        %v2912 = vadd.f32 0.0, %v2911
        %v2913 = vpop.f32.mrf.mxu0
        %2914 = vdwg.mxu0
        %2915 = vmatpush.bf16.msra.mxu0 0
        %2916 = vmatpush.bf16.msra.mxu0 0
        %2917 = vmatpush.bf16.msra.mxu0 0
        %2918 = vmatpush.bf16.msra.mxu0 0
        %2919 = vmatpush.bf16.msra.mxu0 0
        %2920 = vmatpush.bf16.msra.mxu0 0
        %2921 = vmatpush.bf16.msra.mxu0 0
        %2922 = vmatpush.bf16.msra.mxu0 %v2824
        %2923 = vmatmul.bf16.gmra.mxu0 %v2835
        %v2924 = vpop.f32.mrf.mxu0
        %v2925 = vadd.f32 0.0, %v2924
        %v2926 = vpop.f32.mrf.mxu0
        %2927 = vdwg.mxu0
        %2928 = vmatpush.bf16.msra.mxu0 0
        %2929 = vmatpush.bf16.msra.mxu0 0
        %2930 = vmatpush.bf16.msra.mxu0 0
        %2931 = vmatpush.bf16.msra.mxu0 0
        %2932 = vmatpush.bf16.msra.mxu0 0
        %2933 = vmatpush.bf16.msra.mxu0 0
        %2934 = vmatpush.bf16.msra.mxu0 0
        %2935 = vmatpush.bf16.msra.mxu0 %v2825
        %2936 = vmatmul.bf16.gmra.mxu0 %v2835
        %v2937 = vpop.f32.mrf.mxu0
        %v2938 = vadd.f32 0.0, %v2937
        %v2939 = vpop.f32.mrf.mxu0
        %2940 = vdwg.mxu0
        %v2941 = vadd.f32 %v2777, %v2847
        %v2942 = vadd.f32 %v2778, %v2860
        %v2943 = vadd.f32 %v2779, %v2873
        %v2944 = vadd.f32 %v2780, %v2886
        %v2945 = vadd.f32 %v2781, %v2899
        %v2946 = vadd.f32 %v2782, %v2912
        %v2947 = vadd.f32 %v2783, %v2925
        %v2948 = vadd.f32 %v2784, %v2938
        %v2949 = vld [vmem:[%s9] sm:$0xff]
        %v2951 = vperm.slane %v2949, 0
        %v2952 = vperm.slane %v2949, 1
        %v2953 = vperm.slane %v2949, 2
        %v2954 = vperm.slane %v2949, 3
        %v2955 = vperm.slane %v2949, 4
        %v2956 = vperm.slane %v2949, 5
        %v2957 = vperm.slane %v2949, 6
        %v2958 = vperm.slane %v2949, 7
        %v2967 = vadd.f32 %v2941, %v2951
        %v2968 = vadd.f32 %v2942, %v2952
        %v2969 = vadd.f32 %v2943, %v2953
        %v2970 = vadd.f32 %v2944, %v2954
        %v2971 = vadd.f32 %v2945, %v2955
        %v2972 = vadd.f32 %v2946, %v2956
        %v2973 = vadd.f32 %v2947, %v2957
        %v2974 = vadd.f32 %v2948, %v2958
        %vm2975 = vcmp.ge.f32.partialorder %v2967, 0.0
        %vm2976 = vcmp.ge.f32.partialorder %v2968, 0.0
        %vm2977 = vcmp.ge.f32.partialorder %v2969, 0.0
        %vm2978 = vcmp.ge.f32.partialorder %v2970, 0.0
        %vm2979 = vcmp.ge.f32.partialorder %v2971, 0.0
        %vm2980 = vcmp.ge.f32.partialorder %v2972, 0.0
        %vm2981 = vcmp.ge.f32.partialorder %v2973, 0.0
        %vm2982 = vcmp.ge.f32.partialorder %v2974, 0.0
        %v2983 = vmul.f32 %v2967, 0.2
        %v2984 = vmul.f32 %v2968, 0.2
        %v2985 = vmul.f32 %v2969, 0.2
        %v2986 = vmul.f32 %v2970, 0.2
        %v2987 = vmul.f32 %v2971, 0.2
        %v2988 = vmul.f32 %v2972, 0.2
        %v2989 = vmul.f32 %v2973, 0.2
        %v2990 = vmul.f32 %v2974, 0.2
        %v2991 = vsel %vm2975, %v2967, %v2983
        %v2992 = vsel %vm2976, %v2968, %v2984
        %v2993 = vsel %vm2977, %v2969, %v2985
        %v2994 = vsel %vm2978, %v2970, %v2986
        %v2995 = vsel %vm2979, %v2971, %v2987
        %v2996 = vsel %vm2980, %v2972, %v2988
        %v2997 = vsel %vm2981, %v2973, %v2989
        %v2998 = vsel %vm2982, %v2974, %v2990
        %v2999 = vpack.c.bf16 %v2991, %v2991
        %v3000 = vpack.c.bf16 %v2992, %v2992
        %v3001 = vpack.c.bf16 %v2993, %v2993
        %v3002 = vpack.c.bf16 %v2994, %v2994
        %v3003 = vpack.c.bf16 %v2995, %v2995
        %v3004 = vpack.c.bf16 %v2996, %v2996
        %v3005 = vpack.c.bf16 %v2997, %v2997
        %v3006 = vpack.c.bf16 %v2998, %v2998
        %v3007 = vld [vmem:[#allocation8] sm:$0xff]
        %v3008 = vld [vmem:[#allocation8 + $0x8] sm:$0xff]
        %v3009 = vld [vmem:[#allocation8 + $0x10] sm:$0xff]
        %v3010 = vld [vmem:[#allocation8 + $0x18] sm:$0xff]
        %v3011 = vld [vmem:[#allocation8 + $0x20] sm:$0xff]
        %v3012 = vld [vmem:[#allocation8 + $0x28] sm:$0xff]
        %v3013 = vld [vmem:[#allocation8 + $0x30] sm:$0xff]
        %v3014 = vld [vmem:[#allocation8 + $0x38] sm:$0xff]
        %v3015 = vld [vmem:[#allocation8 + $0x40] sm:$0xff]
        %v3016 = vld [vmem:[#allocation8 + $0x48] sm:$0xff]
        %v3017 = vld [vmem:[#allocation8 + $0x50] sm:$0xff]
        %v3018 = vld [vmem:[#allocation8 + $0x58] sm:$0xff]
        %v3019 = vld [vmem:[#allocation8 + $0x60] sm:$0xff]
        %v3020 = vld [vmem:[#allocation8 + $0x68] sm:$0xff]
        %v3021 = vld [vmem:[#allocation8 + $0x70] sm:$0xff]
        %v3022 = vld [vmem:[#allocation8 + $0x78] sm:$0xff]
        %v3023 = vld [vmem:[#allocation8 + $0x80] sm:$0xff]
        %v3024 = vld [vmem:[#allocation8 + $0x88] sm:$0xff]
        %v3025 = vld [vmem:[#allocation8 + $0x90] sm:$0xff]
        %v3026 = vld [vmem:[#allocation8 + $0x98] sm:$0xff]
        %v3027 = vld [vmem:[#allocation8 + $0xa0] sm:$0xff]
        %v3028 = vld [vmem:[#allocation8 + $0xa8] sm:$0xff]
        %v3029 = vld [vmem:[#allocation8 + $0xb0] sm:$0xff]
        %v3030 = vld [vmem:[#allocation8 + $0xb8] sm:$0xff]
        %v3031 = vld [vmem:[#allocation8 + $0xc0] sm:$0xff]
        %v3032 = vld [vmem:[#allocation8 + $0xc8] sm:$0xff]
        %v3033 = vld [vmem:[#allocation8 + $0xd0] sm:$0xff]
        %v3034 = vld [vmem:[#allocation8 + $0xd8] sm:$0xff]
        %v3035 = vld [vmem:[#allocation8 + $0xe0] sm:$0xff]
        %v3036 = vld [vmem:[#allocation8 + $0xe8] sm:$0xff]
        %v3037 = vld [vmem:[#allocation8 + $0xf0] sm:$0xff]
        %v3038 = vld [vmem:[#allocation8 + $0xf8] sm:$0xff]
        %v3039 = vld [vmem:[#allocation8 + $0x100] sm:$0xff]
        %v3040 = vld [vmem:[#allocation8 + $0x108] sm:$0xff]
        %v3041 = vld [vmem:[#allocation8 + $0x110] sm:$0xff]
        %v3042 = vld [vmem:[#allocation8 + $0x118] sm:$0xff]
        %v3043 = vld [vmem:[#allocation8 + $0x120] sm:$0xff]
        %v3044 = vld [vmem:[#allocation8 + $0x128] sm:$0xff]
        %v3045 = vld [vmem:[#allocation8 + $0x130] sm:$0xff]
        %v3046 = vld [vmem:[#allocation8 + $0x138] sm:$0xff]
        %v3047 = vld [vmem:[#allocation8 + $0x140] sm:$0xff]
        %v3048 = vld [vmem:[#allocation8 + $0x148] sm:$0xff]
        %v3049 = vld [vmem:[#allocation8 + $0x150] sm:$0xff]
        %v3050 = vld [vmem:[#allocation8 + $0x158] sm:$0xff]
        %v3051 = vld [vmem:[#allocation8 + $0x160] sm:$0xff]
        %v3052 = vld [vmem:[#allocation8 + $0x168] sm:$0xff]
        %v3053 = vld [vmem:[#allocation8 + $0x170] sm:$0xff]
        %v3054 = vld [vmem:[#allocation8 + $0x178] sm:$0xff]
        %v3055 = vld [vmem:[#allocation8 + $0x180] sm:$0xff]
        %v3056 = vld [vmem:[#allocation8 + $0x188] sm:$0xff]
        %v3057 = vld [vmem:[#allocation8 + $0x190] sm:$0xff]
        %v3058 = vld [vmem:[#allocation8 + $0x198] sm:$0xff]
        %v3059 = vld [vmem:[#allocation8 + $0x1a0] sm:$0xff]
        %v3060 = vld [vmem:[#allocation8 + $0x1a8] sm:$0xff]
        %v3061 = vld [vmem:[#allocation8 + $0x1b0] sm:$0xff]
        %v3062 = vld [vmem:[#allocation8 + $0x1b8] sm:$0xff]
        %v3063 = vld [vmem:[#allocation8 + $0x1c0] sm:$0xff]
        %v3064 = vld [vmem:[#allocation8 + $0x1c8] sm:$0xff]
        %v3065 = vld [vmem:[#allocation8 + $0x1d0] sm:$0xff]
        %v3066 = vld [vmem:[#allocation8 + $0x1d8] sm:$0xff]
        %v3067 = vld [vmem:[#allocation8 + $0x1e0] sm:$0xff]
        %v3068 = vld [vmem:[#allocation8 + $0x1e8] sm:$0xff]
        %v3069 = vld [vmem:[#allocation8 + $0x1f0] sm:$0xff]
        %v3070 = vld [vmem:[#allocation8 + $0x1f8] sm:$0xff]
        %v3071 = vld [vmem:[#allocation8 + $0x200] sm:$0xff]
        %v3072 = vld [vmem:[#allocation8 + $0x208] sm:$0xff]
        %v3073 = vld [vmem:[#allocation8 + $0x210] sm:$0xff]
        %v3074 = vld [vmem:[#allocation8 + $0x218] sm:$0xff]
        %v3075 = vld [vmem:[#allocation8 + $0x220] sm:$0xff]
        %v3076 = vld [vmem:[#allocation8 + $0x228] sm:$0xff]
        %v3077 = vld [vmem:[#allocation8 + $0x230] sm:$0xff]
        %v3078 = vld [vmem:[#allocation8 + $0x238] sm:$0xff]
        %v3079 = vld [vmem:[#allocation8 + $0x240] sm:$0xff]
        %v3080 = vld [vmem:[#allocation8 + $0x248] sm:$0xff]
        %v3081 = vld [vmem:[#allocation8 + $0x250] sm:$0xff]
        %v3082 = vld [vmem:[#allocation8 + $0x258] sm:$0xff]
        %v3083 = vld [vmem:[#allocation8 + $0x260] sm:$0xff]
        %v3084 = vld [vmem:[#allocation8 + $0x268] sm:$0xff]
        %v3085 = vld [vmem:[#allocation8 + $0x270] sm:$0xff]
        %v3086 = vld [vmem:[#allocation8 + $0x278] sm:$0xff]
        %v3087 = vld [vmem:[#allocation8 + $0x280] sm:$0xff]
        %v3088 = vld [vmem:[#allocation8 + $0x288] sm:$0xff]
        %v3089 = vld [vmem:[#allocation8 + $0x290] sm:$0xff]
        %v3090 = vld [vmem:[#allocation8 + $0x298] sm:$0xff]
        %v3091 = vld [vmem:[#allocation8 + $0x2a0] sm:$0xff]
        %v3092 = vld [vmem:[#allocation8 + $0x2a8] sm:$0xff]
        %v3093 = vld [vmem:[#allocation8 + $0x2b0] sm:$0xff]
        %v3094 = vld [vmem:[#allocation8 + $0x2b8] sm:$0xff]
        %v3095 = vld [vmem:[#allocation8 + $0x2c0] sm:$0xff]
        %v3096 = vld [vmem:[#allocation8 + $0x2c8] sm:$0xff]
        %v3097 = vld [vmem:[#allocation8 + $0x2d0] sm:$0xff]
        %v3098 = vld [vmem:[#allocation8 + $0x2d8] sm:$0xff]
        %v3099 = vld [vmem:[#allocation8 + $0x2e0] sm:$0xff]
        %v3100 = vld [vmem:[#allocation8 + $0x2e8] sm:$0xff]
        %v3101 = vld [vmem:[#allocation8 + $0x2f0] sm:$0xff]
        %v3102 = vld [vmem:[#allocation8 + $0x2f8] sm:$0xff]
        %v3103 = vld [vmem:[#allocation8 + $0x300] sm:$0xff]
        %v3104 = vld [vmem:[#allocation8 + $0x308] sm:$0xff]
        %v3105 = vld [vmem:[#allocation8 + $0x310] sm:$0xff]
        %v3106 = vld [vmem:[#allocation8 + $0x318] sm:$0xff]
        %v3107 = vld [vmem:[#allocation8 + $0x320] sm:$0xff]
        %v3108 = vld [vmem:[#allocation8 + $0x328] sm:$0xff]
        %v3109 = vld [vmem:[#allocation8 + $0x330] sm:$0xff]
        %v3110 = vld [vmem:[#allocation8 + $0x338] sm:$0xff]
        %v3111 = vld [vmem:[#allocation8 + $0x340] sm:$0xff]
        %v3112 = vld [vmem:[#allocation8 + $0x348] sm:$0xff]
        %v3113 = vld [vmem:[#allocation8 + $0x350] sm:$0xff]
        %v3114 = vld [vmem:[#allocation8 + $0x358] sm:$0xff]
        %v3115 = vld [vmem:[#allocation8 + $0x360] sm:$0xff]
        %v3116 = vld [vmem:[#allocation8 + $0x368] sm:$0xff]
        %v3117 = vld [vmem:[#allocation8 + $0x370] sm:$0xff]
        %v3118 = vld [vmem:[#allocation8 + $0x378] sm:$0xff]
        %v3119 = vld [vmem:[#allocation8 + $0x380] sm:$0xff]
        %v3120 = vld [vmem:[#allocation8 + $0x388] sm:$0xff]
        %v3121 = vld [vmem:[#allocation8 + $0x390] sm:$0xff]
        %v3122 = vld [vmem:[#allocation8 + $0x398] sm:$0xff]
        %v3123 = vld [vmem:[#allocation8 + $0x3a0] sm:$0xff]
        %v3124 = vld [vmem:[#allocation8 + $0x3a8] sm:$0xff]
        %v3125 = vld [vmem:[#allocation8 + $0x3b0] sm:$0xff]
        %v3126 = vld [vmem:[#allocation8 + $0x3b8] sm:$0xff]
        %v3127 = vld [vmem:[#allocation8 + $0x3c0] sm:$0xff]
        %v3128 = vld [vmem:[#allocation8 + $0x3c8] sm:$0xff]
        %v3129 = vld [vmem:[#allocation8 + $0x3d0] sm:$0xff]
        %v3130 = vld [vmem:[#allocation8 + $0x3d8] sm:$0xff]
        %v3131 = vld [vmem:[#allocation8 + $0x3e0] sm:$0xff]
        %v3132 = vld [vmem:[#allocation8 + $0x3e8] sm:$0xff]
        %v3133 = vld [vmem:[#allocation8 + $0x3f0] sm:$0xff]
        %v3134 = vld [vmem:[#allocation8 + $0x3f8] sm:$0xff]
        %v3135 = vld [vmem:[%s11] sm:$0x3]
        %v3137 = vperm.slane %v3135, 0
        %v3138 = vperm.slane %v3135, 1
        %v3269 = vunpack.c.l.b16 %v3007
        %v3270 = vunpack.c.h.b16 %v3007
        %v3271 = vunpack.c.l.b16 %v3008
        %v3272 = vunpack.c.h.b16 %v3008
        %v3273 = vunpack.c.l.b16 %v3009
        %v3274 = vunpack.c.h.b16 %v3009
        %v3275 = vunpack.c.l.b16 %v3010
        %v3276 = vunpack.c.h.b16 %v3010
        %v3277 = vunpack.c.l.b16 %v3011
        %v3278 = vunpack.c.h.b16 %v3011
        %v3279 = vunpack.c.l.b16 %v3012
        %v3280 = vunpack.c.h.b16 %v3012
        %v3281 = vunpack.c.l.b16 %v3013
        %v3282 = vunpack.c.h.b16 %v3013
        %v3283 = vunpack.c.l.b16 %v3014
        %v3284 = vunpack.c.h.b16 %v3014
        %v3285 = vunpack.c.l.b16 %v3015
        %v3286 = vunpack.c.h.b16 %v3015
        %v3287 = vunpack.c.l.b16 %v3016
        %v3288 = vunpack.c.h.b16 %v3016
        %v3289 = vunpack.c.l.b16 %v3017
        %v3290 = vunpack.c.h.b16 %v3017
        %v3291 = vunpack.c.l.b16 %v3018
        %v3292 = vunpack.c.h.b16 %v3018
        %v3293 = vunpack.c.l.b16 %v3019
        %v3294 = vunpack.c.h.b16 %v3019
        %v3295 = vunpack.c.l.b16 %v3020
        %v3296 = vunpack.c.h.b16 %v3020
        %v3297 = vunpack.c.l.b16 %v3021
        %v3298 = vunpack.c.h.b16 %v3021
        %v3299 = vunpack.c.l.b16 %v3022
        %v3300 = vunpack.c.h.b16 %v3022
        %v3301 = vunpack.c.l.b16 %v3023
        %v3302 = vunpack.c.h.b16 %v3023
        %v3303 = vunpack.c.l.b16 %v3024
        %v3304 = vunpack.c.h.b16 %v3024
        %v3305 = vunpack.c.l.b16 %v3025
        %v3306 = vunpack.c.h.b16 %v3025
        %v3307 = vunpack.c.l.b16 %v3026
        %v3308 = vunpack.c.h.b16 %v3026
        %v3309 = vunpack.c.l.b16 %v3027
        %v3310 = vunpack.c.h.b16 %v3027
        %v3311 = vunpack.c.l.b16 %v3028
        %v3312 = vunpack.c.h.b16 %v3028
        %v3313 = vunpack.c.l.b16 %v3029
        %v3314 = vunpack.c.h.b16 %v3029
        %v3315 = vunpack.c.l.b16 %v3030
        %v3316 = vunpack.c.h.b16 %v3030
        %v3317 = vunpack.c.l.b16 %v3031
        %v3318 = vunpack.c.h.b16 %v3031
        %v3319 = vunpack.c.l.b16 %v3032
        %v3320 = vunpack.c.h.b16 %v3032
        %v3321 = vunpack.c.l.b16 %v3033
        %v3322 = vunpack.c.h.b16 %v3033
        %v3323 = vunpack.c.l.b16 %v3034
        %v3324 = vunpack.c.h.b16 %v3034
        %v3325 = vunpack.c.l.b16 %v3035
        %v3326 = vunpack.c.h.b16 %v3035
        %v3327 = vunpack.c.l.b16 %v3036
        %v3328 = vunpack.c.h.b16 %v3036
        %v3329 = vunpack.c.l.b16 %v3037
        %v3330 = vunpack.c.h.b16 %v3037
        %v3331 = vunpack.c.l.b16 %v3038
        %v3332 = vunpack.c.h.b16 %v3038
        %v3333 = vunpack.c.l.b16 %v3039
        %v3334 = vunpack.c.h.b16 %v3039
        %v3335 = vunpack.c.l.b16 %v3040
        %v3336 = vunpack.c.h.b16 %v3040
        %v3337 = vunpack.c.l.b16 %v3041
        %v3338 = vunpack.c.h.b16 %v3041
        %v3339 = vunpack.c.l.b16 %v3042
        %v3340 = vunpack.c.h.b16 %v3042
        %v3341 = vunpack.c.l.b16 %v3043
        %v3342 = vunpack.c.h.b16 %v3043
        %v3343 = vunpack.c.l.b16 %v3044
        %v3344 = vunpack.c.h.b16 %v3044
        %v3345 = vunpack.c.l.b16 %v3045
        %v3346 = vunpack.c.h.b16 %v3045
        %v3347 = vunpack.c.l.b16 %v3046
        %v3348 = vunpack.c.h.b16 %v3046
        %v3349 = vunpack.c.l.b16 %v3047
        %v3350 = vunpack.c.h.b16 %v3047
        %v3351 = vunpack.c.l.b16 %v3048
        %v3352 = vunpack.c.h.b16 %v3048
        %v3353 = vunpack.c.l.b16 %v3049
        %v3354 = vunpack.c.h.b16 %v3049
        %v3355 = vunpack.c.l.b16 %v3050
        %v3356 = vunpack.c.h.b16 %v3050
        %v3357 = vunpack.c.l.b16 %v3051
        %v3358 = vunpack.c.h.b16 %v3051
        %v3359 = vunpack.c.l.b16 %v3052
        %v3360 = vunpack.c.h.b16 %v3052
        %v3361 = vunpack.c.l.b16 %v3053
        %v3362 = vunpack.c.h.b16 %v3053
        %v3363 = vunpack.c.l.b16 %v3054
        %v3364 = vunpack.c.h.b16 %v3054
        %v3365 = vunpack.c.l.b16 %v3055
        %v3366 = vunpack.c.h.b16 %v3055
        %v3367 = vunpack.c.l.b16 %v3056
        %v3368 = vunpack.c.h.b16 %v3056
        %v3369 = vunpack.c.l.b16 %v3057
        %v3370 = vunpack.c.h.b16 %v3057
        %v3371 = vunpack.c.l.b16 %v3058
        %v3372 = vunpack.c.h.b16 %v3058
        %v3373 = vunpack.c.l.b16 %v3059
        %v3374 = vunpack.c.h.b16 %v3059
        %v3375 = vunpack.c.l.b16 %v3060
        %v3376 = vunpack.c.h.b16 %v3060
        %v3377 = vunpack.c.l.b16 %v3061
        %v3378 = vunpack.c.h.b16 %v3061
        %v3379 = vunpack.c.l.b16 %v3062
        %v3380 = vunpack.c.h.b16 %v3062
        %v3381 = vunpack.c.l.b16 %v3063
        %v3382 = vunpack.c.h.b16 %v3063
        %v3383 = vunpack.c.l.b16 %v3064
        %v3384 = vunpack.c.h.b16 %v3064
        %v3385 = vunpack.c.l.b16 %v3065
        %v3386 = vunpack.c.h.b16 %v3065
        %v3387 = vunpack.c.l.b16 %v3066
        %v3388 = vunpack.c.h.b16 %v3066
        %v3389 = vunpack.c.l.b16 %v3067
        %v3390 = vunpack.c.h.b16 %v3067
        %v3391 = vunpack.c.l.b16 %v3068
        %v3392 = vunpack.c.h.b16 %v3068
        %v3393 = vunpack.c.l.b16 %v3069
        %v3394 = vunpack.c.h.b16 %v3069
        %v3395 = vunpack.c.l.b16 %v3070
        %v3396 = vunpack.c.h.b16 %v3070
        %v3397 = vunpack.c.l.b16 %v3071
        %v3398 = vunpack.c.h.b16 %v3071
        %v3399 = vunpack.c.l.b16 %v3072
        %v3400 = vunpack.c.h.b16 %v3072
        %v3401 = vunpack.c.l.b16 %v3073
        %v3402 = vunpack.c.h.b16 %v3073
        %v3403 = vunpack.c.l.b16 %v3074
        %v3404 = vunpack.c.h.b16 %v3074
        %v3405 = vunpack.c.l.b16 %v3075
        %v3406 = vunpack.c.h.b16 %v3075
        %v3407 = vunpack.c.l.b16 %v3076
        %v3408 = vunpack.c.h.b16 %v3076
        %v3409 = vunpack.c.l.b16 %v3077
        %v3410 = vunpack.c.h.b16 %v3077
        %v3411 = vunpack.c.l.b16 %v3078
        %v3412 = vunpack.c.h.b16 %v3078
        %v3413 = vunpack.c.l.b16 %v3079
        %v3414 = vunpack.c.h.b16 %v3079
        %v3415 = vunpack.c.l.b16 %v3080
        %v3416 = vunpack.c.h.b16 %v3080
        %v3417 = vunpack.c.l.b16 %v3081
        %v3418 = vunpack.c.h.b16 %v3081
        %v3419 = vunpack.c.l.b16 %v3082
        %v3420 = vunpack.c.h.b16 %v3082
        %v3421 = vunpack.c.l.b16 %v3083
        %v3422 = vunpack.c.h.b16 %v3083
        %v3423 = vunpack.c.l.b16 %v3084
        %v3424 = vunpack.c.h.b16 %v3084
        %v3425 = vunpack.c.l.b16 %v3085
        %v3426 = vunpack.c.h.b16 %v3085
        %v3427 = vunpack.c.l.b16 %v3086
        %v3428 = vunpack.c.h.b16 %v3086
        %v3429 = vunpack.c.l.b16 %v3087
        %v3430 = vunpack.c.h.b16 %v3087
        %v3431 = vunpack.c.l.b16 %v3088
        %v3432 = vunpack.c.h.b16 %v3088
        %v3433 = vunpack.c.l.b16 %v3089
        %v3434 = vunpack.c.h.b16 %v3089
        %v3435 = vunpack.c.l.b16 %v3090
        %v3436 = vunpack.c.h.b16 %v3090
        %v3437 = vunpack.c.l.b16 %v3091
        %v3438 = vunpack.c.h.b16 %v3091
        %v3439 = vunpack.c.l.b16 %v3092
        %v3440 = vunpack.c.h.b16 %v3092
        %v3441 = vunpack.c.l.b16 %v3093
        %v3442 = vunpack.c.h.b16 %v3093
        %v3443 = vunpack.c.l.b16 %v3094
        %v3444 = vunpack.c.h.b16 %v3094
        %v3445 = vunpack.c.l.b16 %v3095
        %v3446 = vunpack.c.h.b16 %v3095
        %v3447 = vunpack.c.l.b16 %v3096
        %v3448 = vunpack.c.h.b16 %v3096
        %v3449 = vunpack.c.l.b16 %v3097
        %v3450 = vunpack.c.h.b16 %v3097
        %v3451 = vunpack.c.l.b16 %v3098
        %v3452 = vunpack.c.h.b16 %v3098
        %v3453 = vunpack.c.l.b16 %v3099
        %v3454 = vunpack.c.h.b16 %v3099
        %v3455 = vunpack.c.l.b16 %v3100
        %v3456 = vunpack.c.h.b16 %v3100
        %v3457 = vunpack.c.l.b16 %v3101
        %v3458 = vunpack.c.h.b16 %v3101
        %v3459 = vunpack.c.l.b16 %v3102
        %v3460 = vunpack.c.h.b16 %v3102
        %v3461 = vunpack.c.l.b16 %v3103
        %v3462 = vunpack.c.h.b16 %v3103
        %v3463 = vunpack.c.l.b16 %v3104
        %v3464 = vunpack.c.h.b16 %v3104
        %v3465 = vunpack.c.l.b16 %v3105
        %v3466 = vunpack.c.h.b16 %v3105
        %v3467 = vunpack.c.l.b16 %v3106
        %v3468 = vunpack.c.h.b16 %v3106
        %v3469 = vunpack.c.l.b16 %v3107
        %v3470 = vunpack.c.h.b16 %v3107
        %v3471 = vunpack.c.l.b16 %v3108
        %v3472 = vunpack.c.h.b16 %v3108
        %v3473 = vunpack.c.l.b16 %v3109
        %v3474 = vunpack.c.h.b16 %v3109
        %v3475 = vunpack.c.l.b16 %v3110
        %v3476 = vunpack.c.h.b16 %v3110
        %v3477 = vunpack.c.l.b16 %v3111
        %v3478 = vunpack.c.h.b16 %v3111
        %v3479 = vunpack.c.l.b16 %v3112
        %v3480 = vunpack.c.h.b16 %v3112
        %v3481 = vunpack.c.l.b16 %v3113
        %v3482 = vunpack.c.h.b16 %v3113
        %v3483 = vunpack.c.l.b16 %v3114
        %v3484 = vunpack.c.h.b16 %v3114
        %v3485 = vunpack.c.l.b16 %v3115
        %v3486 = vunpack.c.h.b16 %v3115
        %v3487 = vunpack.c.l.b16 %v3116
        %v3488 = vunpack.c.h.b16 %v3116
        %v3489 = vunpack.c.l.b16 %v3117
        %v3490 = vunpack.c.h.b16 %v3117
        %v3491 = vunpack.c.l.b16 %v3118
        %v3492 = vunpack.c.h.b16 %v3118
        %v3493 = vunpack.c.l.b16 %v3119
        %v3494 = vunpack.c.h.b16 %v3119
        %v3495 = vunpack.c.l.b16 %v3120
        %v3496 = vunpack.c.h.b16 %v3120
        %v3497 = vunpack.c.l.b16 %v3121
        %v3498 = vunpack.c.h.b16 %v3121
        %v3499 = vunpack.c.l.b16 %v3122
        %v3500 = vunpack.c.h.b16 %v3122
        %v3501 = vunpack.c.l.b16 %v3123
        %v3502 = vunpack.c.h.b16 %v3123
        %v3503 = vunpack.c.l.b16 %v3124
        %v3504 = vunpack.c.h.b16 %v3124
        %v3505 = vunpack.c.l.b16 %v3125
        %v3506 = vunpack.c.h.b16 %v3125
        %v3507 = vunpack.c.l.b16 %v3126
        %v3508 = vunpack.c.h.b16 %v3126
        %v3509 = vunpack.c.l.b16 %v3127
        %v3510 = vunpack.c.h.b16 %v3127
        %v3511 = vunpack.c.l.b16 %v3128
        %v3512 = vunpack.c.h.b16 %v3128
        %v3513 = vunpack.c.l.b16 %v3129
        %v3514 = vunpack.c.h.b16 %v3129
        %v3515 = vunpack.c.l.b16 %v3130
        %v3516 = vunpack.c.h.b16 %v3130
        %v3517 = vunpack.c.l.b16 %v3131
        %v3518 = vunpack.c.h.b16 %v3131
        %v3519 = vunpack.c.l.b16 %v3132
        %v3520 = vunpack.c.h.b16 %v3132
        %v3521 = vunpack.c.l.b16 %v3133
        %v3522 = vunpack.c.h.b16 %v3133
        %v3523 = vunpack.c.l.b16 %v3134
        %v3524 = vunpack.c.h.b16 %v3134
        %v3525 = vpack.c.b16 %v3271, %v3269
        %v3526 = vpack.c.b16 %v3272, %v3270
        %v3527 = vpack.c.b16 %v3275, %v3273
        %v3528 = vpack.c.b16 %v3276, %v3274
        %v3529 = vpack.c.b16 %v3279, %v3277
        %v3530 = vpack.c.b16 %v3280, %v3278
        %v3531 = vpack.c.b16 %v3283, %v3281
        %v3532 = vpack.c.b16 %v3284, %v3282
        %v3533 = vpack.c.b16 %v3287, %v3285
        %v3534 = vpack.c.b16 %v3288, %v3286
        %v3535 = vpack.c.b16 %v3291, %v3289
        %v3536 = vpack.c.b16 %v3292, %v3290
        %v3537 = vpack.c.b16 %v3295, %v3293
        %v3538 = vpack.c.b16 %v3296, %v3294
        %v3539 = vpack.c.b16 %v3299, %v3297
        %v3540 = vpack.c.b16 %v3300, %v3298
        %v3541 = vpack.c.b16 %v3303, %v3301
        %v3542 = vpack.c.b16 %v3304, %v3302
        %v3543 = vpack.c.b16 %v3307, %v3305
        %v3544 = vpack.c.b16 %v3308, %v3306
        %v3545 = vpack.c.b16 %v3311, %v3309
        %v3546 = vpack.c.b16 %v3312, %v3310
        %v3547 = vpack.c.b16 %v3315, %v3313
        %v3548 = vpack.c.b16 %v3316, %v3314
        %v3549 = vpack.c.b16 %v3319, %v3317
        %v3550 = vpack.c.b16 %v3320, %v3318
        %v3551 = vpack.c.b16 %v3323, %v3321
        %v3552 = vpack.c.b16 %v3324, %v3322
        %v3553 = vpack.c.b16 %v3327, %v3325
        %v3554 = vpack.c.b16 %v3328, %v3326
        %v3555 = vpack.c.b16 %v3331, %v3329
        %v3556 = vpack.c.b16 %v3332, %v3330
        %v3557 = vpack.c.b16 %v3335, %v3333
        %v3558 = vpack.c.b16 %v3336, %v3334
        %v3559 = vpack.c.b16 %v3339, %v3337
        %v3560 = vpack.c.b16 %v3340, %v3338
        %v3561 = vpack.c.b16 %v3343, %v3341
        %v3562 = vpack.c.b16 %v3344, %v3342
        %v3563 = vpack.c.b16 %v3347, %v3345
        %v3564 = vpack.c.b16 %v3348, %v3346
        %v3565 = vpack.c.b16 %v3351, %v3349
        %v3566 = vpack.c.b16 %v3352, %v3350
        %v3567 = vpack.c.b16 %v3355, %v3353
        %v3568 = vpack.c.b16 %v3356, %v3354
        %v3569 = vpack.c.b16 %v3359, %v3357
        %v3570 = vpack.c.b16 %v3360, %v3358
        %v3571 = vpack.c.b16 %v3363, %v3361
        %v3572 = vpack.c.b16 %v3364, %v3362
        %v3573 = vpack.c.b16 %v3367, %v3365
        %v3574 = vpack.c.b16 %v3368, %v3366
        %v3575 = vpack.c.b16 %v3371, %v3369
        %v3576 = vpack.c.b16 %v3372, %v3370
        %v3577 = vpack.c.b16 %v3375, %v3373
        %v3578 = vpack.c.b16 %v3376, %v3374
        %v3579 = vpack.c.b16 %v3379, %v3377
        %v3580 = vpack.c.b16 %v3380, %v3378
        %v3581 = vpack.c.b16 %v3383, %v3381
        %v3582 = vpack.c.b16 %v3384, %v3382
        %v3583 = vpack.c.b16 %v3387, %v3385
        %v3584 = vpack.c.b16 %v3388, %v3386
        %v3585 = vpack.c.b16 %v3391, %v3389
        %v3586 = vpack.c.b16 %v3392, %v3390
        %v3587 = vpack.c.b16 %v3395, %v3393
        %v3588 = vpack.c.b16 %v3396, %v3394
        %v3589 = vpack.c.b16 %v3399, %v3397
        %v3590 = vpack.c.b16 %v3400, %v3398
        %v3591 = vpack.c.b16 %v3403, %v3401
        %v3592 = vpack.c.b16 %v3404, %v3402
        %v3593 = vpack.c.b16 %v3407, %v3405
        %v3594 = vpack.c.b16 %v3408, %v3406
        %v3595 = vpack.c.b16 %v3411, %v3409
        %v3596 = vpack.c.b16 %v3412, %v3410
        %v3597 = vpack.c.b16 %v3415, %v3413
        %v3598 = vpack.c.b16 %v3416, %v3414
        %v3599 = vpack.c.b16 %v3419, %v3417
        %v3600 = vpack.c.b16 %v3420, %v3418
        %v3601 = vpack.c.b16 %v3423, %v3421
        %v3602 = vpack.c.b16 %v3424, %v3422
        %v3603 = vpack.c.b16 %v3427, %v3425
        %v3604 = vpack.c.b16 %v3428, %v3426
        %v3605 = vpack.c.b16 %v3431, %v3429
        %v3606 = vpack.c.b16 %v3432, %v3430
        %v3607 = vpack.c.b16 %v3435, %v3433
        %v3608 = vpack.c.b16 %v3436, %v3434
        %v3609 = vpack.c.b16 %v3439, %v3437
        %v3610 = vpack.c.b16 %v3440, %v3438
        %v3611 = vpack.c.b16 %v3443, %v3441
        %v3612 = vpack.c.b16 %v3444, %v3442
        %v3613 = vpack.c.b16 %v3447, %v3445
        %v3614 = vpack.c.b16 %v3448, %v3446
        %v3615 = vpack.c.b16 %v3451, %v3449
        %v3616 = vpack.c.b16 %v3452, %v3450
        %v3617 = vpack.c.b16 %v3455, %v3453
        %v3618 = vpack.c.b16 %v3456, %v3454
        %v3619 = vpack.c.b16 %v3459, %v3457
        %v3620 = vpack.c.b16 %v3460, %v3458
        %v3621 = vpack.c.b16 %v3463, %v3461
        %v3622 = vpack.c.b16 %v3464, %v3462
        %v3623 = vpack.c.b16 %v3467, %v3465
        %v3624 = vpack.c.b16 %v3468, %v3466
        %v3625 = vpack.c.b16 %v3471, %v3469
        %v3626 = vpack.c.b16 %v3472, %v3470
        %v3627 = vpack.c.b16 %v3475, %v3473
        %v3628 = vpack.c.b16 %v3476, %v3474
        %v3629 = vpack.c.b16 %v3479, %v3477
        %v3630 = vpack.c.b16 %v3480, %v3478
        %v3631 = vpack.c.b16 %v3483, %v3481
        %v3632 = vpack.c.b16 %v3484, %v3482
        %v3633 = vpack.c.b16 %v3487, %v3485
        %v3634 = vpack.c.b16 %v3488, %v3486
        %v3635 = vpack.c.b16 %v3491, %v3489
        %v3636 = vpack.c.b16 %v3492, %v3490
        %v3637 = vpack.c.b16 %v3495, %v3493
        %v3638 = vpack.c.b16 %v3496, %v3494
        %v3639 = vpack.c.b16 %v3499, %v3497
        %v3640 = vpack.c.b16 %v3500, %v3498
        %v3641 = vpack.c.b16 %v3503, %v3501
        %v3642 = vpack.c.b16 %v3504, %v3502
        %v3643 = vpack.c.b16 %v3507, %v3505
        %v3644 = vpack.c.b16 %v3508, %v3506
        %v3645 = vpack.c.b16 %v3511, %v3509
        %v3646 = vpack.c.b16 %v3512, %v3510
        %v3647 = vpack.c.b16 %v3515, %v3513
        %v3648 = vpack.c.b16 %v3516, %v3514
        %v3649 = vpack.c.b16 %v3519, %v3517
        %v3650 = vpack.c.b16 %v3520, %v3518
        %v3651 = vpack.c.b16 %v3523, %v3521
        %v3652 = vpack.c.b16 %v3524, %v3522
        %3781 = vmatpush.bf16.msra.mxu0 %v3539
        %3782 = vmatpush.bf16.msra.mxu0 %v3537
        %3783 = vmatpush.bf16.msra.mxu0 %v3535
        %3784 = vmatpush.bf16.msra.mxu0 %v3533
        %3785 = vmatpush.bf16.msra.mxu0 %v3531
        %3786 = vmatpush.bf16.msra.mxu0 %v3529
        %3787 = vmatpush.bf16.msra.mxu0 %v3527
        %3788 = vmatpush.bf16.msra.mxu0 %v3525
        %3789 = vmatmul.bf16.gmra.mxu0 %v2999
        %v3790 = vpop.f32.mrf.mxu0
        %v3791 = vadd.f32 %v3137, %v3790
        %v3792 = vpop.f32.mrf.mxu0
        %3793 = vdwg.mxu0
        %3794 = vmatpush.bf16.msra.mxu0 %v3555
        %3795 = vmatpush.bf16.msra.mxu0 %v3553
        %3796 = vmatpush.bf16.msra.mxu0 %v3551
        %3797 = vmatpush.bf16.msra.mxu0 %v3549
        %3798 = vmatpush.bf16.msra.mxu0 %v3547
        %3799 = vmatpush.bf16.msra.mxu0 %v3545
        %3800 = vmatpush.bf16.msra.mxu0 %v3543
        %3801 = vmatpush.bf16.msra.mxu0 %v3541
        %3802 = vmatmul.bf16.gmra.mxu0 %v3000
        %v3803 = vpop.f32.mrf.mxu0
        %v3804 = vadd.f32 %v3791, %v3803
        %v3805 = vpop.f32.mrf.mxu0
        %3806 = vdwg.mxu0
        %3807 = vmatpush.bf16.msra.mxu0 %v3571
        %3808 = vmatpush.bf16.msra.mxu0 %v3569
        %3809 = vmatpush.bf16.msra.mxu0 %v3567
        %3810 = vmatpush.bf16.msra.mxu0 %v3565
        %3811 = vmatpush.bf16.msra.mxu0 %v3563
        %3812 = vmatpush.bf16.msra.mxu0 %v3561
        %3813 = vmatpush.bf16.msra.mxu0 %v3559
        %3814 = vmatpush.bf16.msra.mxu0 %v3557
        %3815 = vmatmul.bf16.gmra.mxu0 %v3001
        %v3816 = vpop.f32.mrf.mxu0
        %v3817 = vadd.f32 %v3804, %v3816
        %v3818 = vpop.f32.mrf.mxu0
        %3819 = vdwg.mxu0
        %3820 = vmatpush.bf16.msra.mxu0 %v3587
        %3821 = vmatpush.bf16.msra.mxu0 %v3585
        %3822 = vmatpush.bf16.msra.mxu0 %v3583
        %3823 = vmatpush.bf16.msra.mxu0 %v3581
        %3824 = vmatpush.bf16.msra.mxu0 %v3579
        %3825 = vmatpush.bf16.msra.mxu0 %v3577
        %3826 = vmatpush.bf16.msra.mxu0 %v3575
        %3827 = vmatpush.bf16.msra.mxu0 %v3573
        %3828 = vmatmul.bf16.gmra.mxu0 %v3002
        %v3829 = vpop.f32.mrf.mxu0
        %v3830 = vadd.f32 %v3817, %v3829
        %v3831 = vpop.f32.mrf.mxu0
        %3832 = vdwg.mxu0
        %3833 = vmatpush.bf16.msra.mxu0 %v3603
        %3834 = vmatpush.bf16.msra.mxu0 %v3601
        %3835 = vmatpush.bf16.msra.mxu0 %v3599
        %3836 = vmatpush.bf16.msra.mxu0 %v3597
        %3837 = vmatpush.bf16.msra.mxu0 %v3595
        %3838 = vmatpush.bf16.msra.mxu0 %v3593
        %3839 = vmatpush.bf16.msra.mxu0 %v3591
        %3840 = vmatpush.bf16.msra.mxu0 %v3589
        %3841 = vmatmul.bf16.gmra.mxu0 %v3003
        %v3842 = vpop.f32.mrf.mxu0
        %v3843 = vadd.f32 %v3830, %v3842
        %v3844 = vpop.f32.mrf.mxu0
        %3845 = vdwg.mxu0
        %3846 = vmatpush.bf16.msra.mxu0 %v3619
        %3847 = vmatpush.bf16.msra.mxu0 %v3617
        %3848 = vmatpush.bf16.msra.mxu0 %v3615
        %3849 = vmatpush.bf16.msra.mxu0 %v3613
        %3850 = vmatpush.bf16.msra.mxu0 %v3611
        %3851 = vmatpush.bf16.msra.mxu0 %v3609
        %3852 = vmatpush.bf16.msra.mxu0 %v3607
        %3853 = vmatpush.bf16.msra.mxu0 %v3605
        %3854 = vmatmul.bf16.gmra.mxu0 %v3004
        %v3855 = vpop.f32.mrf.mxu0
        %v3856 = vadd.f32 %v3843, %v3855
        %v3857 = vpop.f32.mrf.mxu0
        %3858 = vdwg.mxu0
        %3859 = vmatpush.bf16.msra.mxu0 %v3635
        %3860 = vmatpush.bf16.msra.mxu0 %v3633
        %3861 = vmatpush.bf16.msra.mxu0 %v3631
        %3862 = vmatpush.bf16.msra.mxu0 %v3629
        %3863 = vmatpush.bf16.msra.mxu0 %v3627
        %3864 = vmatpush.bf16.msra.mxu0 %v3625
        %3865 = vmatpush.bf16.msra.mxu0 %v3623
        %3866 = vmatpush.bf16.msra.mxu0 %v3621
        %3867 = vmatmul.bf16.gmra.mxu0 %v3005
        %v3868 = vpop.f32.mrf.mxu0
        %v3869 = vadd.f32 %v3856, %v3868
        %v3870 = vpop.f32.mrf.mxu0
        %3871 = vdwg.mxu0
        %3872 = vmatpush.bf16.msra.mxu0 %v3651
        %3873 = vmatpush.bf16.msra.mxu0 %v3649
        %3874 = vmatpush.bf16.msra.mxu0 %v3647
        %3875 = vmatpush.bf16.msra.mxu0 %v3645
        %3876 = vmatpush.bf16.msra.mxu0 %v3643
        %3877 = vmatpush.bf16.msra.mxu0 %v3641
        %3878 = vmatpush.bf16.msra.mxu0 %v3639
        %3879 = vmatpush.bf16.msra.mxu0 %v3637
        %3880 = vmatmul.bf16.gmra.mxu0 %v3006
        %v3881 = vpop.f32.mrf.mxu0
        %v3882 = vadd.f32 %v3869, %v3881
        %v3883 = vpop.f32.mrf.mxu0
        %3884 = vdwg.mxu0
        %3885 = vmatpush.bf16.msra.mxu0 %v3540
        %3886 = vmatpush.bf16.msra.mxu0 %v3538
        %3887 = vmatpush.bf16.msra.mxu0 %v3536
        %3888 = vmatpush.bf16.msra.mxu0 %v3534
        %3889 = vmatpush.bf16.msra.mxu0 %v3532
        %3890 = vmatpush.bf16.msra.mxu0 %v3530
        %3891 = vmatpush.bf16.msra.mxu0 %v3528
        %3892 = vmatpush.bf16.msra.mxu0 %v3526
        %3893 = vmatmul.bf16.gmra.mxu0 %v2999
        %v3894 = vpop.f32.mrf.mxu0
        %v3895 = vadd.f32 %v3138, %v3894
        %v3896 = vpop.f32.mrf.mxu0
        %3897 = vdwg.mxu0
        %3898 = vmatpush.bf16.msra.mxu0 %v3556
        %3899 = vmatpush.bf16.msra.mxu0 %v3554
        %3900 = vmatpush.bf16.msra.mxu0 %v3552
        %3901 = vmatpush.bf16.msra.mxu0 %v3550
        %3902 = vmatpush.bf16.msra.mxu0 %v3548
        %3903 = vmatpush.bf16.msra.mxu0 %v3546
        %3904 = vmatpush.bf16.msra.mxu0 %v3544
        %3905 = vmatpush.bf16.msra.mxu0 %v3542
        %3906 = vmatmul.bf16.gmra.mxu0 %v3000
        %v3907 = vpop.f32.mrf.mxu0
        %v3908 = vadd.f32 %v3895, %v3907
        %v3909 = vpop.f32.mrf.mxu0
        %3910 = vdwg.mxu0
        %3911 = vmatpush.bf16.msra.mxu0 %v3572
        %3912 = vmatpush.bf16.msra.mxu0 %v3570
        %3913 = vmatpush.bf16.msra.mxu0 %v3568
        %3914 = vmatpush.bf16.msra.mxu0 %v3566
        %3915 = vmatpush.bf16.msra.mxu0 %v3564
        %3916 = vmatpush.bf16.msra.mxu0 %v3562
        %3917 = vmatpush.bf16.msra.mxu0 %v3560
        %3918 = vmatpush.bf16.msra.mxu0 %v3558
        %3919 = vmatmul.bf16.gmra.mxu0 %v3001
        %v3920 = vpop.f32.mrf.mxu0
        %v3921 = vadd.f32 %v3908, %v3920
        %v3922 = vpop.f32.mrf.mxu0
        %3923 = vdwg.mxu0
        %3924 = vmatpush.bf16.msra.mxu0 %v3588
        %3925 = vmatpush.bf16.msra.mxu0 %v3586
        %3926 = vmatpush.bf16.msra.mxu0 %v3584
        %3927 = vmatpush.bf16.msra.mxu0 %v3582
        %3928 = vmatpush.bf16.msra.mxu0 %v3580
        %3929 = vmatpush.bf16.msra.mxu0 %v3578
        %3930 = vmatpush.bf16.msra.mxu0 %v3576
        %3931 = vmatpush.bf16.msra.mxu0 %v3574
        %3932 = vmatmul.bf16.gmra.mxu0 %v3002
        %v3933 = vpop.f32.mrf.mxu0
        %v3934 = vadd.f32 %v3921, %v3933
        %v3935 = vpop.f32.mrf.mxu0
        %3936 = vdwg.mxu0
        %3937 = vmatpush.bf16.msra.mxu0 %v3604
        %3938 = vmatpush.bf16.msra.mxu0 %v3602
        %3939 = vmatpush.bf16.msra.mxu0 %v3600
        %3940 = vmatpush.bf16.msra.mxu0 %v3598
        %3941 = vmatpush.bf16.msra.mxu0 %v3596
        %3942 = vmatpush.bf16.msra.mxu0 %v3594
        %3943 = vmatpush.bf16.msra.mxu0 %v3592
        %3944 = vmatpush.bf16.msra.mxu0 %v3590
        %3945 = vmatmul.bf16.gmra.mxu0 %v3003
        %v3946 = vpop.f32.mrf.mxu0
        %v3947 = vadd.f32 %v3934, %v3946
        %v3948 = vpop.f32.mrf.mxu0
        %3949 = vdwg.mxu0
        %3950 = vmatpush.bf16.msra.mxu0 %v3620
        %3951 = vmatpush.bf16.msra.mxu0 %v3618
        %3952 = vmatpush.bf16.msra.mxu0 %v3616
        %3953 = vmatpush.bf16.msra.mxu0 %v3614
        %3954 = vmatpush.bf16.msra.mxu0 %v3612
        %3955 = vmatpush.bf16.msra.mxu0 %v3610
        %3956 = vmatpush.bf16.msra.mxu0 %v3608
        %3957 = vmatpush.bf16.msra.mxu0 %v3606
        %3958 = vmatmul.bf16.gmra.mxu0 %v3004
        %v3959 = vpop.f32.mrf.mxu0
        %v3960 = vadd.f32 %v3947, %v3959
        %v3961 = vpop.f32.mrf.mxu0
        %3962 = vdwg.mxu0
        %3963 = vmatpush.bf16.msra.mxu0 %v3636
        %3964 = vmatpush.bf16.msra.mxu0 %v3634
        %3965 = vmatpush.bf16.msra.mxu0 %v3632
        %3966 = vmatpush.bf16.msra.mxu0 %v3630
        %3967 = vmatpush.bf16.msra.mxu0 %v3628
        %3968 = vmatpush.bf16.msra.mxu0 %v3626
        %3969 = vmatpush.bf16.msra.mxu0 %v3624
        %3970 = vmatpush.bf16.msra.mxu0 %v3622
        %3971 = vmatmul.bf16.gmra.mxu0 %v3005
        %v3972 = vpop.f32.mrf.mxu0
        %v3973 = vadd.f32 %v3960, %v3972
        %v3974 = vpop.f32.mrf.mxu0
        %3975 = vdwg.mxu0
        %3976 = vmatpush.bf16.msra.mxu0 %v3652
        %3977 = vmatpush.bf16.msra.mxu0 %v3650
        %3978 = vmatpush.bf16.msra.mxu0 %v3648
        %3979 = vmatpush.bf16.msra.mxu0 %v3646
        %3980 = vmatpush.bf16.msra.mxu0 %v3644
        %3981 = vmatpush.bf16.msra.mxu0 %v3642
        %3982 = vmatpush.bf16.msra.mxu0 %v3640
        %3983 = vmatpush.bf16.msra.mxu0 %v3638
        %3984 = vmatmul.bf16.gmra.mxu0 %v3006
        %v3985 = vpop.f32.mrf.mxu0
        %v3986 = vadd.f32 %v3973, %v3985
        %v3987 = vpop.f32.mrf.mxu0
        %3988 = vdwg.mxu0
        %vm3989 = vcmp.ge.f32.partialorder %v3882, 0.0
        %vm3990 = vcmp.ge.f32.partialorder %v3986, 0.0
        %v3991 = vmul.f32 %v3882, 0.2
        %v3992 = vmul.f32 %v3986, 0.2
        %v3993 = vsel %vm3989, %v3882, %v3991
        %v3994 = vsel %vm3990, %v3986, %v3992
        %v3995 = vpack.c.bf16 %v3993, %v3993
        %v3996 = vpack.c.bf16 %v3994, %v3994
        %v3997 = vld [vmem:[%s12] sm:$0xf]
        %v3998 = vld [vmem:[%s12 + $0x4] sm:$0xf]
        %v3999 = vld [vmem:[%s12 + $0x8] sm:$0xf]
        %v4000 = vld [vmem:[%s12 + $0xc] sm:$0xf]
        %v4001 = vld [vmem:[%s12 + $0x10] sm:$0xf]
        %v4002 = vld [vmem:[%s12 + $0x14] sm:$0xf]
        %v4003 = vld [vmem:[%s12 + $0x18] sm:$0xf]
        %v4004 = vld [vmem:[%s12 + $0x1c] sm:$0xf]
        %v4005 = vld [vmem:[%s12 + $0x20] sm:$0xf]
        %v4006 = vld [vmem:[%s12 + $0x24] sm:$0xf]
        %v4007 = vld [vmem:[%s12 + $0x28] sm:$0xf]
        %v4008 = vld [vmem:[%s12 + $0x2c] sm:$0xf]
        %v4009 = vld [vmem:[%s12 + $0x30] sm:$0xf]
        %v4010 = vld [vmem:[%s12 + $0x34] sm:$0xf]
        %v4011 = vld [vmem:[%s12 + $0x38] sm:$0xf]
        %v4012 = vld [vmem:[%s12 + $0x3c] sm:$0xf]
        %v4013 = vld [vmem:[%s12 + $0x40] sm:$0xf]
        %v4014 = vld [vmem:[%s12 + $0x44] sm:$0xf]
        %v4015 = vld [vmem:[%s12 + $0x48] sm:$0xf]
        %v4016 = vld [vmem:[%s12 + $0x4c] sm:$0xf]
        %v4017 = vld [vmem:[%s12 + $0x50] sm:$0xf]
        %v4018 = vld [vmem:[%s12 + $0x54] sm:$0xf]
        %v4019 = vld [vmem:[%s12 + $0x58] sm:$0xf]
        %v4020 = vld [vmem:[%s12 + $0x5c] sm:$0xf]
        %v4021 = vld [vmem:[%s12 + $0x60] sm:$0xf]
        %v4022 = vld [vmem:[%s12 + $0x64] sm:$0xf]
        %v4023 = vld [vmem:[%s12 + $0x68] sm:$0xf]
        %v4024 = vld [vmem:[%s12 + $0x6c] sm:$0xf]
        %v4025 = vld [vmem:[%s12 + $0x70] sm:$0xf]
        %v4026 = vld [vmem:[%s12 + $0x74] sm:$0xf]
        %v4027 = vld [vmem:[%s12 + $0x78] sm:$0xf]
        %v4028 = vld [vmem:[%s12 + $0x7c] sm:$0xf]
        %v4029 = vld [vmem:[%s13] sm:$0x1]
        %v4031 = vperm.slane %v4029, 0
        %v4065 = vunpack.c.l.b16 %v3997
        %v4066 = vunpack.c.l.b16 %v3998
        %v4067 = vunpack.c.l.b16 %v3999
        %v4068 = vunpack.c.l.b16 %v4000
        %v4069 = vunpack.c.l.b16 %v4001
        %v4070 = vunpack.c.l.b16 %v4002
        %v4071 = vunpack.c.l.b16 %v4003
        %v4072 = vunpack.c.l.b16 %v4004
        %v4073 = vunpack.c.l.b16 %v4005
        %v4074 = vunpack.c.l.b16 %v4006
        %v4075 = vunpack.c.l.b16 %v4007
        %v4076 = vunpack.c.l.b16 %v4008
        %v4077 = vunpack.c.l.b16 %v4009
        %v4078 = vunpack.c.l.b16 %v4010
        %v4079 = vunpack.c.l.b16 %v4011
        %v4080 = vunpack.c.l.b16 %v4012
        %v4081 = vunpack.c.l.b16 %v4013
        %v4082 = vunpack.c.l.b16 %v4014
        %v4083 = vunpack.c.l.b16 %v4015
        %v4084 = vunpack.c.l.b16 %v4016
        %v4085 = vunpack.c.l.b16 %v4017
        %v4086 = vunpack.c.l.b16 %v4018
        %v4087 = vunpack.c.l.b16 %v4019
        %v4088 = vunpack.c.l.b16 %v4020
        %v4089 = vunpack.c.l.b16 %v4021
        %v4090 = vunpack.c.l.b16 %v4022
        %v4091 = vunpack.c.l.b16 %v4023
        %v4092 = vunpack.c.l.b16 %v4024
        %v4093 = vunpack.c.l.b16 %v4025
        %v4094 = vunpack.c.l.b16 %v4026
        %v4095 = vunpack.c.l.b16 %v4027
        %v4096 = vunpack.c.l.b16 %v4028
        %v4097 = vpack.c.b16 %v4066, %v4065
        %v4098 = vpack.c.b16 %v4068, %v4067
        %v4099 = vpack.c.b16 %v4070, %v4069
        %v4100 = vpack.c.b16 %v4072, %v4071
        %v4101 = vpack.c.b16 %v4074, %v4073
        %v4102 = vpack.c.b16 %v4076, %v4075
        %v4103 = vpack.c.b16 %v4078, %v4077
        %v4104 = vpack.c.b16 %v4080, %v4079
        %v4105 = vpack.c.b16 %v4082, %v4081
        %v4106 = vpack.c.b16 %v4084, %v4083
        %v4107 = vpack.c.b16 %v4086, %v4085
        %v4108 = vpack.c.b16 %v4088, %v4087
        %v4109 = vpack.c.b16 %v4090, %v4089
        %v4110 = vpack.c.b16 %v4092, %v4091
        %v4111 = vpack.c.b16 %v4094, %v4093
        %v4112 = vpack.c.b16 %v4096, %v4095
        %4129 = vmatpush.bf16.msra.mxu0 %v4104
        %4130 = vmatpush.bf16.msra.mxu0 %v4103
        %4131 = vmatpush.bf16.msra.mxu0 %v4102
        %4132 = vmatpush.bf16.msra.mxu0 %v4101
        %4133 = vmatpush.bf16.msra.mxu0 %v4100
        %4134 = vmatpush.bf16.msra.mxu0 %v4099
        %4135 = vmatpush.bf16.msra.mxu0 %v4098
        %4136 = vmatpush.bf16.msra.mxu0 %v4097
        %4137 = vmatmul.bf16.gmra.mxu0 %v3995
        %v4138 = vpop.f32.mrf.mxu0
        %v4139 = vadd.f32 %v4031, %v4138
        %v4140 = vpop.f32.mrf.mxu0
        %4141 = vdwg.mxu0
        %4142 = vmatpush.bf16.msra.mxu0 %v4112
        %4143 = vmatpush.bf16.msra.mxu0 %v4111
        %4144 = vmatpush.bf16.msra.mxu0 %v4110
        %4145 = vmatpush.bf16.msra.mxu0 %v4109
        %4146 = vmatpush.bf16.msra.mxu0 %v4108
        %4147 = vmatpush.bf16.msra.mxu0 %v4107
        %4148 = vmatpush.bf16.msra.mxu0 %v4106
        %4149 = vmatpush.bf16.msra.mxu0 %v4105
        %4150 = vmatmul.bf16.gmra.mxu0 %v3996
        %v4151 = vpop.f32.mrf.mxu0
        %v4152 = vadd.f32 %v4139, %v4151
        %v4153 = vpop.f32.mrf.mxu0
        %4154 = vdwg.mxu0
        %vm4155 = vcmp.ge.f32.partialorder %v4152, 0.0
        %v4156 = vmul.f32 %v4152, 0.2
        %v4157 = vsel %vm4155, %v4152, %v4156
        %v4158 = vpack.c.bf16 %v4157, %v4157
        %v4159 = vld [vmem:[#allocation9] sm:$0xf]
        %v4160 = vld [vmem:[#allocation9 + $0x4] sm:$0xf]
        %v4161 = vld [vmem:[#allocation9 + $0x8] sm:$0xf]
        %v4162 = vld [vmem:[#allocation9 + $0xc] sm:$0xf]
        %v4163 = vld [vmem:[#allocation9 + $0x10] sm:$0xf]
        %v4164 = vld [vmem:[#allocation9 + $0x14] sm:$0xf]
        %v4165 = vld [vmem:[#allocation9 + $0x18] sm:$0xf]
        %v4166 = vld [vmem:[#allocation9 + $0x1c] sm:$0xf]
        %v4167 = vld [vmem:[#allocation9 + $0x20] sm:$0xf]
        %v4168 = vld [vmem:[#allocation9 + $0x24] sm:$0xf]
        %v4169 = vld [vmem:[#allocation9 + $0x28] sm:$0xf]
        %v4170 = vld [vmem:[#allocation9 + $0x2c] sm:$0xf]
        %v4171 = vld [vmem:[#allocation9 + $0x30] sm:$0xf]
        %v4172 = vld [vmem:[#allocation9 + $0x34] sm:$0xf]
        %v4173 = vld [vmem:[#allocation9 + $0x38] sm:$0xf]
        %v4174 = vld [vmem:[#allocation9 + $0x3c] sm:$0xf]
        %v4175 = vld [vmem:[%s15] sm:$0x1]
        %v4177 = vperm.slane %v4175, 0
        %v4195 = vunpack.c.l.b16 %v4159
        %v4196 = vunpack.c.l.b16 %v4160
        %v4197 = vunpack.c.l.b16 %v4161
        %v4198 = vunpack.c.l.b16 %v4162
        %v4199 = vunpack.c.l.b16 %v4163
        %v4200 = vunpack.c.l.b16 %v4164
        %v4201 = vunpack.c.l.b16 %v4165
        %v4202 = vunpack.c.l.b16 %v4166
        %v4203 = vunpack.c.l.b16 %v4167
        %v4204 = vunpack.c.l.b16 %v4168
        %v4205 = vunpack.c.l.b16 %v4169
        %v4206 = vunpack.c.l.b16 %v4170
        %v4207 = vunpack.c.l.b16 %v4171
        %v4208 = vunpack.c.l.b16 %v4172
        %v4209 = vunpack.c.l.b16 %v4173
        %v4210 = vunpack.c.l.b16 %v4174
        %v4211 = vpack.c.b16 %v4196, %v4195
        %v4212 = vpack.c.b16 %v4198, %v4197
        %v4213 = vpack.c.b16 %v4200, %v4199
        %v4214 = vpack.c.b16 %v4202, %v4201
        %v4215 = vpack.c.b16 %v4204, %v4203
        %v4216 = vpack.c.b16 %v4206, %v4205
        %v4217 = vpack.c.b16 %v4208, %v4207
        %v4218 = vpack.c.b16 %v4210, %v4209
        %4227 = vmatpush.bf16.msra.mxu0 %v4218
        %4228 = vmatpush.bf16.msra.mxu0 %v4217
        %4229 = vmatpush.bf16.msra.mxu0 %v4216
        %4230 = vmatpush.bf16.msra.mxu0 %v4215
        %4231 = vmatpush.bf16.msra.mxu0 %v4214
        %4232 = vmatpush.bf16.msra.mxu0 %v4213
        %4233 = vmatpush.bf16.msra.mxu0 %v4212
        %4234 = vmatpush.bf16.msra.mxu0 %v4211
        %4235 = vmatmul.bf16.gmra.mxu0 %v4158
        %v4236 = vpop.f32.mrf.mxu0
        %v4237 = vadd.f32 %v4177, %v4236
        %v4238 = vpop.f32.mrf.mxu0
        %4239 = vdwg.mxu0
        %4240 = vmax.xlane.f32.xlu0 %v4237
        %v4241 = vpop.xlane.xlu0 %4240
        %v4242 = vsub.f32 %v4237, %v4241
        %v4243 = vmul.f32 %v4242, 1.442695
        %v4244 = vpow.pop %v4243
        %4245 = vadd.xlane.f32.xlu0 %v4244
        %v4246 = vpop.xlane.xlu0 %4245
        %v4247 = vrcp.pop %v4246
        %v4248 = vmul.f32 %v4244, %v4247
        %v4249 = vld [vmem:[#allocation2] sm:$0x1]
        %v4250 = vld [vmem:[%s627] sm:$0xff]
        %4252 = vset.pattern.permute.xlu0 0
        %4253 = vperm.xlu0 %4252, %v4250
        %v4254 = vpop.permute.xlu0 %4253
        %v4256 = vmul.f32 %v4248, %v4254
        %v4257 = vrot.slane %v4256, 4
        %v4258 = vadd.f32 %v4256, %v4257
        %v4259 = vrot.slane %v4258, 2
        %v4260 = vadd.f32 %v4258, %v4259
        %v4261 = vrot.slane %v4260, 1
        %v4262 = vadd.f32 %v4260, %v4261
        %v4263 = vadd.f32 %v4249, %v4262
        %4264 = vst [vmem:[#allocation2] sm:$0x1] %v4263
        %p4265 = scmp.eq.s32.totalorder %s31, 2
        // Predicated region
        $region105: #{generator_forward.1} parent=83 // pred_check
          %p4266 = pneg %p4265
        $region106: #{generator_forward.1} parent=83 // pred_check_branch
          %4268 = sbr.rel (%p4266) target = $region108
        $region107: #{generator_forward.1} parent=83 // pred_region
          %v4269 = vld [vmem:[#allocation2] sm:$0x1]
          %4270 = vst [vmem:[#allocation11] sm:$0x1] %v4269
        $region108: #{generator_forward.1} parent=83 // pred_fallthru
          _
        // Predicated region
        $region109: #{generator_forward.1} parent=83 // pred_check
          %p4271 = pneg %p405
        $region110: #{generator_forward.1} parent=83 // pred_check_branch
          %4273 = sbr.rel (%p4271) target = $region112
        $region111: #{generator_forward.1} parent=83 // pred_region
          %4275 = vsyncadd [#allocation5], 0
          %s4277 = sshll.u32 [#allocation11], 4
          %s4278 = int_to_ptr.vmem [resolvable:$true] %s4277
          %s4279 = sshll.u32 %s16, 4
          %s4280 = int_to_ptr.hbm [resolvable:$true] %s4279
          %4282 = dma.vmem_to_hbm [thread:$0]  %s4278, 16, %s4280, [#allocation5]
        $region112: #{generator_forward.1} parent=83 // pred_fallthru
          _
        // Predicated region
        $region113: #{generator_forward.1} parent=83 // pred_check
          %p4283 = pneg %p405
        $region114: #{generator_forward.1} parent=83 // pred_check_branch
          %4285 = sbr.rel (%p4283) target = $region116
        $region115: #{generator_forward.1} parent=83 // pred_region
          %4287 = dma.done [#allocation5], 16
        $region116: #{generator_forward.1} parent=83 // pred_fallthru
          _
      $region84: #{generator_forward.1} parent=5 // pred_fallthru
        _
      %p4288 = scmp.le.s32.totalorder 2, %s26
      // Predicated region
      $region117: #{generator_forward.1} parent=5 // pred_check
        %p4289 = pneg %p4288
      $region118: #{generator_forward.1} parent=5 // pred_check_branch
        %4291 = sbr.rel (%p4289) target = $region120
      $region119: #{generator_forward.1} parent=5 // pred_region
        %s4292 = ssub.s32 %s26, 2
      $region120: #{generator_forward.1} parent=5 // pred_fallthru
        _
    $region6: #{generator_forward.1} parent=1 // loop_footer
      %s30 = sadd.s32 1, %s26
    $region7: #{generator_forward.1} parent=1 // loop_footer_branch
      %25 = sbr.rel target = $region3
    $region8: #{generator_forward.1} parent=1 // loop_exit
      _
    %4293 = vsyncpa [#allocation4], 1
    %s4294 = scalar_lea.sflag [#allocation4], 1
    %4295 = vsyncpa %s4294, 1
    %4296 = vsyncpa [#allocation7], 1
    %4297 = vsyncpa [#allocation10], 1
    %4298 = vsyncpa [#allocation5], 1
    %s4299 = scalar_lea.sflag [#allocation5], 1
    %4300 = vsyncpa %s4299, 1

</llo_original>
